<compile_context>
chip_gen: v6e
topology: v6e:2x2x1
jax: 0.10.0
libtpu: 0.0.40
codegen_flags: <defaults>
</compile_context>

<pallas_src>
import functools

import jax
import jax.numpy as jnp
from jax.experimental import pallas as pl
from jax.experimental.pallas import tpu as pltpu


def _round_up(x, m):
    return (x + m - 1) // m * m


# ------------------------------------------------------------------ kernels

def _conv1_kernel(p_ref, w_ref, b_ref, o_ref, *, slope):
    """One M-tile of: LeakyReLU(patches @ W + b)."""
    acc = jnp.dot(p_ref[...], w_ref[...], preferred_element_type=jnp.float32)
    acc = acc + b_ref[...]
    o_ref[...] = jnp.where(acc > 0, acc, slope * acc).astype(o_ref.dtype)


def conv1_matmul_lrelu(patches, w, b, *, slope=0.2, max_tm=512):
    """(M,K)@(K,N)+b -> LeakyReLU.  bf16 operands, f32 accumulate, bf16 out."""
    M, K = patches.shape
    N = w.shape[1]
    tm = min(max_tm, _round_up(M, 8))
    Mp = _round_up(M, tm)
    if Mp != M:                                   # pad rows; sliced off below
        patches = jnp.pad(patches, ((0, Mp - M), (0, 0)))
    out = pl.pallas_call(
        functools.partial(_conv1_kernel, slope=slope),
        out_shape=jax.ShapeDtypeStruct((Mp, N), jnp.bfloat16),
        grid=(Mp // tm,),
        in_specs=[
            pl.BlockSpec((tm, K), lambda i: (i, 0)),
            pl.BlockSpec((K, N), lambda i: (0, 0)),
            pl.BlockSpec((1, N), lambda i: (0, 0)),
        ],
        out_specs=pl.BlockSpec((tm, N), lambda i: (i, 0)),
        compiler_params=pltpu.CompilerParams(dimension_semantics=("parallel",)),
    )(patches, w, b.reshape(1, N))
    return out[:M]


def _conv2_bn_lrelu_cached_kernel(p_ref, w_ref, b_ref, g_ref, bb_ref, o_ref,
                                  acts_ref, sum_ref, sq_ref, *,
                                  eps, slope, m_total, tm):
    """Fused conv2 matmul + bias + BatchNorm2d + LeakyReLU, activations cached.

    grid = (2, num_m_tiles); axis 0 = pass, axis 1 = M tile.
      pass 0: matmul once, stash f32 activation in VMEM scratch, accumulate
              per-channel sum / sum-of-squares.
      pass 1: read cached activation, normalize with batch stats, LeakyReLU.
    """
    pas = pl.program_id(0)
    mi = pl.program_id(1)

    @pl.when(jnp.logical_and(pas == 0, mi == 0))
    def _():
        sum_ref[...] = jnp.zeros_like(sum_ref)
        sq_ref[...] = jnp.zeros_like(sq_ref)

    @pl.when(pas == 0)
    def _():
        acc = jnp.dot(p_ref[...], w_ref[...],
                      preferred_element_type=jnp.float32)
        acc = acc + b_ref[...]                                # (tm, 128) f32
        acts_ref[mi] = acc
        # mask padded rows so they don't pollute the batch statistics
        row = jax.lax.broadcasted_iota(jnp.int32, (tm, 1), 0) + mi * tm
        av = jnp.where(row < m_total, acc, 0.0)
        sum_ref[...] += jnp.sum(av, axis=0, keepdims=True)
        sq_ref[...] += jnp.sum(av * acc, axis=0, keepdims=True)
        o_ref[...] = acc.astype(o_ref.dtype)   # placeholder, overwritten pass 1

    @pl.when(pas == 1)
    def _():
        acc = acts_ref[mi]
        inv_m = 1.0 / float(m_total)           # static
        mean = sum_ref[...] * inv_m
        var = jnp.maximum(sq_ref[...] * inv_m - mean * mean, 0.0)  # biased var
        xhat = (acc - mean) * jax.lax.rsqrt(var + eps)
        y = xhat * g_ref[...] + bb_ref[...]
        o_ref[...] = jnp.where(y > 0, y, slope * y).astype(o_ref.dtype)


def _conv2_bn_lrelu_recompute_kernel(p_ref, w_ref, b_ref, g_ref, bb_ref, o_ref,
                                     sum_ref, sq_ref, *,
                                     eps, slope, m_total, tm):
    """Fallback (large M): same two-pass scheme, recompute the tile matmul."""
    pas = pl.program_id(0)
    mi = pl.program_id(1)

    @pl.when(jnp.logical_and(pas == 0, mi == 0))
    def _():
        sum_ref[...] = jnp.zeros_like(sum_ref)
        sq_ref[...] = jnp.zeros_like(sq_ref)

    acc = jnp.dot(p_ref[...], w_ref[...], preferred_element_type=jnp.float32)
    acc = acc + b_ref[...]

    @pl.when(pas == 0)
    def _():
        row = jax.lax.broadcasted_iota(jnp.int32, (tm, 1), 0) + mi * tm
        av = jnp.where(row < m_total, acc, 0.0)
        sum_ref[...] += jnp.sum(av, axis=0, keepdims=True)
        sq_ref[...] += jnp.sum(av * acc, axis=0, keepdims=True)
        o_ref[...] = acc.astype(o_ref.dtype)

    @pl.when(pas == 1)
    def _():
        inv_m = 1.0 / float(m_total)
        mean = sum_ref[...] * inv_m
        var = jnp.maximum(sq_ref[...] * inv_m - mean * mean, 0.0)
        xhat = (acc - mean) * jax.lax.rsqrt(var + eps)
        y = xhat * g_ref[...] + bb_ref[...]
        o_ref[...] = jnp.where(y > 0, y, slope * y).astype(o_ref.dtype)


def conv2_bn_lrelu(patches, w, b, gamma, beta, *, eps=1e-5, slope=0.2,
                   max_tm=256, cache_budget_bytes=8 << 20):
    """Fused (M,K)@(K,128)+b -> BatchNorm2d (batch stats) -> LeakyReLU."""
    M, K = patches.shape
    N = w.shape[1]
    tm = min(max_tm, _round_up(M, 8))
    Mp = _round_up(M, tm)
    if Mp != M:
        patches = jnp.pad(patches, ((0, Mp - M), (0, 0)))
    nm = Mp // tm

    cache = Mp * N * 4 <= cache_budget_bytes
    if cache:
        kern = functools.partial(_conv2_bn_lrelu_cached_kernel, eps=eps,
                                 slope=slope, m_total=M, tm=tm)
        scratch = [pltpu.VMEM((nm, tm, N), jnp.float32),     # cached f32 acts
                   pltpu.VMEM((1, N), jnp.float32),          # sum
                   pltpu.VMEM((1, N), jnp.float32)]          # sum of squares
        # pass 1 does not read patches: pin the index to block 0 so the
        # pipeline stops re-fetching the patch tiles during pass 1.
        p_map = lambda p, m: (m * (1 - p), 0)
    else:
        kern = functools.partial(_conv2_bn_lrelu_recompute_kernel, eps=eps,
                                 slope=slope, m_total=M, tm=tm)
        scratch = [pltpu.VMEM((1, N), jnp.float32),
                   pltpu.VMEM((1, N), jnp.float32)]
        p_map = lambda p, m: (m, 0)

    out = pl.pallas_call(
        kern,
        out_shape=jax.ShapeDtypeStruct((Mp, N), jnp.bfloat16),
        grid=(2, nm),
        in_specs=[
            pl.BlockSpec((tm, K), p_map),
            pl.BlockSpec((K, N), lambda p, m: (0, 0)),
            pl.BlockSpec((1, N), lambda p, m: (0, 0)),
            pl.BlockSpec((1, N), lambda p, m: (0, 0)),
            pl.BlockSpec((1, N), lambda p, m: (0, 0)),
        ],
        out_specs=pl.BlockSpec((tm, N), lambda p, m: (m, 0)),
        scratch_shapes=scratch,
        compiler_params=pltpu.CompilerParams(
            dimension_semantics=("arbitrary", "arbitrary")),
    )(patches, w, b.reshape(1, N), gamma.reshape(1, N), beta.reshape(1, N))
    return out[:M]


def _fc_head_kernel(x_ref, w1_ref, b1_ref, g_ref, bb_ref, w2_ref, b2_ref,
                    o_ref, *, eps, slope):
    """Fused Linear -> BatchNorm1d -> LeakyReLU -> Linear -> Sigmoid."""
    h = jnp.dot(x_ref[...], w1_ref[...], preferred_element_type=jnp.float32)
    h = h + b1_ref[...]
    mean = jnp.mean(h, axis=0, keepdims=True)                 # batch stats
    var = jnp.mean((h - mean) * (h - mean), axis=0, keepdims=True)
    a = (h - mean) * jax.lax.rsqrt(var + eps) * g_ref[...] + bb_ref[...]
    a = jnp.where(a > 0, a, slope * a)
    logits = jnp.dot(a, w2_ref[...], preferred_element_type=jnp.float32)
    logits = logits + b2_ref[...]
    # exact reciprocal keeps the result strictly inside [0, 1]
    o_ref[...] = pl.reciprocal(1.0 + jnp.exp(-logits),
                               approx=False).astype(o_ref.dtype)


def fc_head(x, w1, b1, gamma, beta, w2, b2, *, eps=1e-5, slope=0.2):
    """Whole fc block in one kernel.  x:(B,K) bf16, w1:(K,L) bf16, w2:(L,O) f32."""
    B, K = x.shape
    L = w1.shape[1]
    O = w2.shape[1]
    return pl.pallas_call(
        functools.partial(_fc_head_kernel, eps=eps, slope=slope),
        out_shape=jax.ShapeDtypeStruct((B, O), jnp.float32),
        grid=(1,),
        in_specs=[
            pl.BlockSpec((B, K), lambda i: (0, 0)),
            pl.BlockSpec((K, L), lambda i: (0, 0)),
            pl.BlockSpec((1, L), lambda i: (0, 0)),
            pl.BlockSpec((1, L), lambda i: (0, 0)),
            pl.BlockSpec((1, L), lambda i: (0, 0)),
            pl.BlockSpec((L, O), lambda i: (0, 0)),
            pl.BlockSpec((1, O), lambda i: (0, 0)),
        ],
        out_specs=pl.BlockSpec((B, O), lambda i: (0, 0)),
    )(x, w1, b1.reshape(1, L), gamma.reshape(1, L), beta.reshape(1, L),
      w2, b2.reshape(1, O))


# ---------------------------------------------------------------- glue (JAX)

# TODO(synk): fold im2col into the conv kernels themselves (the stride-2 shifted
# windows are not expressible with a BlockSpec index_map; would need a manual
# DMA gather).  At these shapes the wrapper-side im2col is cheap.
def im2col_nhwc(x, k=4, stride=2, pad=1):
    """x: (B, H, W, C) -> patches (B*Ho*Wo, k*k*C); column order (kh, kw, C)."""
    B, H, W, C = x.shape
    Ho = (H + 2 * pad - k) // stride + 1
    Wo = (W + 2 * pad - k) // stride + 1
    xp = jnp.pad(x, ((0, 0), (pad, pad), (pad, pad), (0, 0)))
    cols = []
    for kh in range(k):
        for kw in range(k):
            cols.append(xp[:, kh:kh + stride * Ho:stride,
                           kw:kw + stride * Wo:stride, :])
    patches = jnp.stack(cols, axis=3)                   # (B, Ho, Wo, k*k, C)
    return patches.reshape(B * Ho * Wo, k * k * C), Ho, Wo


class DiscriminatorPallas:
    """Parameters deterministically initialized (conv/BN follow weights_init:
    conv weight ~ N(0, 0.02), BN weight ~ N(1, 0.02), BN bias = 0).  All layout
    permutations (NHWC im2col order, NCHW flatten order) are folded into the
    weight matrices here, so the runtime path has no activation transposes."""

    def __init__(self, key, input_height=16, input_width=16, input_dim=1,
                 output_dim=1, latent_dim=64):
        assert input_height % 4 == 0 and input_width % 4 == 0
        self.input_height = input_height
        self.input_width = input_width
        self.input_dim = input_dim
        self.output_dim = output_dim
        self.latent_dim = latent_dim
        H2, W2 = input_height // 4, input_width // 4
        shape = 128 * H2 * W2
        self.shape = shape

        ks = jax.random.split(key, 10)
        nrm = lambda k, s, sc=0.02: jax.random.normal(k, s, jnp.float32) * sc

        # conv block -----------------------------------------------------
        conv1_w = nrm(ks[0], (64, input_dim, 4, 4))          # Conv2d(Cin,64,4,2,1)
        conv2_w = nrm(ks[2], (128, 64, 4, 4))                # Conv2d(64,128,4,2,1)
        # -> im2col matmul weights with (kh, kw, Cin) row order (NHWC patches)
        self.w1 = conv1_w.transpose(2, 3, 1, 0).reshape(16 * input_dim, 64) \
                         .astype(jnp.bfloat16)
        self.b1 = nrm(ks[1], (64,))
        self.w2 = conv2_w.transpose(2, 3, 1, 0).reshape(16 * 64, 128) \
                         .astype(jnp.bfloat16)
        self.b2 = nrm(ks[3], (128,))
        self.bn2_g = 1.0 + nrm(ks[4], (128,))                # BatchNorm2d(128)
        self.bn2_b = jnp.zeros((128,), jnp.float32)

        # fc block -------------------------------------------------------
        fc_w1 = nrm(ks[5], (latent_dim, shape))              # Linear(shape, latent)
        # PyTorch flattens NCHW (C,H,W); our conv output is NHWC (H,W,C):
        # permute the columns once so no runtime transpose is needed.
        fc_w1 = fc_w1.reshape(latent_dim, 128, H2, W2).transpose(0, 2, 3, 1)
        self.fc_w1 = fc_w1.reshape(latent_dim, shape).T.astype(jnp.bfloat16)
        self.fc_b1 = nrm(ks[6], (latent_dim,))
        self.fc_bn_g = 1.0 + nrm(ks[7], (latent_dim,))       # BatchNorm1d(latent)
        self.fc_bn_b = jnp.zeros((latent_dim,), jnp.float32)
        self.fc_w2 = nrm(ks[8], (output_dim, latent_dim)).T  # Linear(latent, out)
        self.fc_b2 = nrm(ks[9], (output_dim,))
        # NOTE: fc1_1, fc1_2, fc2(+bn), fc3(+bn), fc4, aux_linear, softmax are
        # constructed in the PyTorch module but never used in forward(); omitted.

    def __call__(self, x):
        B = x.shape[0]
        H2, W2 = self.input_height // 4, self.input_width // 4

        # NHWC internally; the only runtime layout op is this tiny input permute.
        x = x.transpose(0, 2, 3, 1).astype(jnp.bfloat16)

        # conv1 + LeakyReLU(0.2)
        p1, H1, W1 = im2col_nhwc(x)
        y1 = conv1_matmul_lrelu(p1, self.w1, self.b1)        # (B*H1*W1, 64) bf16

        # conv2 + BatchNorm2d + LeakyReLU(0.2)  -- single fused two-pass kernel
        p2, _, _ = im2col_nhwc(y1.reshape(B, H1, W1, 64))
        y2 = conv2_bn_lrelu(p2, self.w2, self.b2, self.bn2_g, self.bn2_b)

        # flatten (NHWC order; fc_w1 columns were permuted at init to match the
        # PyTorch NCHW x.view(B, 128*(H//4)*(W//4)) semantics)
        x2 = y2.reshape(B, H2 * W2 * 128)

        # fc head fully fused: Linear -> BN1d -> LeakyReLU -> Linear -> Sigmoid
        return fc_head(x2, self.fc_w1, self.fc_b1, self.fc_bn_g, self.fc_bn_b,
                       self.fc_w2, self.fc_b2)               # (B, 1) f32


if __name__ == "__main__":
    key = jax.random.PRNGKey(0)
    k_param, k_input = jax.random.split(key)

    # small shapes consistent with the module: batch=2, NCHW = (2, 1, 16, 16)
    model = DiscriminatorPallas(k_param, input_height=16, input_width=16,
                                input_dim=1, output_dim=1, latent_dim=64)
    x = jax.random.normal(k_input, (2, 1, 16, 16), jnp.float32)

    fwd = jax.jit(lambda v: model(v))
    out = jax.block_until_ready(fwd(x))

    assert out.shape == (2, 1)
    assert bool(jnp.all(jnp.isfinite(out)))
    assert bool(jnp.all((out >= 0.0) & (out <= 1.0)))
    print("KERNEL_OK")
</pallas_src>

<mosaic_0001>
module attributes {stable_mosaic.version = 11 : i64} {
  func.func @_conv1_kernel(%arg0: i32, %arg1: memref<128x16xbf16, #tpu.memory_space<vmem>>, %arg2: memref<16x64xbf16, #tpu.memory_space<vmem>>, %arg3: memref<1x64xf32, #tpu.memory_space<vmem>>, %arg4: memref<128x64xbf16, #tpu.memory_space<vmem>>) attributes {dimension_semantics = [#tpu.dimension_semantics<parallel>], iteration_bounds = array<i64: 1>, scalar_prefetch = 0 : i64, scratch_operands = 0 : i64, tpu.core_type = #tpu.core_type<tc>, window_params = [{transform_indices = @transform_0, window_bounds = array<i64: 128, 16>}, {pipeline_mode = #tpu.pipeline_mode<synchronous>, transform_indices = @transform_1, window_bounds = array<i64: 16, 64>}, {pipeline_mode = #tpu.pipeline_mode<synchronous>, transform_indices = @transform_2, window_bounds = array<i64: 1, 64>}, {transform_indices = @transform_3, window_bounds = array<i64: 128, 64>}]} {
    %c0 = arith.constant 0 : index
    %c0_0 = arith.constant 0 : index
    %0 = vector.load %arg1[%c0, %c0_0] : memref<128x16xbf16, #tpu.memory_space<vmem>>, vector<128x16xbf16>
    %c0_1 = arith.constant 0 : index
    %c0_2 = arith.constant 0 : index
    %1 = vector.load %arg2[%c0_1, %c0_2] : memref<16x64xbf16, #tpu.memory_space<vmem>>, vector<16x64xbf16>
    %cst = arith.constant dense<0.000000e+00> : vector<128x64xf32>
    %2 = tpu.matmul %0, %1, %cst {dimension_numbers = #tpu.dot_dimension_numbers<[1], [0], [0], [1], [0, 0, 1, 1], [], []>} : vector<128x16xbf16>, vector<16x64xbf16>, vector<128x64xf32> -> vector<128x64xf32>
    %c0_3 = arith.constant 0 : index
    %c0_4 = arith.constant 0 : index
    %3 = vector.load %arg3[%c0_3, %c0_4] : memref<1x64xf32, #tpu.memory_space<vmem>>, vector<1x64xf32>
    %4 = vector.broadcast %3 : vector<1x64xf32> to vector<128x64xf32>
    %5 = arith.addf %2, %4 : vector<128x64xf32>
    %cst_5 = arith.constant 0.000000e+00 : f32
    %6 = vector.broadcast %cst_5 : f32 to vector<128x64xf32>
    %7 = arith.cmpf ogt, %5, %6 : vector<128x64xf32>
    %cst_6 = arith.constant 2.000000e-01 : f32
    %8 = vector.broadcast %cst_6 : f32 to vector<128x64xf32>
    %9 = arith.mulf %8, %5 : vector<128x64xf32>
    %10 = arith.select %7, %5, %9 : vector<128x64xi1>, vector<128x64xf32>
    %11 = arith.truncf %10 : vector<128x64xf32> to vector<128x64xbf16>
    %c0_7 = arith.constant 0 : index
    %c0_8 = arith.constant 0 : index
    %12 = vector.load %arg4[%c0_7, %c0_8] : memref<128x64xbf16, #tpu.memory_space<vmem>>, vector<128x64xbf16>
    tpu.vector_store %arg4[%c0_7, %c0_8], %11 {strides = array<i32>} : memref<128x64xbf16, #tpu.memory_space<vmem>>, vector<128x64xbf16>,
    return
  }
  func.func @transform_0(%arg0: i32) -> (i32, i32) {
    %c0_i32 = arith.constant 0 : i32
    %c0_i32_0 = arith.constant 0 : i32
    return %arg0, %c0_i32 : i32, i32
  }
  func.func @transform_1(%arg0: i32) -> (i32, i32) {
    %c0_i32 = arith.constant 0 : i32
    %c0_i32_0 = arith.constant 0 : i32
    %c0_i32_1 = arith.constant 0 : i32
    return %c0_i32, %c0_i32_0 : i32, i32
  }
  func.func @transform_2(%arg0: i32) -> (i32, i32) {
    %c0_i32 = arith.constant 0 : i32
    %c0_i32_0 = arith.constant 0 : i32
    %c0_i32_1 = arith.constant 0 : i32
    return %c0_i32, %c0_i32_0 : i32, i32
  }
  func.func @transform_3(%arg0: i32) -> (i32, i32) {
    %c0_i32 = arith.constant 0 : i32
    %c0_i32_0 = arith.constant 0 : i32
    return %arg0, %c0_i32 : i32, i32
  }
}

module attributes {stable_mosaic.version = 11 : i64} {
  func.func @_conv2_bn_lrelu_cached_kernel(%arg0: i32, %arg1: i32, %arg2: memref<32x1024xbf16, #tpu.memory_space<vmem>>, %arg3: memref<1024x128xbf16, #tpu.memory_space<vmem>>, %arg4: memref<1x128xf32, #tpu.memory_space<vmem>>, %arg5: memref<1x128xf32, #tpu.memory_space<vmem>>, %arg6: memref<1x128xf32, #tpu.memory_space<vmem>>, %arg7: memref<32x128xbf16, #tpu.memory_space<vmem>>, %arg8: memref<1x32x128xf32, #tpu.memory_space<vmem>>, %arg9: memref<1x128xf32, #tpu.memory_space<vmem>>, %arg10: memref<1x128xf32, #tpu.memory_space<vmem>>) attributes {dimension_semantics = [#tpu.dimension_semantics<arbitrary>, #tpu.dimension_semantics<arbitrary>], iteration_bounds = array<i64: 2, 1>, scalar_prefetch = 0 : i64, scratch_operands = 3 : i64, tpu.core_type = #tpu.core_type<tc>, window_params = [{transform_indices = @transform_0, window_bounds = array<i64: 32, 1024>}, {pipeline_mode = #tpu.pipeline_mode<synchronous>, transform_indices = @transform_1, window_bounds = array<i64: 1024, 128>}, {pipeline_mode = #tpu.pipeline_mode<synchronous>, transform_indices = @transform_2, window_bounds = array<i64: 1, 128>}, {pipeline_mode = #tpu.pipeline_mode<synchronous>, transform_indices = @transform_3, window_bounds = array<i64: 1, 128>}, {pipeline_mode = #tpu.pipeline_mode<synchronous>, transform_indices = @transform_4, window_bounds = array<i64: 1, 128>}, {transform_indices = @transform_5, window_bounds = array<i64: 32, 128>}]} {
    %c0_i32 = arith.constant 0 : i32
    %0 = arith.cmpi eq, %arg0, %c0_i32 : i32
    %c0_i32_0 = arith.constant 0 : i32
    %1 = arith.cmpi eq, %arg1, %c0_i32_0 : i32
    %2 = arith.andi %0, %1 : i1
    %3 = arith.extui %2 : i1 to i32
    %c0_i32_1 = arith.constant 0 : i32
    %4 = arith.cmpi ne, %3, %c0_i32_1 : i32
    scf.if %4 {
      %cst = arith.constant 0.000000e+00 : f32
      %11 = vector.broadcast %cst : f32 to vector<1x128xf32>
      %c0 = arith.constant 0 : index
      %c0_5 = arith.constant 0 : index
      %12 = vector.load %arg9[%c0, %c0_5] : memref<1x128xf32, #tpu.memory_space<vmem>>, vector<1x128xf32>
      tpu.vector_store %arg9[%c0, %c0_5], %11 {strides = array<i32>} : memref<1x128xf32, #tpu.memory_space<vmem>>, vector<1x128xf32>,
      %cst_6 = arith.constant 0.000000e+00 : f32
      %13 = vector.broadcast %cst_6 : f32 to vector<1x128xf32>
      %c0_7 = arith.constant 0 : index
      %c0_8 = arith.constant 0 : index
      %14 = vector.load %arg10[%c0_7, %c0_8] : memref<1x128xf32, #tpu.memory_space<vmem>>, vector<1x128xf32>
      tpu.vector_store %arg10[%c0_7, %c0_8], %13 {strides = array<i32>} : memref<1x128xf32, #tpu.memory_space<vmem>>, vector<1x128xf32>,
    } else {
    }
    %c0_i32_2 = arith.constant 0 : i32
    %5 = arith.cmpi eq, %arg0, %c0_i32_2 : i32
    %6 = arith.extui %5 : i1 to i32
    %c0_i32_3 = arith.constant 0 : i32
    %7 = arith.cmpi ne, %6, %c0_i32_3 : i32
    scf.if %7 {
      %c0 = arith.constant 0 : index
      %c0_5 = arith.constant 0 : index
      %11 = vector.load %arg2[%c0, %c0_5] : memref<32x1024xbf16, #tpu.memory_space<vmem>>, vector<32x1024xbf16>
      %c0_6 = arith.constant 0 : index
      %c0_7 = arith.constant 0 : index
      %12 = vector.load %arg3[%c0_6, %c0_7] : memref<1024x128xbf16, #tpu.memory_space<vmem>>, vector<1024x128xbf16>
      %cst = arith.constant dense<0.000000e+00> : vector<32x128xf32>
      %13 = tpu.matmul %11, %12, %cst {dimension_numbers = #tpu.dot_dimension_numbers<[1], [0], [0], [1], [0, 0, 1, 1], [], []>} : vector<32x1024xbf16>, vector<1024x128xbf16>, vector<32x128xf32> -> vector<32x128xf32>
      %c0_8 = arith.constant 0 : index
      %c0_9 = arith.constant 0 : index
      %14 = vector.load %arg4[%c0_8, %c0_9] : memref<1x128xf32, #tpu.memory_space<vmem>>, vector<1x128xf32>
      %15 = vector.broadcast %14 : vector<1x128xf32> to vector<32x128xf32>
      %16 = arith.addf %13, %15 : vector<32x128xf32>
      %17 = arith.index_cast %arg1 : i32 to index
      %c0_10 = arith.constant 0 : index
      %c0_11 = arith.constant 0 : index
      %18 = vector.load %arg8[%17, %c0_10, %c0_11] : memref<1x32x128xf32, #tpu.memory_space<vmem>>, vector<1x32x128xf32>
      %19 = vector.shape_cast %18 : vector<1x32x128xf32> to vector<32x128xf32>
      %20 = vector.shape_cast %16 : vector<32x128xf32> to vector<1x32x128xf32>
      tpu.vector_store %arg8[%17, %c0_10, %c0_11], %20 {strides = array<i32>} : memref<1x32x128xf32, #tpu.memory_space<vmem>>, vector<1x32x128xf32>,
      %21 = tpu.iota {dimensions = array<i32: 0>} : vector<32x1xi32>
      %c32_i32 = arith.constant 32 : i32
      %22 = arith.muli %arg1, %c32_i32 : i32
      %23 = vector.broadcast %22 : i32 to vector<32x1xi32>
      %24 = arith.addi %21, %23 : vector<32x1xi32>
      %c32_i32_12 = arith.constant 32 : i32
      %25 = vector.broadcast %c32_i32_12 : i32 to vector<32x1xi32>
      %26 = arith.cmpi slt, %24, %25 : vector<32x1xi32>
      %cst_13 = arith.constant 0.000000e+00 : f32
      %27 = vector.shape_cast %26 : vector<32x1xi1> to vector<32x1xi1>
      %28 = vector.broadcast %27 : vector<32x1xi1> to vector<32x128xi1>
      %29 = vector.broadcast %cst_13 : f32 to vector<32x128xf32>
      %30 = arith.select %28, %16, %29 : vector<32x128xi1>, vector<32x128xf32>
      %c0_14 = arith.constant 0 : index
      %c0_15 = arith.constant 0 : index
      %31 = vector.load %arg9[%c0_14, %c0_15] : memref<1x128xf32, #tpu.memory_space<vmem>>, vector<1x128xf32>
      %cst_16 = arith.constant dense<0.000000e+00> : vector<128xf32>
      %32 = vector.multi_reduction <add>, %30, %cst_16 [0] : vector<32x128xf32> to vector<128xf32>
      %33 = vector.shape_cast %32 : vector<128xf32> to vector<1x128xf32>
      %34 = arith.addf %31, %33 : vector<1x128xf32>
      %c0_17 = arith.constant 0 : index
      %c0_18 = arith.constant 0 : index
      %35 = vector.load %arg9[%c0_17, %c0_18] : memref<1x128xf32, #tpu.memory_space<vmem>>, vector<1x128xf32>
      tpu.vector_store %arg9[%c0_17, %c0_18], %34 {strides = array<i32>} : memref<1x128xf32, #tpu.memory_space<vmem>>, vector<1x128xf32>,
      %c0_19 = arith.constant 0 : index
      %c0_20 = arith.constant 0 : index
      %36 = vector.load %arg10[%c0_19, %c0_20] : memref<1x128xf32, #tpu.memory_space<vmem>>, vector<1x128xf32>
      %37 = arith.mulf %30, %16 : vector<32x128xf32>
      %cst_21 = arith.constant dense<0.000000e+00> : vector<128xf32>
      %38 = vector.multi_reduction <add>, %37, %cst_21 [0] : vector<32x128xf32> to vector<128xf32>
      %39 = vector.shape_cast %38 : vector<128xf32> to vector<1x128xf32>
      %40 = arith.addf %36, %39 : vector<1x128xf32>
      %c0_22 = arith.constant 0 : index
      %c0_23 = arith.constant 0 : index
      %41 = vector.load %arg10[%c0_22, %c0_23] : memref<1x128xf32, #tpu.memory_space<vmem>>, vector<1x128xf32>
      tpu.vector_store %arg10[%c0_22, %c0_23], %40 {strides = array<i32>} : memref<1x128xf32, #tpu.memory_space<vmem>>, vector<1x128xf32>,
      %42 = arith.truncf %16 : vector<32x128xf32> to vector<32x128xbf16>
      %c0_24 = arith.constant 0 : index
      %c0_25 = arith.constant 0 : index
      %43 = vector.load %arg7[%c0_24, %c0_25] : memref<32x128xbf16, #tpu.memory_space<vmem>>, vector<32x128xbf16>
      tpu.vector_store %arg7[%c0_24, %c0_25], %42 {strides = array<i32>} : memref<32x128xbf16, #tpu.memory_space<vmem>>, vector<32x128xbf16>,
    } else {
    }
    %c1_i32 = arith.constant 1 : i32
    %8 = arith.cmpi eq, %arg0, %c1_i32 : i32
    %9 = arith.extui %8 : i1 to i32
    %c0_i32_4 = arith.constant 0 : i32
    %10 = arith.cmpi ne, %9, %c0_i32_4 : i32
    scf.if %10 {
      %11 = arith.index_cast %arg1 : i32 to index
      %c0 = arith.constant 0 : index
      %c0_5 = arith.constant 0 : index
      %12 = vector.load %arg8[%11, %c0, %c0_5] : memref<1x32x128xf32, #tpu.memory_space<vmem>>, vector<1x32x128xf32>
      %13 = vector.shape_cast %12 : vector<1x32x128xf32> to vector<32x128xf32>
      %c0_6 = arith.constant 0 : index
      %c0_7 = arith.constant 0 : index
      %14 = vector.load %arg9[%c0_6, %c0_7] : memref<1x128xf32, #tpu.memory_space<vmem>>, vector<1x128xf32>
      %cst = arith.constant 3.125000e-02 : f32
      %15 = vector.broadcast %cst : f32 to vector<1x128xf32>
      %16 = arith.mulf %14, %15 : vector<1x128xf32>
      %c0_8 = arith.constant 0 : index
      %c0_9 = arith.constant 0 : index
      %17 = vector.load %arg10[%c0_8, %c0_9] : memref<1x128xf32, #tpu.memory_space<vmem>>, vector<1x128xf32>
      %cst_10 = arith.constant 3.125000e-02 : f32
      %18 = vector.broadcast %cst_10 : f32 to vector<1x128xf32>
      %19 = arith.mulf %17, %18 : vector<1x128xf32>
      %20 = arith.mulf %16, %16 : vector<1x128xf32>
      %21 = arith.subf %19, %20 : vector<1x128xf32>
      %cst_11 = arith.constant 0.000000e+00 : f32
      %22 = vector.broadcast %cst_11 : f32 to vector<1x128xf32>
      %23 = arith.maximumf %21, %22 : vector<1x128xf32>
      %24 = vector.broadcast %16 : vector<1x128xf32> to vector<32x128xf32>
      %25 = arith.subf %13, %24 : vector<32x128xf32>
      %cst_12 = arith.constant 9.99999974E-6 : f32
      %26 = vector.broadcast %cst_12 : f32 to vector<1x128xf32>
      %27 = arith.addf %23, %26 : vector<1x128xf32>
      %28 = math.rsqrt %27 : vector<1x128xf32>
      %29 = vector.broadcast %28 : vector<1x128xf32> to vector<32x128xf32>
      %30 = arith.mulf %25, %29 : vector<32x128xf32>
      %c0_13 = arith.constant 0 : index
      %c0_14 = arith.constant 0 : index
      %31 = vector.load %arg5[%c0_13, %c0_14] : memref<1x128xf32, #tpu.memory_space<vmem>>, vector<1x128xf32>
      %32 = vector.broadcast %31 : vector<1x128xf32> to vector<32x128xf32>
      %33 = arith.mulf %30, %32 : vector<32x128xf32>
      %c0_15 = arith.constant 0 : index
      %c0_16 = arith.constant 0 : index
      %34 = vector.load %arg6[%c0_15, %c0_16] : memref<1x128xf32, #tpu.memory_space<vmem>>, vector<1x128xf32>
      %35 = vector.broadcast %34 : vector<1x128xf32> to vector<32x128xf32>
      %36 = arith.addf %33, %35 : vector<32x128xf32>
      %cst_17 = arith.constant 0.000000e+00 : f32
      %37 = vector.broadcast %cst_17 : f32 to vector<32x128xf32>
      %38 = arith.cmpf ogt, %36, %37 : vector<32x128xf32>
      %cst_18 = arith.constant 2.000000e-01 : f32
      %39 = vector.broadcast %cst_18 : f32 to vector<32x128xf32>
      %40 = arith.mulf %39, %36 : vector<32x128xf32>
      %41 = arith.select %38, %36, %40 : vector<32x128xi1>, vector<32x128xf32>
      %42 = arith.truncf %41 : vector<32x128xf32> to vector<32x128xbf16>
      %c0_19 = arith.constant 0 : index
      %c0_20 = arith.constant 0 : index
      %43 = vector.load %arg7[%c0_19, %c0_20] : memref<32x128xbf16, #tpu.memory_space<vmem>>, vector<32x128xbf16>
      tpu.vector_store %arg7[%c0_19, %c0_20], %42 {strides = array<i32>} : memref<32x128xbf16, #tpu.memory_space<vmem>>, vector<32x128xbf16>,
    } else {
    }
    return
  }
  func.func @transform_0(%arg0: i32, %arg1: i32) -> (i32, i32) {
    %c1_i32 = arith.constant 1 : i32
    %0 = arith.subi %c1_i32, %arg0 : i32
    %1 = arith.muli %arg1, %0 : i32
    %c0_i32 = arith.constant 0 : i32
    %c0_i32_0 = arith.constant 0 : i32
    return %1, %c0_i32 : i32, i32
  }
  func.func @transform_1(%arg0: i32, %arg1: i32) -> (i32, i32) {
    %c0_i32 = arith.constant 0 : i32
    %c0_i32_0 = arith.constant 0 : i32
    %c0_i32_1 = arith.constant 0 : i32
    return %c0_i32, %c0_i32_0 : i32, i32
  }
  func.func @transform_2(%arg0: i32, %arg1: i32) -> (i32, i32) {
    %c0_i32 = arith.constant 0 : i32
    %c0_i32_0 = arith.constant 0 : i32
    %c0_i32_1 = arith.constant 0 : i32
    return %c0_i32, %c0_i32_0 : i32, i32
  }
  func.func @transform_3(%arg0: i32, %arg1: i32) -> (i32, i32) {
    %c0_i32 = arith.constant 0 : i32
    %c0_i32_0 = arith.constant 0 : i32
    %c0_i32_1 = arith.constant 0 : i32
    return %c0_i32, %c0_i32_0 : i32, i32
  }
  func.func @transform_4(%arg0: i32, %arg1: i32) -> (i32, i32) {
    %c0_i32 = arith.constant 0 : i32
    %c0_i32_0 = arith.constant 0 : i32
    %c0_i32_1 = arith.constant 0 : i32
    return %c0_i32, %c0_i32_0 : i32, i32
  }
  func.func @transform_5(%arg0: i32, %arg1: i32) -> (i32, i32) {
    %c0_i32 = arith.constant 0 : i32
    %c0_i32_0 = arith.constant 0 : i32
    return %arg1, %c0_i32 : i32, i32
  }
}

module attributes {stable_mosaic.version = 11 : i64} {
  func.func @_fc_head_kernel(%arg0: i32, %arg1: memref<2x2048xbf16, #tpu.memory_space<vmem>>, %arg2: memref<2048x64xbf16, #tpu.memory_space<vmem>>, %arg3: memref<1x64xf32, #tpu.memory_space<vmem>>, %arg4: memref<1x64xf32, #tpu.memory_space<vmem>>, %arg5: memref<1x64xf32, #tpu.memory_space<vmem>>, %arg6: memref<64x1xf32, #tpu.memory_space<vmem>>, %arg7: memref<1x1xf32, #tpu.memory_space<vmem>>, %arg8: memref<2x1xf32, #tpu.memory_space<vmem>>) attributes {dimension_semantics = [#tpu.dimension_semantics<arbitrary>], iteration_bounds = array<i64: 1>, scalar_prefetch = 0 : i64, scratch_operands = 0 : i64, tpu.core_type = #tpu.core_type<tc>, window_params = [{pipeline_mode = #tpu.pipeline_mode<synchronous>, transform_indices = @transform_0, window_bounds = array<i64: 2, 2048>}, {pipeline_mode = #tpu.pipeline_mode<synchronous>, transform_indices = @transform_1, window_bounds = array<i64: 2048, 64>}, {pipeline_mode = #tpu.pipeline_mode<synchronous>, transform_indices = @transform_2, window_bounds = array<i64: 1, 64>}, {pipeline_mode = #tpu.pipeline_mode<synchronous>, transform_indices = @transform_3, window_bounds = array<i64: 1, 64>}, {pipeline_mode = #tpu.pipeline_mode<synchronous>, transform_indices = @transform_4, window_bounds = array<i64: 1, 64>}, {pipeline_mode = #tpu.pipeline_mode<synchronous>, transform_indices = @transform_5, window_bounds = array<i64: 64, 1>}, {pipeline_mode = #tpu.pipeline_mode<synchronous>, transform_indices = @transform_6, window_bounds = array<i64: 1, 1>}, {pipeline_mode = #tpu.pipeline_mode<synchronous>, transform_indices = @transform_7, window_bounds = array<i64: 2, 1>}]} {
    %c0 = arith.constant 0 : index
    %c0_0 = arith.constant 0 : index
    %0 = vector.load %arg1[%c0, %c0_0] : memref<2x2048xbf16, #tpu.memory_space<vmem>>, vector<2x2048xbf16>
    %c0_1 = arith.constant 0 : index
    %c0_2 = arith.constant 0 : index
    %1 = vector.load %arg2[%c0_1, %c0_2] : memref<2048x64xbf16, #tpu.memory_space<vmem>>, vector<2048x64xbf16>
    %cst = arith.constant dense<0.000000e+00> : vector<2x64xf32>
    %2 = tpu.matmul %0, %1, %cst {dimension_numbers = #tpu.dot_dimension_numbers<[1], [0], [0], [1], [0, 0, 1, 1], [], []>} : vector<2x2048xbf16>, vector<2048x64xbf16>, vector<2x64xf32> -> vector<2x64xf32>
    %c0_3 = arith.constant 0 : index
    %c0_4 = arith.constant 0 : index
    %3 = vector.load %arg3[%c0_3, %c0_4] : memref<1x64xf32, #tpu.memory_space<vmem>>, vector<1x64xf32>
    %4 = vector.broadcast %3 : vector<1x64xf32> to vector<2x64xf32>
    %5 = arith.addf %2, %4 : vector<2x64xf32>
    %cst_5 = arith.constant dense<0.000000e+00> : vector<64xf32>
    %6 = vector.multi_reduction <add>, %5, %cst_5 [0] : vector<2x64xf32> to vector<64xf32>
    %7 = vector.shape_cast %6 : vector<64xf32> to vector<1x64xf32>
    %cst_6 = arith.constant 2.000000e+00 : f32
    %8 = vector.broadcast %cst_6 : f32 to vector<1x64xf32>
    %9 = arith.divf %7, %8 : vector<1x64xf32>
    %10 = vector.broadcast %9 : vector<1x64xf32> to vector<2x64xf32>
    %11 = arith.subf %5, %10 : vector<2x64xf32>
    %12 = vector.broadcast %9 : vector<1x64xf32> to vector<2x64xf32>
    %13 = arith.subf %5, %12 : vector<2x64xf32>
    %14 = arith.mulf %11, %13 : vector<2x64xf32>
    %cst_7 = arith.constant dense<0.000000e+00> : vector<64xf32>
    %15 = vector.multi_reduction <add>, %14, %cst_7 [0] : vector<2x64xf32> to vector<64xf32>
    %16 = vector.shape_cast %15 : vector<64xf32> to vector<1x64xf32>
    %cst_8 = arith.constant 2.000000e+00 : f32
    %17 = vector.broadcast %cst_8 : f32 to vector<1x64xf32>
    %18 = arith.divf %16, %17 : vector<1x64xf32>
    %19 = vector.broadcast %9 : vector<1x64xf32> to vector<2x64xf32>
    %20 = arith.subf %5, %19 : vector<2x64xf32>
    %cst_9 = arith.constant 9.99999974E-6 : f32
    %21 = vector.broadcast %cst_9 : f32 to vector<1x64xf32>
    %22 = arith.addf %18, %21 : vector<1x64xf32>
    %23 = math.rsqrt %22 : vector<1x64xf32>
    %24 = vector.broadcast %23 : vector<1x64xf32> to vector<2x64xf32>
    %25 = arith.mulf %20, %24 : vector<2x64xf32>
    %c0_10 = arith.constant 0 : index
    %c0_11 = arith.constant 0 : index
    %26 = vector.load %arg4[%c0_10, %c0_11] : memref<1x64xf32, #tpu.memory_space<vmem>>, vector<1x64xf32>
    %27 = vector.broadcast %26 : vector<1x64xf32> to vector<2x64xf32>
    %28 = arith.mulf %25, %27 : vector<2x64xf32>
    %c0_12 = arith.constant 0 : index
    %c0_13 = arith.constant 0 : index
    %29 = vector.load %arg5[%c0_12, %c0_13] : memref<1x64xf32, #tpu.memory_space<vmem>>, vector<1x64xf32>
    %30 = vector.broadcast %29 : vector<1x64xf32> to vector<2x64xf32>
    %31 = arith.addf %28, %30 : vector<2x64xf32>
    %cst_14 = arith.constant 0.000000e+00 : f32
    %32 = vector.broadcast %cst_14 : f32 to vector<2x64xf32>
    %33 = arith.cmpf ogt, %31, %32 : vector<2x64xf32>
    %cst_15 = arith.constant 2.000000e-01 : f32
    %34 = vector.broadcast %cst_15 : f32 to vector<2x64xf32>
    %35 = arith.mulf %34, %31 : vector<2x64xf32>
    %36 = arith.select %33, %31, %35 : vector<2x64xi1>, vector<2x64xf32>
    %c0_16 = arith.constant 0 : index
    %c0_17 = arith.constant 0 : index
    %37 = vector.load %arg6[%c0_16, %c0_17] : memref<64x1xf32, #tpu.memory_space<vmem>>, vector<64x1xf32>
    %cst_18 = arith.constant dense<0.000000e+00> : vector<2x1xf32>
    %38 = tpu.matmul %36, %37, %cst_18 {dimension_numbers = #tpu.dot_dimension_numbers<[1], [0], [0], [1], [0, 0, 1, 1], [], []>} : vector<2x64xf32>, vector<64x1xf32>, vector<2x1xf32> -> vector<2x1xf32>
    %c0_19 = arith.constant 0 : index
    %c0_20 = arith.constant 0 : index
    %39 = vector.load %arg7[%c0_19, %c0_20] : memref<1x1xf32, #tpu.memory_space<vmem>>, vector<1x1xf32>
    %40 = vector.broadcast %39 : vector<1x1xf32> to vector<2x1xf32>
    %41 = arith.addf %38, %40 : vector<2x1xf32>
    %cst_21 = arith.constant 0.000000e+00 : f32
    %42 = vector.broadcast %cst_21 : f32 to vector<2x1xf32>
    %43 = arith.subf %42, %41 : vector<2x1xf32>
    %44 = math.exp %43 : vector<2x1xf32>
    %cst_22 = arith.constant 1.000000e+00 : f32
    %45 = vector.broadcast %cst_22 : f32 to vector<2x1xf32>
    %46 = arith.addf %45, %44 : vector<2x1xf32>
    %47 = tpu.reciprocal %46 : vector<2x1xf32> -> vector<2x1xf32>
    %c0_23 = arith.constant 0 : index
    %c0_24 = arith.constant 0 : index
    %48 = vector.load %arg8[%c0_23, %c0_24] : memref<2x1xf32, #tpu.memory_space<vmem>>, vector<2x1xf32>
    tpu.vector_store %arg8[%c0_23, %c0_24], %47 {strides = array<i32>} : memref<2x1xf32, #tpu.memory_space<vmem>>, vector<2x1xf32>,
    return
  }
  func.func @transform_0(%arg0: i32) -> (i32, i32) {
    %c0_i32 = arith.constant 0 : i32
    %c0_i32_0 = arith.constant 0 : i32
    %c0_i32_1 = arith.constant 0 : i32
    return %c0_i32, %c0_i32_0 : i32, i32
  }
  func.func @transform_1(%arg0: i32) -> (i32, i32) {
    %c0_i32 = arith.constant 0 : i32
    %c0_i32_0 = arith.constant 0 : i32
    %c0_i32_1 = arith.constant 0 : i32
    return %c0_i32, %c0_i32_0 : i32, i32
  }
  func.func @transform_2(%arg0: i32) -> (i32, i32) {
    %c0_i32 = arith.constant 0 : i32
    %c0_i32_0 = arith.constant 0 : i32
    %c0_i32_1 = arith.constant 0 : i32
    return %c0_i32, %c0_i32_0 : i32, i32
  }
  func.func @transform_3(%arg0: i32) -> (i32, i32) {
    %c0_i32 = arith.constant 0 : i32
    %c0_i32_0 = arith.constant 0 : i32
    %c0_i32_1 = arith.constant 0 : i32
    return %c0_i32, %c0_i32_0 : i32, i32
  }
  func.func @transform_4(%arg0: i32) -> (i32, i32) {
    %c0_i32 = arith.constant 0 : i32
    %c0_i32_0 = arith.constant 0 : i32
    %c0_i32_1 = arith.constant 0 : i32
    return %c0_i32, %c0_i32_0 : i32, i32
  }
  func.func @transform_5(%arg0: i32) -> (i32, i32) {
    %c0_i32 = arith.constant 0 : i32
    %c0_i32_0 = arith.constant 0 : i32
    %c0_i32_1 = arith.constant 0 : i32
    return %c0_i32, %c0_i32_0 : i32, i32
  }
  func.func @transform_6(%arg0: i32) -> (i32, i32) {
    %c0_i32 = arith.constant 0 : i32
    %c0_i32_0 = arith.constant 0 : i32
    %c0_i32_1 = arith.constant 0 : i32
    return %c0_i32, %c0_i32_0 : i32, i32
  }
  func.func @transform_7(%arg0: i32) -> (i32, i32) {
    %c0_i32 = arith.constant 0 : i32
    %c0_i32_0 = arith.constant 0 : i32
    %c0_i32_1 = arith.constant 0 : i32
    return %c0_i32, %c0_i32_0 : i32, i32
  }
}

</mosaic_0001>

<llo_original>
// kernel: _lambda_.3
$region0: #{_lambda_.3}
  #allocation0 [shape = 'u32[]', space=smem, size = 0x4, offset = 0x4, fixed_abs, tag = 'smem constant byte address 0x4 - core index']
  #allocation1 [shape = 'u32[144,128]{1,0:T(1,128)}', space=vmem, size = 0x12000, scoped, tag = 'internal scratch']
  %s0 = inlined_call_operand.vmem [shape: bf16[128,16], index: 0, kind: input, shape index: {}]
  %s1 = inlined_call_operand.vmem [shape: bf16[16,64], index: 1, kind: input, shape index: {}]
  %s2 = inlined_call_operand.vmem [shape: f32[1,64], index: 2, kind: input, shape index: {}]
  %s3 = inlined_call_operand.vmem [shape: bf16[128,64], index: 3, kind: output, shape index: {}]
  %s4 = sld [smem:[#allocation0]]
  $region22: #{_lambda_.3} parent=0
    _
  %s6 = ssub.s32 1, %s4
  %s7 = scalar_select 0, %s6, %s4
  // Predicated region
  $region2: #{_lambda_.3} parent=0 // pred_check
    _
  $region3: #{_lambda_.3} parent=0 // pred_check_branch
    %9 = sbr.rel (0) target = $region5
  $region4: #{_lambda_.3} parent=0 // pred_region
    _
  $region5: #{_lambda_.3} parent=0 // pred_fallthru
    _
  // Predicated region
  $region6: #{_lambda_.3} parent=0 // pred_check
    _
  $region7: #{_lambda_.3} parent=0 // pred_check_branch
    %11 = sbr.rel (0) target = $region9
  $region8: #{_lambda_.3} parent=0 // pred_region
    _
  $region9: #{_lambda_.3} parent=0 // pred_fallthru
    _
  // Predicated region
  $region10: #{_lambda_.3} parent=0 // pred_check
    _
  $region11: #{_lambda_.3} parent=0 // pred_check_branch
    %13 = sbr.rel (0) target = $region13
  $region12: #{_lambda_.3} parent=0 // pred_region
    _
  $region13: #{_lambda_.3} parent=0 // pred_fallthru
    _
  %v15 = vld [vmem:[%s0] sm:$0xf]
  %v16 = vld [vmem:[%s0 + $0x4] sm:$0xf]
  %v17 = vld [vmem:[%s0 + $0x8] sm:$0xf]
  %v18 = vld [vmem:[%s0 + $0xc] sm:$0xf]
  %v19 = vld [vmem:[%s0 + $0x10] sm:$0xf]
  %v20 = vld [vmem:[%s0 + $0x14] sm:$0xf]
  %v21 = vld [vmem:[%s0 + $0x18] sm:$0xf]
  %v22 = vld [vmem:[%s0 + $0x1c] sm:$0xf]
  %v23 = vld [vmem:[%s0 + $0x20] sm:$0xf]
  %v24 = vld [vmem:[%s0 + $0x24] sm:$0xf]
  %v25 = vld [vmem:[%s0 + $0x28] sm:$0xf]
  %v26 = vld [vmem:[%s0 + $0x2c] sm:$0xf]
  %v27 = vld [vmem:[%s0 + $0x30] sm:$0xf]
  %v28 = vld [vmem:[%s0 + $0x34] sm:$0xf]
  %v29 = vld [vmem:[%s0 + $0x38] sm:$0xf]
  %v30 = vld [vmem:[%s0 + $0x3c] sm:$0xf]
  %v31 = vld [vmem:[%s1] sm:$0xf]
  %v32 = vld [vmem:[%s1 + $0x4] sm:$0xf]
  %v33 = vld [vmem:[%s2] sm:$0x1]
  %v35 = vlaneseq
  %v36 = vshrl.u32 %v35, 7
  %v37 = vsub.s32 0, %v36
  %v38 = vrot.slane %v33, %v37
  %v56 = vunpack.c.l.b16 %v15
  %v57 = vunpack.c.l.b16 %v16
  %v58 = vunpack.c.l.b16 %v17
  %v59 = vunpack.c.l.b16 %v18
  %v60 = vunpack.c.l.b16 %v19
  %v61 = vunpack.c.l.b16 %v20
  %v62 = vunpack.c.l.b16 %v21
  %v63 = vunpack.c.l.b16 %v22
  %v64 = vunpack.c.l.b16 %v23
  %v65 = vunpack.c.l.b16 %v24
  %v66 = vunpack.c.l.b16 %v25
  %v67 = vunpack.c.l.b16 %v26
  %v68 = vunpack.c.l.b16 %v27
  %v69 = vunpack.c.l.b16 %v28
  %v70 = vunpack.c.l.b16 %v29
  %v71 = vunpack.c.l.b16 %v30
  %v72 = vpack.c.b16 %v57, %v56
  %v73 = vpack.c.b16 %v59, %v58
  %v74 = vpack.c.b16 %v61, %v60
  %v75 = vpack.c.b16 %v63, %v62
  %v76 = vpack.c.b16 %v65, %v64
  %v77 = vpack.c.b16 %v67, %v66
  %v78 = vpack.c.b16 %v69, %v68
  %v79 = vpack.c.b16 %v71, %v70
  %v82 = vunpack.c.l.b16 %v31
  %v83 = vunpack.c.l.b16 %v32
  %v84 = vpack.c.b16 %v83, %v82
  %vm86 = vcmask 130048
  %v88 = vsel %vm86, %v72, 0
  %v91 = vsel %vm86, %v73, 0
  %v94 = vsel %vm86, %v74, 0
  %v97 = vsel %vm86, %v75, 0
  %v100 = vsel %vm86, %v76, 0
  %v103 = vsel %vm86, %v77, 0
  %v106 = vsel %vm86, %v78, 0
  %v109 = vsel %vm86, %v79, 0
  %111 = vmatprep.subr.bf16.mxu0 0
  %112 = vmatpush1.bf16.msra.mxu0 0
  %113 = vmatprep.subr.bf16.mxu0 0
  %114 = vmatpush1.bf16.msra.mxu0 0
  %115 = vmatprep.subr.bf16.mxu0 0
  %116 = vmatpush1.bf16.msra.mxu0 0
  %117 = vmatprep.subr.bf16.mxu0 0
  %118 = vmatpush1.bf16.msra.mxu0 0
  %119 = vmatprep.subr.bf16.mxu0 0
  %120 = vmatpush1.bf16.msra.mxu0 0
  %121 = vmatprep.subr.bf16.mxu0 0
  %122 = vmatpush1.bf16.msra.mxu0 0
  %123 = vmatprep.subr.bf16.mxu0 0
  %124 = vmatpush1.bf16.msra.mxu0 0
  %125 = vmatprep.subr.bf16.mxu0 0
  %126 = vmatpush1.bf16.msra.mxu0 %v84
  %127 = vmatprep.subr.bf16.mxu0 0
  %128 = vmatpush2.bf16.msra.mxu0 0
  %129 = vmatprep.subr.bf16.mxu0 0
  %130 = vmatpush2.bf16.msra.mxu0 0
  %131 = vmatprep.subr.bf16.mxu0 0
  %132 = vmatpush2.bf16.msra.mxu0 0
  %133 = vmatprep.subr.bf16.mxu0 0
  %134 = vmatpush2.bf16.msra.mxu0 0
  %135 = vmatprep.subr.bf16.mxu0 0
  %136 = vmatpush2.bf16.msra.mxu0 0
  %137 = vmatprep.subr.bf16.mxu0 0
  %138 = vmatpush2.bf16.msra.mxu0 0
  %139 = vmatprep.subr.bf16.mxu0 0
  %140 = vmatpush2.bf16.msra.mxu0 0
  %141 = vmatprep.subr.bf16.mxu0 0
  %142 = vmatpush2.bf16.msra.mxu0 0
  %143 = vmatprep.mubr.bf16.mxu0 0
  %144 = vmatmul.mubr.bf16.gmra.mxu0 %v88
  %v145 = vpop.f32.mrf.mxu0
  %v146 = vadd.f32 %v38, %v145
  %v147 = vpop.f32.mrf.mxu0
  %v148 = vpop.f32.mrf.mxu0
  %v149 = vadd.f32 %v38, %v148
  %v150 = vpop.f32.mrf.mxu0
  %151 = vmatprep.mubr.bf16.mxu0 0
  %152 = vmatmul.mubr.bf16.gmra.mxu0 %v91
  %v153 = vpop.f32.mrf.mxu0
  %v154 = vadd.f32 %v38, %v153
  %v155 = vpop.f32.mrf.mxu0
  %v156 = vpop.f32.mrf.mxu0
  %v157 = vadd.f32 %v38, %v156
  %v158 = vpop.f32.mrf.mxu0
  %159 = vmatprep.mubr.bf16.mxu0 0
  %160 = vmatmul.mubr.bf16.gmra.mxu0 %v94
  %v161 = vpop.f32.mrf.mxu0
  %v162 = vadd.f32 %v38, %v161
  %v163 = vpop.f32.mrf.mxu0
  %v164 = vpop.f32.mrf.mxu0
  %v165 = vadd.f32 %v38, %v164
  %v166 = vpop.f32.mrf.mxu0
  %167 = vmatprep.mubr.bf16.mxu0 0
  %168 = vmatmul.mubr.bf16.gmra.mxu0 %v97
  %v169 = vpop.f32.mrf.mxu0
  %v170 = vadd.f32 %v38, %v169
  %v171 = vpop.f32.mrf.mxu0
  %v172 = vpop.f32.mrf.mxu0
  %v173 = vadd.f32 %v38, %v172
  %v174 = vpop.f32.mrf.mxu0
  %175 = vmatprep.mubr.bf16.mxu0 0
  %176 = vmatmul.mubr.bf16.gmra.mxu0 %v100
  %v177 = vpop.f32.mrf.mxu0
  %v178 = vadd.f32 %v38, %v177
  %v179 = vpop.f32.mrf.mxu0
  %v180 = vpop.f32.mrf.mxu0
  %v181 = vadd.f32 %v38, %v180
  %v182 = vpop.f32.mrf.mxu0
  %183 = vmatprep.mubr.bf16.mxu0 0
  %184 = vmatmul.mubr.bf16.gmra.mxu0 %v103
  %v185 = vpop.f32.mrf.mxu0
  %v186 = vadd.f32 %v38, %v185
  %v187 = vpop.f32.mrf.mxu0
  %v188 = vpop.f32.mrf.mxu0
  %v189 = vadd.f32 %v38, %v188
  %v190 = vpop.f32.mrf.mxu0
  %191 = vmatprep.mubr.bf16.mxu0 0
  %192 = vmatmul.mubr.bf16.gmra.mxu0 %v106
  %v193 = vpop.f32.mrf.mxu0
  %v194 = vadd.f32 %v38, %v193
  %v195 = vpop.f32.mrf.mxu0
  %v196 = vpop.f32.mrf.mxu0
  %v197 = vadd.f32 %v38, %v196
  %v198 = vpop.f32.mrf.mxu0
  %199 = vmatprep.mubr.bf16.mxu0 0
  %200 = vmatmul.mubr.bf16.gmra.mxu0 %v109
  %v201 = vpop.f32.mrf.mxu0
  %v202 = vadd.f32 %v38, %v201
  %v203 = vpop.f32.mrf.mxu0
  %v204 = vpop.f32.mrf.mxu0
  %v205 = vadd.f32 %v38, %v204
  %v206 = vpop.f32.mrf.mxu0
  %207 = vdwg.mxu0
  %vm208 = vcmp.gt.f32.partialorder %v146, 0.0
  %vm209 = vcmp.gt.f32.partialorder %v149, 0.0
  %vm210 = vcmp.gt.f32.partialorder %v154, 0.0
  %vm211 = vcmp.gt.f32.partialorder %v157, 0.0
  %vm212 = vcmp.gt.f32.partialorder %v162, 0.0
  %vm213 = vcmp.gt.f32.partialorder %v165, 0.0
  %vm214 = vcmp.gt.f32.partialorder %v170, 0.0
  %vm215 = vcmp.gt.f32.partialorder %v173, 0.0
  %vm216 = vcmp.gt.f32.partialorder %v178, 0.0
  %vm217 = vcmp.gt.f32.partialorder %v181, 0.0
  %vm218 = vcmp.gt.f32.partialorder %v186, 0.0
  %vm219 = vcmp.gt.f32.partialorder %v189, 0.0
  %vm220 = vcmp.gt.f32.partialorder %v194, 0.0
  %vm221 = vcmp.gt.f32.partialorder %v197, 0.0
  %vm222 = vcmp.gt.f32.partialorder %v202, 0.0
  %vm223 = vcmp.gt.f32.partialorder %v205, 0.0
  %v224 = vmul.f32 %v146, 0.2
  %v225 = vmul.f32 %v149, 0.2
  %v226 = vmul.f32 %v154, 0.2
  %v227 = vmul.f32 %v157, 0.2
  %v228 = vmul.f32 %v162, 0.2
  %v229 = vmul.f32 %v165, 0.2
  %v230 = vmul.f32 %v170, 0.2
  %v231 = vmul.f32 %v173, 0.2
  %v232 = vmul.f32 %v178, 0.2
  %v233 = vmul.f32 %v181, 0.2
  %v234 = vmul.f32 %v186, 0.2
  %v235 = vmul.f32 %v189, 0.2
  %v236 = vmul.f32 %v194, 0.2
  %v237 = vmul.f32 %v197, 0.2
  %v238 = vmul.f32 %v202, 0.2
  %v239 = vmul.f32 %v205, 0.2
  %v240 = vsel %vm208, %v146, %v224
  %v241 = vsel %vm209, %v149, %v225
  %v242 = vsel %vm210, %v154, %v226
  %v243 = vsel %vm211, %v157, %v227
  %v244 = vsel %vm212, %v162, %v228
  %v245 = vsel %vm213, %v165, %v229
  %v246 = vsel %vm214, %v170, %v230
  %v247 = vsel %vm215, %v173, %v231
  %v248 = vsel %vm216, %v178, %v232
  %v249 = vsel %vm217, %v181, %v233
  %v250 = vsel %vm218, %v186, %v234
  %v251 = vsel %vm219, %v189, %v235
  %v252 = vsel %vm220, %v194, %v236
  %v253 = vsel %vm221, %v197, %v237
  %v254 = vsel %vm222, %v202, %v238
  %v255 = vsel %vm223, %v205, %v239
  %v256 = vpack.c.bf16 %v241, %v240
  %v257 = vpack.c.bf16 %v243, %v242
  %v258 = vpack.c.bf16 %v245, %v244
  %v259 = vpack.c.bf16 %v247, %v246
  %v260 = vpack.c.bf16 %v249, %v248
  %v261 = vpack.c.bf16 %v251, %v250
  %v262 = vpack.c.bf16 %v253, %v252
  %v263 = vpack.c.bf16 %v255, %v254
  %v272 = vunpack.c.l.b16 %v256
  %v273 = vunpack.c.h.b16 %v256
  %v274 = vunpack.c.l.b16 %v257
  %v275 = vunpack.c.h.b16 %v257
  %v276 = vunpack.c.l.b16 %v258
  %v277 = vunpack.c.h.b16 %v258
  %v278 = vunpack.c.l.b16 %v259
  %v279 = vunpack.c.h.b16 %v259
  %v280 = vunpack.c.l.b16 %v260
  %v281 = vunpack.c.h.b16 %v260
  %v282 = vunpack.c.l.b16 %v261
  %v283 = vunpack.c.h.b16 %v261
  %v284 = vunpack.c.l.b16 %v262
  %v285 = vunpack.c.h.b16 %v262
  %v286 = vunpack.c.l.b16 %v263
  %v287 = vunpack.c.h.b16 %v263
  %v288 = vpack.c.b16 %v272, %v272
  %v289 = vpack.c.b16 %v273, %v273
  %v290 = vpack.c.b16 %v274, %v274
  %v291 = vpack.c.b16 %v275, %v275
  %v292 = vpack.c.b16 %v276, %v276
  %v293 = vpack.c.b16 %v277, %v277
  %v294 = vpack.c.b16 %v278, %v278
  %v295 = vpack.c.b16 %v279, %v279
  %v296 = vpack.c.b16 %v280, %v280
  %v297 = vpack.c.b16 %v281, %v281
  %v298 = vpack.c.b16 %v282, %v282
  %v299 = vpack.c.b16 %v283, %v283
  %v300 = vpack.c.b16 %v284, %v284
  %v301 = vpack.c.b16 %v285, %v285
  %v302 = vpack.c.b16 %v286, %v286
  %v303 = vpack.c.b16 %v287, %v287
  %vm320 = vcmask 519168
  %321 = vst.msk [vmem:[%s3] sm:$0xf] %vm320, %v288
  %322 = vst.msk [vmem:[%s3 + $0x4] sm:$0xf] %vm320, %v289
  %323 = vst.msk [vmem:[%s3 + $0x8] sm:$0xf] %vm320, %v290
  %324 = vst.msk [vmem:[%s3 + $0xc] sm:$0xf] %vm320, %v291
  %325 = vst.msk [vmem:[%s3 + $0x10] sm:$0xf] %vm320, %v292
  %326 = vst.msk [vmem:[%s3 + $0x14] sm:$0xf] %vm320, %v293
  %327 = vst.msk [vmem:[%s3 + $0x18] sm:$0xf] %vm320, %v294
  %328 = vst.msk [vmem:[%s3 + $0x1c] sm:$0xf] %vm320, %v295
  %329 = vst.msk [vmem:[%s3 + $0x20] sm:$0xf] %vm320, %v296
  %330 = vst.msk [vmem:[%s3 + $0x24] sm:$0xf] %vm320, %v297
  %331 = vst.msk [vmem:[%s3 + $0x28] sm:$0xf] %vm320, %v298
  %332 = vst.msk [vmem:[%s3 + $0x2c] sm:$0xf] %vm320, %v299
  %333 = vst.msk [vmem:[%s3 + $0x30] sm:$0xf] %vm320, %v300
  %334 = vst.msk [vmem:[%s3 + $0x34] sm:$0xf] %vm320, %v301
  %335 = vst.msk [vmem:[%s3 + $0x38] sm:$0xf] %vm320, %v302
  %336 = vst.msk [vmem:[%s3 + $0x3c] sm:$0xf] %vm320, %v303
  // Predicated region
  $region14: #{_lambda_.3} parent=0 // pred_check
    _
  $region15: #{_lambda_.3} parent=0 // pred_check_branch
    %338 = sbr.rel (0) target = $region17
  $region16: #{_lambda_.3} parent=0 // pred_region
    _
  $region17: #{_lambda_.3} parent=0 // pred_fallthru
    _
  // Predicated region
  $region18: #{_lambda_.3} parent=0 // pred_check
    _
  $region19: #{_lambda_.3} parent=0 // pred_check_branch
    %340 = sbr.rel (0) target = $region21
  $region20: #{_lambda_.3} parent=0 // pred_region
    _
  $region21: #{_lambda_.3} parent=0 // pred_fallthru
    _

// kernel: _lambda_.4
$region0: #{_lambda_.4}
  #allocation0 [shape = 'u32[]', space=smem, size = 0x4, offset = 0x4, fixed_abs, tag = 'smem constant byte address 0x4 - core index']
  #allocation1 [shape = 'u32[144,128]{1,0:T(1,128)}', space=vmem, size = 0x12000, scoped, tag = 'internal scratch']
  #allocation2 [shape = 'f32[1,32,128]{2,1,0:T(8,128)}', space=vmem, size = 0x4000, scoped, tag = 'scratch operand']
  #allocation3 [shape = 'f32[1,128]{1,0:T(1,128)}', space=vmem, size = 0x200, scoped, tag = 'scratch operand']
  #allocation4 [shape = 'f32[1,128]{1,0:T(1,128)}', space=vmem, size = 0x200, scoped, tag = 'scratch operand']
  %s0 = inlined_call_operand.vmem [shape: bf16[32,1024], index: 0, kind: input, shape index: {}]
  %s1 = inlined_call_operand.vmem [shape: bf16[1024,128], index: 1, kind: input, shape index: {}]
  %s2 = inlined_call_operand.vmem [shape: f32[1,128], index: 2, kind: input, shape index: {}]
  %s3 = inlined_call_operand.vmem [shape: f32[1,128], index: 3, kind: input, shape index: {}]
  %s4 = inlined_call_operand.vmem [shape: f32[1,128], index: 4, kind: input, shape index: {}]
  %s5 = inlined_call_operand.vmem [shape: bf16[32,128], index: 5, kind: output, shape index: {}]
  %s6 = sld [smem:[#allocation0]]
  $region65: #{_lambda_.4} parent=0
    _
  %s8 = ssub.s32 1, %s6
  %s9 = scalar_select 0, %s8, %s6
  loop: start=0, step=1, limit=4
  $region2: #{_lambda_.4} parent=0 // loop_pre_header
    _
  $region3: #{_lambda_.4} parent=0 // loop_header
    %s11 = sphi 0, %s15
    %p12 = scmp.ge.s32.totalorder %s11, 4
    %s18 = sphi 0, %s30
    %s19 = sphi 0, %s26
    %s20 = sphi 0, %s18
    %s21 = sphi 0, %s19
    %s22 = sphi 0, %s20
    %s23 = sphi 0, %s21
    %s37 = sphi 0, %s39
    %s40 = sphi 0, %s37
    %s41 = sphi 0, %s40
    %s57 = sphi 0, %s41
    %s61 = sphi 0, %s61
    %s63 = sphi 0, %s61
    %s64 = sphi 0, %s63
    %s78 = sphi 0, %s64
    %s82 = sphi 0, %s82
    %s84 = sphi 0, %s82
    %s85 = sphi 0, %s84
    %s99 = sphi 0, %s85
    %s103 = sphi 0, %s103
    %s105 = sphi 0, %s103
    %s106 = sphi 0, %s105
    %s120 = sphi 0, %s106
    %s124 = sphi 0, %s124
    %s126 = sphi 0, %s124
    %s127 = sphi 0, %s126
    %s141 = sphi 0, %s127
    %s147 = sphi 0, %s149
    %s150 = sphi 0, %s147
    %s151 = sphi 0, %s150
    %s167 = sphi 0, %s151
  $region4: #{_lambda_.4} parent=0 // loop_header_branch
    %14 = sbr.rel (%p12) target = $region8
  $region5: #{_lambda_.4} parent=0 // loop_body
    %s16 = ssub.s32 %s11, 1
    %s17 = ssub.s32 %s11, 2
    %s24 = sadd.s32 1, %s19
    %p25 = scmp.ge.s32.totalorder %s24, 1
    %s26 = scalar_select %p25, 0, %s24
    %s27 = sadd.s32 1, %s18
    %s28 = scalar_select %p25, %s27, %s18
    %p29 = scmp.ge.s32.totalorder %s28, 2
    %s30 = scalar_select %p29, 0, %s28
    %s31 = ssub.s32 1, %s18
    %s32 = smul.u32 %s19, %s31
    %s33 = ssub.s32 1, %s30
    %s34 = smul.u32 %s26, %s33
    %s35 = ssub.s32 %s32, %s34
    %p36 = scmp.eq.s32.totalorder %s35, 0
    %s38 = sadd.s32 %s37, 1
    %s39 = scalar_select %p36, %s37, %s38
    %p42 = pneg %p36
    %p43 = scmp.eq.s32.totalorder %s11, 1
    %p44 = por %p42, %p43
    %p45 = scmp.ne.s32.totalorder %s37, %s40
    %p46 = scmp.eq.s32.totalorder %s11, 0
    %p47 = por %p45, %p46
    %p48 = scmp.ne.s32.totalorder %s37, %s40
    %p49 = scmp.eq.s32.totalorder %s16, 1
    %p50 = por %p48, %p49
    %p51 = scmp.ne.s32.totalorder %s40, %s41
    %p52 = scmp.eq.s32.totalorder %s16, 0
    %p53 = por %p51, %p52
    %p54 = scmp.ne.s32.totalorder %s40, %s41
    %p55 = scmp.eq.s32.totalorder %s17, 1
    %p56 = por %p54, %p55
    %p58 = scmp.ne.s32.totalorder %s41, %s57
    %p59 = scmp.eq.s32.totalorder %s17, 0
    %p60 = por %p58, %p59
    %s62 = sadd.s32 %s61, 1
    %p65 = scmp.eq.s32.totalorder %s11, 1
    %p66 = scmp.ne.s32.totalorder %s61, %s63
    %p67 = scmp.eq.s32.totalorder %s11, 0
    %p68 = por %p66, %p67
    %p69 = scmp.ne.s32.totalorder %s61, %s63
    %p70 = scmp.eq.s32.totalorder %s16, 1
    %p71 = por %p69, %p70
    %p72 = scmp.ne.s32.totalorder %s63, %s64
    %p73 = scmp.eq.s32.totalorder %s16, 0
    %p74 = por %p72, %p73
    %p75 = scmp.ne.s32.totalorder %s63, %s64
    %p76 = scmp.eq.s32.totalorder %s17, 1
    %p77 = por %p75, %p76
    %p79 = scmp.ne.s32.totalorder %s64, %s78
    %p80 = scmp.eq.s32.totalorder %s17, 0
    %p81 = por %p79, %p80
    %s83 = sadd.s32 %s82, 1
    %p86 = scmp.eq.s32.totalorder %s11, 1
    %p87 = scmp.ne.s32.totalorder %s82, %s84
    %p88 = scmp.eq.s32.totalorder %s11, 0
    %p89 = por %p87, %p88
    %p90 = scmp.ne.s32.totalorder %s82, %s84
    %p91 = scmp.eq.s32.totalorder %s16, 1
    %p92 = por %p90, %p91
    %p93 = scmp.ne.s32.totalorder %s84, %s85
    %p94 = scmp.eq.s32.totalorder %s16, 0
    %p95 = por %p93, %p94
    %p96 = scmp.ne.s32.totalorder %s84, %s85
    %p97 = scmp.eq.s32.totalorder %s17, 1
    %p98 = por %p96, %p97
    %p100 = scmp.ne.s32.totalorder %s85, %s99
    %p101 = scmp.eq.s32.totalorder %s17, 0
    %p102 = por %p100, %p101
    %s104 = sadd.s32 %s103, 1
    %p107 = scmp.eq.s32.totalorder %s11, 1
    %p108 = scmp.ne.s32.totalorder %s103, %s105
    %p109 = scmp.eq.s32.totalorder %s11, 0
    %p110 = por %p108, %p109
    %p111 = scmp.ne.s32.totalorder %s103, %s105
    %p112 = scmp.eq.s32.totalorder %s16, 1
    %p113 = por %p111, %p112
    %p114 = scmp.ne.s32.totalorder %s105, %s106
    %p115 = scmp.eq.s32.totalorder %s16, 0
    %p116 = por %p114, %p115
    %p117 = scmp.ne.s32.totalorder %s105, %s106
    %p118 = scmp.eq.s32.totalorder %s17, 1
    %p119 = por %p117, %p118
    %p121 = scmp.ne.s32.totalorder %s106, %s120
    %p122 = scmp.eq.s32.totalorder %s17, 0
    %p123 = por %p121, %p122
    %s125 = sadd.s32 %s124, 1
    %p128 = scmp.eq.s32.totalorder %s11, 1
    %p129 = scmp.ne.s32.totalorder %s124, %s126
    %p130 = scmp.eq.s32.totalorder %s11, 0
    %p131 = por %p129, %p130
    %p132 = scmp.ne.s32.totalorder %s124, %s126
    %p133 = scmp.eq.s32.totalorder %s16, 1
    %p134 = por %p132, %p133
    %p135 = scmp.ne.s32.totalorder %s126, %s127
    %p136 = scmp.eq.s32.totalorder %s16, 0
    %p137 = por %p135, %p136
    %p138 = scmp.ne.s32.totalorder %s126, %s127
    %p139 = scmp.eq.s32.totalorder %s17, 1
    %p140 = por %p138, %p139
    %p142 = scmp.ne.s32.totalorder %s127, %s141
    %p143 = scmp.eq.s32.totalorder %s17, 0
    %p144 = por %p142, %p143
    %s145 = ssub.s32 %s19, %s26
    %p146 = scmp.eq.s32.totalorder %s145, 0
    %s148 = sadd.s32 %s147, 1
    %s149 = scalar_select %p146, %s147, %s148
    %p152 = pneg %p146
    %p153 = scmp.eq.s32.totalorder %s11, 1
    %p154 = por %p152, %p153
    %p155 = scmp.ne.s32.totalorder %s147, %s150
    %p156 = scmp.eq.s32.totalorder %s11, 0
    %p157 = por %p155, %p156
    %p158 = scmp.ne.s32.totalorder %s147, %s150
    %p159 = scmp.eq.s32.totalorder %s16, 1
    %p160 = por %p158, %p159
    %p161 = scmp.ne.s32.totalorder %s150, %s151
    %p162 = scmp.eq.s32.totalorder %s16, 0
    %p163 = por %p161, %p162
    %p164 = scmp.ne.s32.totalorder %s150, %s151
    %p165 = scmp.eq.s32.totalorder %s17, 1
    %p166 = por %p164, %p165
    %p168 = scmp.ne.s32.totalorder %s151, %s167
    %p169 = scmp.eq.s32.totalorder %s17, 0
    %p170 = por %p168, %p169
    %p171 = scmp.le.s32.totalorder 1, %s11
    %p172 = scmp.lt.s32.totalorder %s11, 3
    %p173 = pnand %p171, %p172
    %p174 = pneg %p173
    // Predicated region
    $region9: #{_lambda_.4} parent=5 // pred_check
      _
    $region10: #{_lambda_.4} parent=5 // pred_check_branch
      %176 = sbr.rel (%p173) target = $region12
    $region11: #{_lambda_.4} parent=5 // pred_region
      %s177 = ssub.s32 %s11, 1
      // Predicated region
      $region13: #{_lambda_.4} parent=11 // pred_check
        %p178 = pneg %p74
      $region14: #{_lambda_.4} parent=11 // pred_check_branch
        %180 = sbr.rel (%p178) target = $region16
      $region15: #{_lambda_.4} parent=11 // pred_region
        _
      $region16: #{_lambda_.4} parent=11 // pred_fallthru
        _
      // Predicated region
      $region17: #{_lambda_.4} parent=11 // pred_check
        %p181 = pneg %p95
      $region18: #{_lambda_.4} parent=11 // pred_check_branch
        %183 = sbr.rel (%p181) target = $region20
      $region19: #{_lambda_.4} parent=11 // pred_region
        _
      $region20: #{_lambda_.4} parent=11 // pred_fallthru
        _
      // Predicated region
      $region21: #{_lambda_.4} parent=11 // pred_check
        %p184 = pneg %p116
      $region22: #{_lambda_.4} parent=11 // pred_check_branch
        %186 = sbr.rel (%p184) target = $region24
      $region23: #{_lambda_.4} parent=11 // pred_region
        _
      $region24: #{_lambda_.4} parent=11 // pred_fallthru
        _
      // Predicated region
      $region25: #{_lambda_.4} parent=11 // pred_check
        %p187 = pneg %p137
      $region26: #{_lambda_.4} parent=11 // pred_check_branch
        %189 = sbr.rel (%p187) target = $region28
      $region27: #{_lambda_.4} parent=11 // pred_region
        _
      $region28: #{_lambda_.4} parent=11 // pred_fallthru
        _
    $region12: #{_lambda_.4} parent=5 // pred_fallthru
      _
    %p190 = scmp.lt.s32.totalorder %s11, 2
    // Predicated region
    $region29: #{_lambda_.4} parent=5 // pred_check
      %p191 = pneg %p190
    $region30: #{_lambda_.4} parent=5 // pred_check_branch
      %193 = sbr.rel (%p191) target = $region32
    $region31: #{_lambda_.4} parent=5 // pred_region
      // Predicated region
      $region33: #{_lambda_.4} parent=31 // pred_check
        %p194 = pneg %p47
      $region34: #{_lambda_.4} parent=31 // pred_check_branch
        %196 = sbr.rel (%p194) target = $region36
      $region35: #{_lambda_.4} parent=31 // pred_region
        %s197 = ssub.s32 1, %s18
        %s198 = smul.u32 %s19, %s197
        %s199 = smul.u32 4, %s198
        %p200 = scmp.lt.s32.totalorder %s199, 3
        %s201 = scalar_select %p200, %s199, 3
        %s202 = smul.addr %s201, 8
        %s203 = smul.addr %s202, 4
        %s204 = scalar_lea.vmem %s0, %s203
        %s205 = ssub.s32 1, %s18
        %s206 = smul.u32 %s19, %s205
        %s207 = smul.u32 4, %s206
      $region36: #{_lambda_.4} parent=31 // pred_fallthru
        _
    $region32: #{_lambda_.4} parent=5 // pred_fallthru
      _
    %p208 = scmp.le.s32.totalorder 1, %s11
    %p209 = scmp.lt.s32.totalorder %s11, 3
    %p210 = pnand %p208, %p209
    %p211 = pneg %p210
    // Predicated region
    $region37: #{_lambda_.4} parent=5 // pred_check
      _
    $region38: #{_lambda_.4} parent=5 // pred_check_branch
      %213 = sbr.rel (%p210) target = $region40
    $region39: #{_lambda_.4} parent=5 // pred_region
      %s214 = ssub.s32 %s11, 1
      %s215 = ssub.s32 1, %s20
      %s216 = smul.u32 %s21, %s215
      %s217 = smul.u32 4, %s216
      %p218 = scmp.lt.s32.totalorder %s217, 3
      %s219 = scalar_select %p218, %s217, 3
      %s220 = smul.addr %s219, 8
      %s221 = smul.addr %s220, 4
      %s222 = scalar_lea.vmem %s0, %s221
      %p223 = pneg %p53
      %p224 = pneg %p50
      %p225 = pneg %p74
      %p226 = pneg %p71
      %p227 = pneg %p95
      %p228 = pneg %p92
      %p229 = pneg %p116
      %p230 = pneg %p113
      %p231 = pneg %p137
      %p232 = pneg %p134
      %p233 = pneg %p163
      %p234 = pneg %p160
      %s235 = smul.u32 4, %s21
      %p236 = scmp.lt.s32.totalorder %s235, 3
      %s237 = scalar_select %p236, %s235, 3
      %s238 = smul.addr %s237, 4
      %s239 = scalar_lea.vmem %s5, %s238
      %s240 = ssub.s32 1, %s20
      %s241 = smul.u32 %s21, %s240
      %s242 = smul.u32 4, %s241
      %p243 = scmp.lt.s32.totalorder %s242, 3
      %s244 = scalar_select %p243, %s242, 3
      %s245 = smul.addr %s244, 8
      %s246 = smul.addr %s245, 4
      %s247 = scalar_lea.vmem %s0, %s246
      %s248 = ssub.s32 1, %s20
      %s249 = smul.u32 %s21, %s248
      %s250 = smul.u32 4, %s249
      %s251 = smul.u32 4, %s21
      %p252 = scmp.lt.s32.totalorder %s251, 3
      %s253 = scalar_select %p252, %s251, 3
      %s254 = smul.addr %s253, 4
      %s255 = scalar_lea.vmem %s5, %s254
      %s256 = smul.u32 4, %s21
      %p258 = scmp.eq.s32.totalorder %s20, 0
      %p259 = scmp.eq.s32.totalorder %s21, 0
      %p260 = pnand %p258, %p259
      %p261 = pneg %p260
      // Predicated region
      $region41: #{_lambda_.4} parent=39 // pred_check
        _
      $region42: #{_lambda_.4} parent=39 // pred_check_branch
        %263 = sbr.rel (%p260) target = $region44
      $region43: #{_lambda_.4} parent=39 // pred_region
        %264 = vst [vmem:[#allocation3] sm:$0x1] 0.0
        %265 = vst [vmem:[#allocation4] sm:$0x1] 0.0
      $region44: #{_lambda_.4} parent=39 // pred_fallthru
        _
      // Predicated region
      $region45: #{_lambda_.4} parent=39 // pred_check
        %p266 = pneg %p258
      $region46: #{_lambda_.4} parent=39 // pred_check_branch
        %268 = sbr.rel (%p266) target = $region48
      $region47: #{_lambda_.4} parent=39 // pred_region
        %v269 = vld [vmem:[%s247] sm:$0xff]
        %v270 = vld [vmem:[%s247 + $0x8] sm:$0xff]
        %v271 = vld [vmem:[%s247 + $0x10] sm:$0xff]
        %v272 = vld [vmem:[%s247 + $0x18] sm:$0xff]
        %v273 = vld [vmem:[%s247 + $0x20] sm:$0xff]
        %v274 = vld [vmem:[%s247 + $0x28] sm:$0xff]
        %v275 = vld [vmem:[%s247 + $0x30] sm:$0xff]
        %v276 = vld [vmem:[%s247 + $0x38] sm:$0xff]
        %v277 = vld [vmem:[%s247 + $0x40] sm:$0xff]
        %v278 = vld [vmem:[%s247 + $0x48] sm:$0xff]
        %v279 = vld [vmem:[%s247 + $0x50] sm:$0xff]
        %v280 = vld [vmem:[%s247 + $0x58] sm:$0xff]
        %v281 = vld [vmem:[%s247 + $0x60] sm:$0xff]
        %v282 = vld [vmem:[%s247 + $0x68] sm:$0xff]
        %v283 = vld [vmem:[%s247 + $0x70] sm:$0xff]
        %v284 = vld [vmem:[%s247 + $0x78] sm:$0xff]
        %v285 = vld [vmem:[%s1] sm:$0xf]
        %v286 = vld [vmem:[%s1 + $0x4] sm:$0xf]
        %v287 = vld [vmem:[%s1 + $0x8] sm:$0xf]
        %v288 = vld [vmem:[%s1 + $0xc] sm:$0xf]
        %v289 = vld [vmem:[%s1 + $0x10] sm:$0xf]
        %v290 = vld [vmem:[%s1 + $0x14] sm:$0xf]
        %v291 = vld [vmem:[%s1 + $0x18] sm:$0xf]
        %v292 = vld [vmem:[%s1 + $0x1c] sm:$0xf]
        %v293 = vld [vmem:[%s1 + $0x20] sm:$0xf]
        %v294 = vld [vmem:[%s1 + $0x24] sm:$0xf]
        %v295 = vld [vmem:[%s1 + $0x28] sm:$0xf]
        %v296 = vld [vmem:[%s1 + $0x2c] sm:$0xf]
        %v297 = vld [vmem:[%s1 + $0x30] sm:$0xf]
        %v298 = vld [vmem:[%s1 + $0x34] sm:$0xf]
        %v299 = vld [vmem:[%s1 + $0x38] sm:$0xf]
        %v300 = vld [vmem:[%s1 + $0x3c] sm:$0xf]
        %v301 = vld [vmem:[%s1 + $0x40] sm:$0xf]
        %v302 = vld [vmem:[%s1 + $0x44] sm:$0xf]
        %v303 = vld [vmem:[%s1 + $0x48] sm:$0xf]
        %v304 = vld [vmem:[%s1 + $0x4c] sm:$0xf]
        %v305 = vld [vmem:[%s1 + $0x50] sm:$0xf]
        %v306 = vld [vmem:[%s1 + $0x54] sm:$0xf]
        %v307 = vld [vmem:[%s1 + $0x58] sm:$0xf]
        %v308 = vld [vmem:[%s1 + $0x5c] sm:$0xf]
        %v309 = vld [vmem:[%s1 + $0x60] sm:$0xf]
        %v310 = vld [vmem:[%s1 + $0x64] sm:$0xf]
        %v311 = vld [vmem:[%s1 + $0x68] sm:$0xf]
        %v312 = vld [vmem:[%s1 + $0x6c] sm:$0xf]
        %v313 = vld [vmem:[%s1 + $0x70] sm:$0xf]
        %v314 = vld [vmem:[%s1 + $0x74] sm:$0xf]
        %v315 = vld [vmem:[%s1 + $0x78] sm:$0xf]
        %v316 = vld [vmem:[%s1 + $0x7c] sm:$0xf]
        %v317 = vld [vmem:[%s1 + $0x80] sm:$0xf]
        %v318 = vld [vmem:[%s1 + $0x84] sm:$0xf]
        %v319 = vld [vmem:[%s1 + $0x88] sm:$0xf]
        %v320 = vld [vmem:[%s1 + $0x8c] sm:$0xf]
        %v321 = vld [vmem:[%s1 + $0x90] sm:$0xf]
        %v322 = vld [vmem:[%s1 + $0x94] sm:$0xf]
        %v323 = vld [vmem:[%s1 + $0x98] sm:$0xf]
        %v324 = vld [vmem:[%s1 + $0x9c] sm:$0xf]
        %v325 = vld [vmem:[%s1 + $0xa0] sm:$0xf]
        %v326 = vld [vmem:[%s1 + $0xa4] sm:$0xf]
        %v327 = vld [vmem:[%s1 + $0xa8] sm:$0xf]
        %v328 = vld [vmem:[%s1 + $0xac] sm:$0xf]
        %v329 = vld [vmem:[%s1 + $0xb0] sm:$0xf]
        %v330 = vld [vmem:[%s1 + $0xb4] sm:$0xf]
        %v331 = vld [vmem:[%s1 + $0xb8] sm:$0xf]
        %v332 = vld [vmem:[%s1 + $0xbc] sm:$0xf]
        %v333 = vld [vmem:[%s1 + $0xc0] sm:$0xf]
        %v334 = vld [vmem:[%s1 + $0xc4] sm:$0xf]
        %v335 = vld [vmem:[%s1 + $0xc8] sm:$0xf]
        %v336 = vld [vmem:[%s1 + $0xcc] sm:$0xf]
        %v337 = vld [vmem:[%s1 + $0xd0] sm:$0xf]
        %v338 = vld [vmem:[%s1 + $0xd4] sm:$0xf]
        %v339 = vld [vmem:[%s1 + $0xd8] sm:$0xf]
        %v340 = vld [vmem:[%s1 + $0xdc] sm:$0xf]
        %v341 = vld [vmem:[%s1 + $0xe0] sm:$0xf]
        %v342 = vld [vmem:[%s1 + $0xe4] sm:$0xf]
        %v343 = vld [vmem:[%s1 + $0xe8] sm:$0xf]
        %v344 = vld [vmem:[%s1 + $0xec] sm:$0xf]
        %v345 = vld [vmem:[%s1 + $0xf0] sm:$0xf]
        %v346 = vld [vmem:[%s1 + $0xf4] sm:$0xf]
        %v347 = vld [vmem:[%s1 + $0xf8] sm:$0xf]
        %v348 = vld [vmem:[%s1 + $0xfc] sm:$0xf]
        %v349 = vld [vmem:[%s1 + $0x100] sm:$0xf]
        %v350 = vld [vmem:[%s1 + $0x104] sm:$0xf]
        %v351 = vld [vmem:[%s1 + $0x108] sm:$0xf]
        %v352 = vld [vmem:[%s1 + $0x10c] sm:$0xf]
        %v353 = vld [vmem:[%s1 + $0x110] sm:$0xf]
        %v354 = vld [vmem:[%s1 + $0x114] sm:$0xf]
        %v355 = vld [vmem:[%s1 + $0x118] sm:$0xf]
        %v356 = vld [vmem:[%s1 + $0x11c] sm:$0xf]
        %v357 = vld [vmem:[%s1 + $0x120] sm:$0xf]
        %v358 = vld [vmem:[%s1 + $0x124] sm:$0xf]
        %v359 = vld [vmem:[%s1 + $0x128] sm:$0xf]
        %v360 = vld [vmem:[%s1 + $0x12c] sm:$0xf]
        %v361 = vld [vmem:[%s1 + $0x130] sm:$0xf]
        %v362 = vld [vmem:[%s1 + $0x134] sm:$0xf]
        %v363 = vld [vmem:[%s1 + $0x138] sm:$0xf]
        %v364 = vld [vmem:[%s1 + $0x13c] sm:$0xf]
        %v365 = vld [vmem:[%s1 + $0x140] sm:$0xf]
        %v366 = vld [vmem:[%s1 + $0x144] sm:$0xf]
        %v367 = vld [vmem:[%s1 + $0x148] sm:$0xf]
        %v368 = vld [vmem:[%s1 + $0x14c] sm:$0xf]
        %v369 = vld [vmem:[%s1 + $0x150] sm:$0xf]
        %v370 = vld [vmem:[%s1 + $0x154] sm:$0xf]
        %v371 = vld [vmem:[%s1 + $0x158] sm:$0xf]
        %v372 = vld [vmem:[%s1 + $0x15c] sm:$0xf]
        %v373 = vld [vmem:[%s1 + $0x160] sm:$0xf]
        %v374 = vld [vmem:[%s1 + $0x164] sm:$0xf]
        %v375 = vld [vmem:[%s1 + $0x168] sm:$0xf]
        %v376 = vld [vmem:[%s1 + $0x16c] sm:$0xf]
        %v377 = vld [vmem:[%s1 + $0x170] sm:$0xf]
        %v378 = vld [vmem:[%s1 + $0x174] sm:$0xf]
        %v379 = vld [vmem:[%s1 + $0x178] sm:$0xf]
        %v380 = vld [vmem:[%s1 + $0x17c] sm:$0xf]
        %v381 = vld [vmem:[%s1 + $0x180] sm:$0xf]
        %v382 = vld [vmem:[%s1 + $0x184] sm:$0xf]
        %v383 = vld [vmem:[%s1 + $0x188] sm:$0xf]
        %v384 = vld [vmem:[%s1 + $0x18c] sm:$0xf]
        %v385 = vld [vmem:[%s1 + $0x190] sm:$0xf]
        %v386 = vld [vmem:[%s1 + $0x194] sm:$0xf]
        %v387 = vld [vmem:[%s1 + $0x198] sm:$0xf]
        %v388 = vld [vmem:[%s1 + $0x19c] sm:$0xf]
        %v389 = vld [vmem:[%s1 + $0x1a0] sm:$0xf]
        %v390 = vld [vmem:[%s1 + $0x1a4] sm:$0xf]
        %v391 = vld [vmem:[%s1 + $0x1a8] sm:$0xf]
        %v392 = vld [vmem:[%s1 + $0x1ac] sm:$0xf]
        %v393 = vld [vmem:[%s1 + $0x1b0] sm:$0xf]
        %v394 = vld [vmem:[%s1 + $0x1b4] sm:$0xf]
        %v395 = vld [vmem:[%s1 + $0x1b8] sm:$0xf]
        %v396 = vld [vmem:[%s1 + $0x1bc] sm:$0xf]
        %v397 = vld [vmem:[%s1 + $0x1c0] sm:$0xf]
        %v398 = vld [vmem:[%s1 + $0x1c4] sm:$0xf]
        %v399 = vld [vmem:[%s1 + $0x1c8] sm:$0xf]
        %v400 = vld [vmem:[%s1 + $0x1cc] sm:$0xf]
        %v401 = vld [vmem:[%s1 + $0x1d0] sm:$0xf]
        %v402 = vld [vmem:[%s1 + $0x1d4] sm:$0xf]
        %v403 = vld [vmem:[%s1 + $0x1d8] sm:$0xf]
        %v404 = vld [vmem:[%s1 + $0x1dc] sm:$0xf]
        %v405 = vld [vmem:[%s1 + $0x1e0] sm:$0xf]
        %v406 = vld [vmem:[%s1 + $0x1e4] sm:$0xf]
        %v407 = vld [vmem:[%s1 + $0x1e8] sm:$0xf]
        %v408 = vld [vmem:[%s1 + $0x1ec] sm:$0xf]
        %v409 = vld [vmem:[%s1 + $0x1f0] sm:$0xf]
        %v410 = vld [vmem:[%s1 + $0x1f4] sm:$0xf]
        %v411 = vld [vmem:[%s1 + $0x1f8] sm:$0xf]
        %v412 = vld [vmem:[%s1 + $0x1fc] sm:$0xf]
        %v413 = vld [vmem:[%s2] sm:$0x1]
        %v415 = vlaneseq
        %v416 = vshrl.u32 %v415, 7
        %v417 = vsub.s32 0, %v416
        %v418 = vrot.slane %v413, %v417
        %v436 = vunpack.c.l.b16 %v269
        %v437 = vunpack.c.h.b16 %v269
        %v438 = vunpack.c.l.b16 %v270
        %v439 = vunpack.c.h.b16 %v270
        %v440 = vunpack.c.l.b16 %v271
        %v441 = vunpack.c.h.b16 %v271
        %v442 = vunpack.c.l.b16 %v272
        %v443 = vunpack.c.h.b16 %v272
        %v444 = vunpack.c.l.b16 %v273
        %v445 = vunpack.c.h.b16 %v273
        %v446 = vunpack.c.l.b16 %v274
        %v447 = vunpack.c.h.b16 %v274
        %v448 = vunpack.c.l.b16 %v275
        %v449 = vunpack.c.h.b16 %v275
        %v450 = vunpack.c.l.b16 %v276
        %v451 = vunpack.c.h.b16 %v276
        %v452 = vunpack.c.l.b16 %v277
        %v453 = vunpack.c.h.b16 %v277
        %v454 = vunpack.c.l.b16 %v278
        %v455 = vunpack.c.h.b16 %v278
        %v456 = vunpack.c.l.b16 %v279
        %v457 = vunpack.c.h.b16 %v279
        %v458 = vunpack.c.l.b16 %v280
        %v459 = vunpack.c.h.b16 %v280
        %v460 = vunpack.c.l.b16 %v281
        %v461 = vunpack.c.h.b16 %v281
        %v462 = vunpack.c.l.b16 %v282
        %v463 = vunpack.c.h.b16 %v282
        %v464 = vunpack.c.l.b16 %v283
        %v465 = vunpack.c.h.b16 %v283
        %v466 = vunpack.c.l.b16 %v284
        %v467 = vunpack.c.h.b16 %v284
        %v468 = vpack.c.b16 %v444, %v436
        %v469 = vpack.c.b16 %v445, %v437
        %v470 = vpack.c.b16 %v446, %v438
        %v471 = vpack.c.b16 %v447, %v439
        %v472 = vpack.c.b16 %v448, %v440
        %v473 = vpack.c.b16 %v449, %v441
        %v474 = vpack.c.b16 %v450, %v442
        %v475 = vpack.c.b16 %v451, %v443
        %v476 = vpack.c.b16 %v460, %v452
        %v477 = vpack.c.b16 %v461, %v453
        %v478 = vpack.c.b16 %v462, %v454
        %v479 = vpack.c.b16 %v463, %v455
        %v480 = vpack.c.b16 %v464, %v456
        %v481 = vpack.c.b16 %v465, %v457
        %v482 = vpack.c.b16 %v466, %v458
        %v483 = vpack.c.b16 %v467, %v459
        %v628 = vunpack.c.l.b16 %v285
        %v629 = vunpack.c.l.b16 %v286
        %v630 = vunpack.c.l.b16 %v287
        %v631 = vunpack.c.l.b16 %v288
        %v632 = vunpack.c.l.b16 %v289
        %v633 = vunpack.c.l.b16 %v290
        %v634 = vunpack.c.l.b16 %v291
        %v635 = vunpack.c.l.b16 %v292
        %v636 = vunpack.c.l.b16 %v293
        %v637 = vunpack.c.l.b16 %v294
        %v638 = vunpack.c.l.b16 %v295
        %v639 = vunpack.c.l.b16 %v296
        %v640 = vunpack.c.l.b16 %v297
        %v641 = vunpack.c.l.b16 %v298
        %v642 = vunpack.c.l.b16 %v299
        %v643 = vunpack.c.l.b16 %v300
        %v644 = vunpack.c.l.b16 %v301
        %v645 = vunpack.c.l.b16 %v302
        %v646 = vunpack.c.l.b16 %v303
        %v647 = vunpack.c.l.b16 %v304
        %v648 = vunpack.c.l.b16 %v305
        %v649 = vunpack.c.l.b16 %v306
        %v650 = vunpack.c.l.b16 %v307
        %v651 = vunpack.c.l.b16 %v308
        %v652 = vunpack.c.l.b16 %v309
        %v653 = vunpack.c.l.b16 %v310
        %v654 = vunpack.c.l.b16 %v311
        %v655 = vunpack.c.l.b16 %v312
        %v656 = vunpack.c.l.b16 %v313
        %v657 = vunpack.c.l.b16 %v314
        %v658 = vunpack.c.l.b16 %v315
        %v659 = vunpack.c.l.b16 %v316
        %v660 = vunpack.c.l.b16 %v317
        %v661 = vunpack.c.l.b16 %v318
        %v662 = vunpack.c.l.b16 %v319
        %v663 = vunpack.c.l.b16 %v320
        %v664 = vunpack.c.l.b16 %v321
        %v665 = vunpack.c.l.b16 %v322
        %v666 = vunpack.c.l.b16 %v323
        %v667 = vunpack.c.l.b16 %v324
        %v668 = vunpack.c.l.b16 %v325
        %v669 = vunpack.c.l.b16 %v326
        %v670 = vunpack.c.l.b16 %v327
        %v671 = vunpack.c.l.b16 %v328
        %v672 = vunpack.c.l.b16 %v329
        %v673 = vunpack.c.l.b16 %v330
        %v674 = vunpack.c.l.b16 %v331
        %v675 = vunpack.c.l.b16 %v332
        %v676 = vunpack.c.l.b16 %v333
        %v677 = vunpack.c.l.b16 %v334
        %v678 = vunpack.c.l.b16 %v335
        %v679 = vunpack.c.l.b16 %v336
        %v680 = vunpack.c.l.b16 %v337
        %v681 = vunpack.c.l.b16 %v338
        %v682 = vunpack.c.l.b16 %v339
        %v683 = vunpack.c.l.b16 %v340
        %v684 = vunpack.c.l.b16 %v341
        %v685 = vunpack.c.l.b16 %v342
        %v686 = vunpack.c.l.b16 %v343
        %v687 = vunpack.c.l.b16 %v344
        %v688 = vunpack.c.l.b16 %v345
        %v689 = vunpack.c.l.b16 %v346
        %v690 = vunpack.c.l.b16 %v347
        %v691 = vunpack.c.l.b16 %v348
        %v692 = vunpack.c.l.b16 %v349
        %v693 = vunpack.c.l.b16 %v350
        %v694 = vunpack.c.l.b16 %v351
        %v695 = vunpack.c.l.b16 %v352
        %v696 = vunpack.c.l.b16 %v353
        %v697 = vunpack.c.l.b16 %v354
        %v698 = vunpack.c.l.b16 %v355
        %v699 = vunpack.c.l.b16 %v356
        %v700 = vunpack.c.l.b16 %v357
        %v701 = vunpack.c.l.b16 %v358
        %v702 = vunpack.c.l.b16 %v359
        %v703 = vunpack.c.l.b16 %v360
        %v704 = vunpack.c.l.b16 %v361
        %v705 = vunpack.c.l.b16 %v362
        %v706 = vunpack.c.l.b16 %v363
        %v707 = vunpack.c.l.b16 %v364
        %v708 = vunpack.c.l.b16 %v365
        %v709 = vunpack.c.l.b16 %v366
        %v710 = vunpack.c.l.b16 %v367
        %v711 = vunpack.c.l.b16 %v368
        %v712 = vunpack.c.l.b16 %v369
        %v713 = vunpack.c.l.b16 %v370
        %v714 = vunpack.c.l.b16 %v371
        %v715 = vunpack.c.l.b16 %v372
        %v716 = vunpack.c.l.b16 %v373
        %v717 = vunpack.c.l.b16 %v374
        %v718 = vunpack.c.l.b16 %v375
        %v719 = vunpack.c.l.b16 %v376
        %v720 = vunpack.c.l.b16 %v377
        %v721 = vunpack.c.l.b16 %v378
        %v722 = vunpack.c.l.b16 %v379
        %v723 = vunpack.c.l.b16 %v380
        %v724 = vunpack.c.l.b16 %v381
        %v725 = vunpack.c.l.b16 %v382
        %v726 = vunpack.c.l.b16 %v383
        %v727 = vunpack.c.l.b16 %v384
        %v728 = vunpack.c.l.b16 %v385
        %v729 = vunpack.c.l.b16 %v386
        %v730 = vunpack.c.l.b16 %v387
        %v731 = vunpack.c.l.b16 %v388
        %v732 = vunpack.c.l.b16 %v389
        %v733 = vunpack.c.l.b16 %v390
        %v734 = vunpack.c.l.b16 %v391
        %v735 = vunpack.c.l.b16 %v392
        %v736 = vunpack.c.l.b16 %v393
        %v737 = vunpack.c.l.b16 %v394
        %v738 = vunpack.c.l.b16 %v395
        %v739 = vunpack.c.l.b16 %v396
        %v740 = vunpack.c.l.b16 %v397
        %v741 = vunpack.c.l.b16 %v398
        %v742 = vunpack.c.l.b16 %v399
        %v743 = vunpack.c.l.b16 %v400
        %v744 = vunpack.c.l.b16 %v401
        %v745 = vunpack.c.l.b16 %v402
        %v746 = vunpack.c.l.b16 %v403
        %v747 = vunpack.c.l.b16 %v404
        %v748 = vunpack.c.l.b16 %v405
        %v749 = vunpack.c.l.b16 %v406
        %v750 = vunpack.c.l.b16 %v407
        %v751 = vunpack.c.l.b16 %v408
        %v752 = vunpack.c.l.b16 %v409
        %v753 = vunpack.c.l.b16 %v410
        %v754 = vunpack.c.l.b16 %v411
        %v755 = vunpack.c.l.b16 %v412
        %v756 = vpack.c.b16 %v629, %v628
        %v757 = vpack.c.b16 %v631, %v630
        %v758 = vpack.c.b16 %v633, %v632
        %v759 = vpack.c.b16 %v635, %v634
        %v760 = vpack.c.b16 %v637, %v636
        %v761 = vpack.c.b16 %v639, %v638
        %v762 = vpack.c.b16 %v641, %v640
        %v763 = vpack.c.b16 %v643, %v642
        %v764 = vpack.c.b16 %v645, %v644
        %v765 = vpack.c.b16 %v647, %v646
        %v766 = vpack.c.b16 %v649, %v648
        %v767 = vpack.c.b16 %v651, %v650
        %v768 = vpack.c.b16 %v653, %v652
        %v769 = vpack.c.b16 %v655, %v654
        %v770 = vpack.c.b16 %v657, %v656
        %v771 = vpack.c.b16 %v659, %v658
        %v772 = vpack.c.b16 %v661, %v660
        %v773 = vpack.c.b16 %v663, %v662
        %v774 = vpack.c.b16 %v665, %v664
        %v775 = vpack.c.b16 %v667, %v666
        %v776 = vpack.c.b16 %v669, %v668
        %v777 = vpack.c.b16 %v671, %v670
        %v778 = vpack.c.b16 %v673, %v672
        %v779 = vpack.c.b16 %v675, %v674
        %v780 = vpack.c.b16 %v677, %v676
        %v781 = vpack.c.b16 %v679, %v678
        %v782 = vpack.c.b16 %v681, %v680
        %v783 = vpack.c.b16 %v683, %v682
        %v784 = vpack.c.b16 %v685, %v684
        %v785 = vpack.c.b16 %v687, %v686
        %v786 = vpack.c.b16 %v689, %v688
        %v787 = vpack.c.b16 %v691, %v690
        %v788 = vpack.c.b16 %v693, %v692
        %v789 = vpack.c.b16 %v695, %v694
        %v790 = vpack.c.b16 %v697, %v696
        %v791 = vpack.c.b16 %v699, %v698
        %v792 = vpack.c.b16 %v701, %v700
        %v793 = vpack.c.b16 %v703, %v702
        %v794 = vpack.c.b16 %v705, %v704
        %v795 = vpack.c.b16 %v707, %v706
        %v796 = vpack.c.b16 %v709, %v708
        %v797 = vpack.c.b16 %v711, %v710
        %v798 = vpack.c.b16 %v713, %v712
        %v799 = vpack.c.b16 %v715, %v714
        %v800 = vpack.c.b16 %v717, %v716
        %v801 = vpack.c.b16 %v719, %v718
        %v802 = vpack.c.b16 %v721, %v720
        %v803 = vpack.c.b16 %v723, %v722
        %v804 = vpack.c.b16 %v725, %v724
        %v805 = vpack.c.b16 %v727, %v726
        %v806 = vpack.c.b16 %v729, %v728
        %v807 = vpack.c.b16 %v731, %v730
        %v808 = vpack.c.b16 %v733, %v732
        %v809 = vpack.c.b16 %v735, %v734
        %v810 = vpack.c.b16 %v737, %v736
        %v811 = vpack.c.b16 %v739, %v738
        %v812 = vpack.c.b16 %v741, %v740
        %v813 = vpack.c.b16 %v743, %v742
        %v814 = vpack.c.b16 %v745, %v744
        %v815 = vpack.c.b16 %v747, %v746
        %v816 = vpack.c.b16 %v749, %v748
        %v817 = vpack.c.b16 %v751, %v750
        %v818 = vpack.c.b16 %v753, %v752
        %v819 = vpack.c.b16 %v755, %v754
        %884 = vmatprep.subr.bf16.mxu0 0
        %885 = vmatpush1.bf16.msra.mxu0 %v763
        %886 = vmatprep.subr.bf16.mxu0 0
        %887 = vmatpush1.bf16.msra.mxu0 %v762
        %888 = vmatprep.subr.bf16.mxu0 0
        %889 = vmatpush1.bf16.msra.mxu0 %v761
        %890 = vmatprep.subr.bf16.mxu0 0
        %891 = vmatpush1.bf16.msra.mxu0 %v760
        %892 = vmatprep.subr.bf16.mxu0 0
        %893 = vmatpush1.bf16.msra.mxu0 %v759
        %894 = vmatprep.subr.bf16.mxu0 0
        %895 = vmatpush1.bf16.msra.mxu0 %v758
        %896 = vmatprep.subr.bf16.mxu0 0
        %897 = vmatpush1.bf16.msra.mxu0 %v757
        %898 = vmatprep.subr.bf16.mxu0 0
        %899 = vmatpush1.bf16.msra.mxu0 %v756
        %900 = vmatprep.subr.bf16.mxu0 0
        %901 = vmatpush2.bf16.msra.mxu0 %v771
        %902 = vmatprep.subr.bf16.mxu0 0
        %903 = vmatpush2.bf16.msra.mxu0 %v770
        %904 = vmatprep.subr.bf16.mxu0 0
        %905 = vmatpush2.bf16.msra.mxu0 %v769
        %906 = vmatprep.subr.bf16.mxu0 0
        %907 = vmatpush2.bf16.msra.mxu0 %v768
        %908 = vmatprep.subr.bf16.mxu0 0
        %909 = vmatpush2.bf16.msra.mxu0 %v767
        %910 = vmatprep.subr.bf16.mxu0 0
        %911 = vmatpush2.bf16.msra.mxu0 %v766
        %912 = vmatprep.subr.bf16.mxu0 0
        %913 = vmatpush2.bf16.msra.mxu0 %v765
        %914 = vmatprep.subr.bf16.mxu0 0
        %915 = vmatpush2.bf16.msra.mxu0 %v764
        %916 = vmatprep.mubr.bf16.mxu0 %v469
        %917 = vmatmul.mubr.bf16.gmra.mxu0 %v468
        %v918 = vpop.f32.mrf.mxu0
        %v919 = vadd.f32 %v418, %v918
        %v920 = vpop.f32.mrf.mxu0
        %v921 = vpop.f32.mrf.mxu0
        %v922 = vadd.f32 %v418, %v921
        %v923 = vpop.f32.mrf.mxu0
        %924 = vmatprep.mubr.bf16.mxu0 %v477
        %925 = vmatmul.mubr.bf16.gmra.mxu0 %v476
        %v926 = vpop.f32.mrf.mxu0
        %v927 = vadd.f32 %v418, %v926
        %v928 = vpop.f32.mrf.mxu0
        %v929 = vpop.f32.mrf.mxu0
        %v930 = vadd.f32 %v418, %v929
        %v931 = vpop.f32.mrf.mxu0
        %932 = vdwg.mxu0
        %933 = vmatprep.subr.bf16.mxu0 0
        %934 = vmatpush1.bf16.msra.mxu0 %v779
        %935 = vmatprep.subr.bf16.mxu0 0
        %936 = vmatpush1.bf16.msra.mxu0 %v778
        %937 = vmatprep.subr.bf16.mxu0 0
        %938 = vmatpush1.bf16.msra.mxu0 %v777
        %939 = vmatprep.subr.bf16.mxu0 0
        %940 = vmatpush1.bf16.msra.mxu0 %v776
        %941 = vmatprep.subr.bf16.mxu0 0
        %942 = vmatpush1.bf16.msra.mxu0 %v775
        %943 = vmatprep.subr.bf16.mxu0 0
        %944 = vmatpush1.bf16.msra.mxu0 %v774
        %945 = vmatprep.subr.bf16.mxu0 0
        %946 = vmatpush1.bf16.msra.mxu0 %v773
        %947 = vmatprep.subr.bf16.mxu0 0
        %948 = vmatpush1.bf16.msra.mxu0 %v772
        %949 = vmatprep.subr.bf16.mxu0 0
        %950 = vmatpush2.bf16.msra.mxu0 %v787
        %951 = vmatprep.subr.bf16.mxu0 0
        %952 = vmatpush2.bf16.msra.mxu0 %v786
        %953 = vmatprep.subr.bf16.mxu0 0
        %954 = vmatpush2.bf16.msra.mxu0 %v785
        %955 = vmatprep.subr.bf16.mxu0 0
        %956 = vmatpush2.bf16.msra.mxu0 %v784
        %957 = vmatprep.subr.bf16.mxu0 0
        %958 = vmatpush2.bf16.msra.mxu0 %v783
        %959 = vmatprep.subr.bf16.mxu0 0
        %960 = vmatpush2.bf16.msra.mxu0 %v782
        %961 = vmatprep.subr.bf16.mxu0 0
        %962 = vmatpush2.bf16.msra.mxu0 %v781
        %963 = vmatprep.subr.bf16.mxu0 0
        %964 = vmatpush2.bf16.msra.mxu0 %v780
        %965 = vmatprep.mubr.bf16.mxu0 %v471
        %966 = vmatmul.mubr.bf16.gmra.mxu0 %v470
        %v967 = vpop.f32.mrf.mxu0
        %v968 = vadd.f32 %v919, %v967
        %v969 = vpop.f32.mrf.mxu0
        %v970 = vpop.f32.mrf.mxu0
        %v971 = vadd.f32 %v922, %v970
        %v972 = vpop.f32.mrf.mxu0
        %973 = vmatprep.mubr.bf16.mxu0 %v479
        %974 = vmatmul.mubr.bf16.gmra.mxu0 %v478
        %v975 = vpop.f32.mrf.mxu0
        %v976 = vadd.f32 %v927, %v975
        %v977 = vpop.f32.mrf.mxu0
        %v978 = vpop.f32.mrf.mxu0
        %v979 = vadd.f32 %v930, %v978
        %v980 = vpop.f32.mrf.mxu0
        %981 = vdwg.mxu0
        %982 = vmatprep.subr.bf16.mxu0 0
        %983 = vmatpush1.bf16.msra.mxu0 %v795
        %984 = vmatprep.subr.bf16.mxu0 0
        %985 = vmatpush1.bf16.msra.mxu0 %v794
        %986 = vmatprep.subr.bf16.mxu0 0
        %987 = vmatpush1.bf16.msra.mxu0 %v793
        %988 = vmatprep.subr.bf16.mxu0 0
        %989 = vmatpush1.bf16.msra.mxu0 %v792
        %990 = vmatprep.subr.bf16.mxu0 0
        %991 = vmatpush1.bf16.msra.mxu0 %v791
        %992 = vmatprep.subr.bf16.mxu0 0
        %993 = vmatpush1.bf16.msra.mxu0 %v790
        %994 = vmatprep.subr.bf16.mxu0 0
        %995 = vmatpush1.bf16.msra.mxu0 %v789
        %996 = vmatprep.subr.bf16.mxu0 0
        %997 = vmatpush1.bf16.msra.mxu0 %v788
        %998 = vmatprep.subr.bf16.mxu0 0
        %999 = vmatpush2.bf16.msra.mxu0 %v803
        %1000 = vmatprep.subr.bf16.mxu0 0
        %1001 = vmatpush2.bf16.msra.mxu0 %v802
        %1002 = vmatprep.subr.bf16.mxu0 0
        %1003 = vmatpush2.bf16.msra.mxu0 %v801
        %1004 = vmatprep.subr.bf16.mxu0 0
        %1005 = vmatpush2.bf16.msra.mxu0 %v800
        %1006 = vmatprep.subr.bf16.mxu0 0
        %1007 = vmatpush2.bf16.msra.mxu0 %v799
        %1008 = vmatprep.subr.bf16.mxu0 0
        %1009 = vmatpush2.bf16.msra.mxu0 %v798
        %1010 = vmatprep.subr.bf16.mxu0 0
        %1011 = vmatpush2.bf16.msra.mxu0 %v797
        %1012 = vmatprep.subr.bf16.mxu0 0
        %1013 = vmatpush2.bf16.msra.mxu0 %v796
        %1014 = vmatprep.mubr.bf16.mxu0 %v473
        %1015 = vmatmul.mubr.bf16.gmra.mxu0 %v472
        %v1016 = vpop.f32.mrf.mxu0
        %v1017 = vadd.f32 %v968, %v1016
        %v1018 = vpop.f32.mrf.mxu0
        %v1019 = vpop.f32.mrf.mxu0
        %v1020 = vadd.f32 %v971, %v1019
        %v1021 = vpop.f32.mrf.mxu0
        %1022 = vmatprep.mubr.bf16.mxu0 %v481
        %1023 = vmatmul.mubr.bf16.gmra.mxu0 %v480
        %v1024 = vpop.f32.mrf.mxu0
        %v1025 = vadd.f32 %v976, %v1024
        %v1026 = vpop.f32.mrf.mxu0
        %v1027 = vpop.f32.mrf.mxu0
        %v1028 = vadd.f32 %v979, %v1027
        %v1029 = vpop.f32.mrf.mxu0
        %1030 = vdwg.mxu0
        %1031 = vmatprep.subr.bf16.mxu0 0
        %1032 = vmatpush1.bf16.msra.mxu0 %v811
        %1033 = vmatprep.subr.bf16.mxu0 0
        %1034 = vmatpush1.bf16.msra.mxu0 %v810
        %1035 = vmatprep.subr.bf16.mxu0 0
        %1036 = vmatpush1.bf16.msra.mxu0 %v809
        %1037 = vmatprep.subr.bf16.mxu0 0
        %1038 = vmatpush1.bf16.msra.mxu0 %v808
        %1039 = vmatprep.subr.bf16.mxu0 0
        %1040 = vmatpush1.bf16.msra.mxu0 %v807
        %1041 = vmatprep.subr.bf16.mxu0 0
        %1042 = vmatpush1.bf16.msra.mxu0 %v806
        %1043 = vmatprep.subr.bf16.mxu0 0
        %1044 = vmatpush1.bf16.msra.mxu0 %v805
        %1045 = vmatprep.subr.bf16.mxu0 0
        %1046 = vmatpush1.bf16.msra.mxu0 %v804
        %1047 = vmatprep.subr.bf16.mxu0 0
        %1048 = vmatpush2.bf16.msra.mxu0 %v819
        %1049 = vmatprep.subr.bf16.mxu0 0
        %1050 = vmatpush2.bf16.msra.mxu0 %v818
        %1051 = vmatprep.subr.bf16.mxu0 0
        %1052 = vmatpush2.bf16.msra.mxu0 %v817
        %1053 = vmatprep.subr.bf16.mxu0 0
        %1054 = vmatpush2.bf16.msra.mxu0 %v816
        %1055 = vmatprep.subr.bf16.mxu0 0
        %1056 = vmatpush2.bf16.msra.mxu0 %v815
        %1057 = vmatprep.subr.bf16.mxu0 0
        %1058 = vmatpush2.bf16.msra.mxu0 %v814
        %1059 = vmatprep.subr.bf16.mxu0 0
        %1060 = vmatpush2.bf16.msra.mxu0 %v813
        %1061 = vmatprep.subr.bf16.mxu0 0
        %1062 = vmatpush2.bf16.msra.mxu0 %v812
        %1063 = vmatprep.mubr.bf16.mxu0 %v475
        %1064 = vmatmul.mubr.bf16.gmra.mxu0 %v474
        %v1065 = vpop.f32.mrf.mxu0
        %v1066 = vadd.f32 %v1017, %v1065
        %v1067 = vpop.f32.mrf.mxu0
        %v1068 = vpop.f32.mrf.mxu0
        %v1069 = vadd.f32 %v1020, %v1068
        %v1070 = vpop.f32.mrf.mxu0
        %1071 = vmatprep.mubr.bf16.mxu0 %v483
        %1072 = vmatmul.mubr.bf16.gmra.mxu0 %v482
        %v1073 = vpop.f32.mrf.mxu0
        %v1074 = vadd.f32 %v1025, %v1073
        %v1075 = vpop.f32.mrf.mxu0
        %v1076 = vpop.f32.mrf.mxu0
        %v1077 = vadd.f32 %v1028, %v1076
        %v1078 = vpop.f32.mrf.mxu0
        %1079 = vdwg.mxu0
        %s1080 = smul.u32 %s21, 32
        %s1081 = scalar_lea.vmem [#allocation2], %s1080
        %1082 = vst [vmem:[%s1081] sm:$0xff] %v1066
        %1083 = vst [vmem:[%s1081 + $0x8] sm:$0xff] %v1069
        %1084 = vst [vmem:[%s1081 + $0x10] sm:$0xff] %v1074
        %1085 = vst [vmem:[%s1081 + $0x18] sm:$0xff] %v1077
        %v1086 = vlaneseq
        %v1087 = vshrl.u32 %v1086, 7
        %v1088 = vadd.s32 %v1087, 8
        %v1089 = vadd.s32 %v1087, 16
        %v1090 = vadd.s32 %v1087, 24
        %v1091 = vstv %s1080
        %v1092 = vadd.s32 %v1087, %v1091
        %v1093 = vadd.s32 %v1088, %v1091
        %v1094 = vadd.s32 %v1089, %v1091
        %v1095 = vadd.s32 %v1090, %v1091
        %vm1096 = vcmp.lt.s32.totalorder %v1092, 32
        %vm1097 = vcmp.lt.s32.totalorder %v1093, 32
        %vm1098 = vcmp.lt.s32.totalorder %v1094, 32
        %vm1099 = vcmp.lt.s32.totalorder %v1095, 32
        %v1100 = vsel %vm1096, 1, 0
        %v1101 = vsel %vm1097, 1, 0
        %v1102 = vsel %vm1098, 1, 0
        %v1103 = vsel %vm1099, 1, 0
        %vm1104 = vcmp.eq.s32.totalorder %v1100, 1
        %vm1105 = vcmp.eq.s32.totalorder %v1101, 1
        %vm1106 = vcmp.eq.s32.totalorder %v1102, 1
        %vm1107 = vcmp.eq.s32.totalorder %v1103, 1
        %v1108 = vsel %vm1104, %v1066, 0.0
        %v1109 = vsel %vm1105, %v1069, 0.0
        %v1110 = vsel %vm1106, %v1074, 0.0
        %v1111 = vsel %vm1107, %v1077, 0.0
        %v1112 = vld [vmem:[#allocation3] sm:$0x1]
        %v1113 = vadd.f32 %v1108, %v1109
        %v1114 = vadd.f32 %v1113, %v1110
        %v1115 = vadd.f32 %v1114, %v1111
        %v1116 = vrot.slane %v1115, 4
        %v1117 = vadd.f32 %v1115, %v1116
        %v1118 = vrot.slane %v1117, 2
        %v1119 = vadd.f32 %v1117, %v1118
        %v1120 = vrot.slane %v1119, 1
        %v1121 = vadd.f32 %v1119, %v1120
        %v1122 = vadd.f32 %v1112, %v1121
        %1123 = vst [vmem:[#allocation3] sm:$0x1] %v1122
        %v1124 = vld [vmem:[#allocation4] sm:$0x1]
        %v1125 = vmul.f32 %v1108, %v1066
        %v1126 = vmul.f32 %v1109, %v1069
        %v1127 = vmul.f32 %v1110, %v1074
        %v1128 = vmul.f32 %v1111, %v1077
        %v1129 = vadd.f32 %v1125, %v1126
        %v1130 = vadd.f32 %v1129, %v1127
        %v1131 = vadd.f32 %v1130, %v1128
        %v1132 = vrot.slane %v1131, 4
        %v1133 = vadd.f32 %v1131, %v1132
        %v1134 = vrot.slane %v1133, 2
        %v1135 = vadd.f32 %v1133, %v1134
        %v1136 = vrot.slane %v1135, 1
        %v1137 = vadd.f32 %v1135, %v1136
        %v1138 = vadd.f32 %v1124, %v1137
        %1139 = vst [vmem:[#allocation4] sm:$0x1] %v1138
        %v1140 = vpack.c.bf16 %v1069, %v1066
        %v1141 = vpack.c.bf16 %v1077, %v1074
        %v1144 = vunpack.c.l.b16 %v1140
        %v1145 = vunpack.c.h.b16 %v1140
        %v1146 = vunpack.c.l.b16 %v1141
        %v1147 = vunpack.c.h.b16 %v1141
        %v1148 = vpack.c.b16 %v1144, %v1144
        %v1149 = vpack.c.b16 %v1145, %v1145
        %v1150 = vpack.c.b16 %v1146, %v1146
        %v1151 = vpack.c.b16 %v1147, %v1147
        %1156 = vst [vmem:[%s255] sm:$0xf] %v1148
        %1157 = vst [vmem:[%s255 + $0x4] sm:$0xf] %v1149
        %1158 = vst [vmem:[%s255 + $0x8] sm:$0xf] %v1150
        %1159 = vst [vmem:[%s255 + $0xc] sm:$0xf] %v1151
      $region48: #{_lambda_.4} parent=39 // pred_fallthru
        _
      %p1160 = scmp.eq.s32.totalorder %s20, 1
      // Predicated region
      $region49: #{_lambda_.4} parent=39 // pred_check
        %p1161 = pneg %p1160
      $region50: #{_lambda_.4} parent=39 // pred_check_branch
        %1163 = sbr.rel (%p1161) target = $region52
      $region51: #{_lambda_.4} parent=39 // pred_region
        %s1164 = smul.u32 %s21, 32
        %s1165 = scalar_lea.vmem [#allocation2], %s1164
        %v1166 = vld [vmem:[%s1165] sm:$0xff]
        %v1167 = vld [vmem:[%s1165 + $0x8] sm:$0xff]
        %v1168 = vld [vmem:[%s1165 + $0x10] sm:$0xff]
        %v1169 = vld [vmem:[%s1165 + $0x18] sm:$0xff]
        %v1170 = vld [vmem:[#allocation3] sm:$0x1]
        %v1171 = vmul.f32 %v1170, 0.03125
        %v1172 = vld [vmem:[#allocation4] sm:$0x1]
        %v1173 = vmul.f32 %v1172, 0.03125
        %v1174 = vmul.f32 %v1171, %v1171
        %v1175 = vsub.f32 %v1173, %v1174
        %v1176 = vmax.f32 %v1175, 0.0
        %v1178 = vlaneseq
        %v1179 = vshrl.u32 %v1178, 7
        %v1180 = vsub.s32 0, %v1179
        %v1181 = vrot.slane %v1171, %v1180
        %v1183 = vsub.f32 %v1166, %v1181
        %v1184 = vsub.f32 %v1167, %v1181
        %v1185 = vsub.f32 %v1168, %v1181
        %v1186 = vsub.f32 %v1169, %v1181
        %v1187 = vadd.f32 %v1176, 1e-05
        %v1188 = vrsqrt.pop %v1187
        %v1190 = vlaneseq
        %v1191 = vshrl.u32 %v1190, 7
        %v1192 = vsub.s32 0, %v1191
        %v1193 = vrot.slane %v1188, %v1192
        %v1195 = vmul.f32 %v1183, %v1193
        %v1196 = vmul.f32 %v1184, %v1193
        %v1197 = vmul.f32 %v1185, %v1193
        %v1198 = vmul.f32 %v1186, %v1193
        %v1199 = vld [vmem:[%s3] sm:$0x1]
        %v1201 = vlaneseq
        %v1202 = vshrl.u32 %v1201, 7
        %v1203 = vsub.s32 0, %v1202
        %v1204 = vrot.slane %v1199, %v1203
        %v1206 = vmul.f32 %v1195, %v1204
        %v1207 = vmul.f32 %v1196, %v1204
        %v1208 = vmul.f32 %v1197, %v1204
        %v1209 = vmul.f32 %v1198, %v1204
        %v1210 = vld [vmem:[%s4] sm:$0x1]
        %v1212 = vlaneseq
        %v1213 = vshrl.u32 %v1212, 7
        %v1214 = vsub.s32 0, %v1213
        %v1215 = vrot.slane %v1210, %v1214
        %v1217 = vadd.f32 %v1206, %v1215
        %v1218 = vadd.f32 %v1207, %v1215
        %v1219 = vadd.f32 %v1208, %v1215
        %v1220 = vadd.f32 %v1209, %v1215
        %vm1221 = vcmp.gt.f32.partialorder %v1217, 0.0
        %vm1222 = vcmp.gt.f32.partialorder %v1218, 0.0
        %vm1223 = vcmp.gt.f32.partialorder %v1219, 0.0
        %vm1224 = vcmp.gt.f32.partialorder %v1220, 0.0
        %v1225 = vmul.f32 %v1217, 0.2
        %v1226 = vmul.f32 %v1218, 0.2
        %v1227 = vmul.f32 %v1219, 0.2
        %v1228 = vmul.f32 %v1220, 0.2
        %v1229 = vsel %vm1221, %v1217, %v1225
        %v1230 = vsel %vm1222, %v1218, %v1226
        %v1231 = vsel %vm1223, %v1219, %v1227
        %v1232 = vsel %vm1224, %v1220, %v1228
        %v1233 = vpack.c.bf16 %v1230, %v1229
        %v1234 = vpack.c.bf16 %v1232, %v1231
        %v1237 = vunpack.c.l.b16 %v1233
        %v1238 = vunpack.c.h.b16 %v1233
        %v1239 = vunpack.c.l.b16 %v1234
        %v1240 = vunpack.c.h.b16 %v1234
        %v1241 = vpack.c.b16 %v1237, %v1237
        %v1242 = vpack.c.b16 %v1238, %v1238
        %v1243 = vpack.c.b16 %v1239, %v1239
        %v1244 = vpack.c.b16 %v1240, %v1240
        %1249 = vst [vmem:[%s255] sm:$0xf] %v1241
        %1250 = vst [vmem:[%s255 + $0x4] sm:$0xf] %v1242
        %1251 = vst [vmem:[%s255 + $0x8] sm:$0xf] %v1243
        %1252 = vst [vmem:[%s255 + $0xc] sm:$0xf] %v1244
      $region52: #{_lambda_.4} parent=39 // pred_fallthru
        _
      %s1253 = smul.u32 4, %s21
      %p1254 = scmp.lt.s32.totalorder %s1253, 3
      %s1255 = scalar_select %p1254, %s1253, 3
      %s1256 = smul.addr %s1255, 4
      %s1257 = scalar_lea.vmem %s5, %s1256
      // Predicated region
      $region53: #{_lambda_.4} parent=39 // pred_check
        %p1258 = pneg %p160
      $region54: #{_lambda_.4} parent=39 // pred_check_branch
        %1260 = sbr.rel (%p1258) target = $region56
      $region55: #{_lambda_.4} parent=39 // pred_region
        %s1261 = smul.u32 4, %s21
      $region56: #{_lambda_.4} parent=39 // pred_fallthru
        _
      // Predicated region
      $region57: #{_lambda_.4} parent=39 // pred_check
        %p1262 = pneg %p160
      $region58: #{_lambda_.4} parent=39 // pred_check_branch
        %1264 = sbr.rel (%p1262) target = $region60
      $region59: #{_lambda_.4} parent=39 // pred_region
        %s1265 = smul.u32 4, %s21
        %p1266 = scmp.lt.s32.totalorder %s1265, 3
        %s1267 = scalar_select %p1266, %s1265, 3
        %s1268 = smul.addr %s1267, 4
        %s1269 = scalar_lea.vmem %s5, %s1268
      $region60: #{_lambda_.4} parent=39 // pred_fallthru
        _
    $region40: #{_lambda_.4} parent=5 // pred_fallthru
      _
    %p1270 = scmp.le.s32.totalorder 2, %s11
    // Predicated region
    $region61: #{_lambda_.4} parent=5 // pred_check
      %p1271 = pneg %p1270
    $region62: #{_lambda_.4} parent=5 // pred_check_branch
      %1273 = sbr.rel (%p1271) target = $region64
    $region63: #{_lambda_.4} parent=5 // pred_region
      %s1274 = ssub.s32 %s11, 2
    $region64: #{_lambda_.4} parent=5 // pred_fallthru
      _
  $region6: #{_lambda_.4} parent=0 // loop_footer
    %s15 = sadd.s32 1, %s11
  $region7: #{_lambda_.4} parent=0 // loop_footer_branch
    %10 = sbr.rel target = $region3
  $region8: #{_lambda_.4} parent=0 // loop_exit
    _

// kernel: _lambda_.5
$region0: #{_lambda_.5}
  #allocation0 [shape = 'u32[]', space=smem, size = 0x4, offset = 0x4, fixed_abs, tag = 'smem constant byte address 0x4 - core index']
  #allocation1 [shape = 'u32[144,128]{1,0:T(1,128)}', space=vmem, size = 0x12000, scoped, tag = 'internal scratch']
  #allocation2 [shape = 'f32[1,1]{1,0:T(1,128)S(1)}', space=vmem, size = 0x200, scoped, tag = 'scoped memory for _lambda_.5']
  %s0 = inlined_call_operand.vmem [shape: bf16[2,2048], index: 0, kind: input, shape index: {}]
  %s1 = inlined_call_operand.vmem [shape: bf16[2048,64], index: 1, kind: input, shape index: {}]
  %s2 = inlined_call_operand.vmem [shape: f32[1,64], index: 2, kind: input, shape index: {}]
  %s3 = inlined_call_operand.vmem [shape: f32[1,64], index: 3, kind: input, shape index: {}]
  %s4 = inlined_call_operand.vmem [shape: f32[1,64], index: 4, kind: input, shape index: {}]
  %s5 = inlined_call_operand.vmem [shape: f32[64,1], index: 5, kind: input, shape index: {}]
  %s6 = inlined_call_operand.<no memory space> [shape: f32[1,1], index: 6, kind: input, shape index: {}]
  %s7 = inlined_call_operand.vmem [shape: f32[2,1], index: 7, kind: output, shape index: {}]
  %s8 = sld [smem:[#allocation0]]
  $region38: #{_lambda_.5} parent=0
    _
  %s10 = ssub.s32 1, %s8
  %s11 = scalar_select 0, %s10, %s8
  %v12 = vstv %s6
  %13 = vst [vmem:[#allocation2] sm:$0x1] %v12
  // Predicated region
  $region2: #{_lambda_.5} parent=0 // pred_check
    _
  $region3: #{_lambda_.5} parent=0 // pred_check_branch
    %15 = sbr.rel (0) target = $region5
  $region4: #{_lambda_.5} parent=0 // pred_region
    _
  $region5: #{_lambda_.5} parent=0 // pred_fallthru
    _
  // Predicated region
  $region6: #{_lambda_.5} parent=0 // pred_check
    _
  $region7: #{_lambda_.5} parent=0 // pred_check_branch
    %17 = sbr.rel (0) target = $region9
  $region8: #{_lambda_.5} parent=0 // pred_region
    _
  $region9: #{_lambda_.5} parent=0 // pred_fallthru
    _
  // Predicated region
  $region10: #{_lambda_.5} parent=0 // pred_check
    _
  $region11: #{_lambda_.5} parent=0 // pred_check_branch
    %19 = sbr.rel (0) target = $region13
  $region12: #{_lambda_.5} parent=0 // pred_region
    _
  $region13: #{_lambda_.5} parent=0 // pred_fallthru
    _
  // Predicated region
  $region14: #{_lambda_.5} parent=0 // pred_check
    _
  $region15: #{_lambda_.5} parent=0 // pred_check_branch
    %21 = sbr.rel (0) target = $region17
  $region16: #{_lambda_.5} parent=0 // pred_region
    _
  $region17: #{_lambda_.5} parent=0 // pred_fallthru
    _
  // Predicated region
  $region18: #{_lambda_.5} parent=0 // pred_check
    _
  $region19: #{_lambda_.5} parent=0 // pred_check_branch
    %23 = sbr.rel (0) target = $region21
  $region20: #{_lambda_.5} parent=0 // pred_region
    _
  $region21: #{_lambda_.5} parent=0 // pred_fallthru
    _
  // Predicated region
  $region22: #{_lambda_.5} parent=0 // pred_check
    _
  $region23: #{_lambda_.5} parent=0 // pred_check_branch
    %25 = sbr.rel (0) target = $region25
  $region24: #{_lambda_.5} parent=0 // pred_region
    _
  $region25: #{_lambda_.5} parent=0 // pred_fallthru
    _
  // Predicated region
  $region26: #{_lambda_.5} parent=0 // pred_check
    _
  $region27: #{_lambda_.5} parent=0 // pred_check_branch
    %27 = sbr.rel (0) target = $region29
  $region28: #{_lambda_.5} parent=0 // pred_region
    _
  $region29: #{_lambda_.5} parent=0 // pred_fallthru
    _
  %v29 = vld [vmem:[%s0] sm:$0xff]
  %v30 = vld [vmem:[%s0 + $0x8] sm:$0xff]
  %v31 = vld [vmem:[%s1] sm:$0xf]
  %v32 = vld [vmem:[%s1 + $0x4] sm:$0xf]
  %v33 = vld [vmem:[%s1 + $0x8] sm:$0xf]
  %v34 = vld [vmem:[%s1 + $0xc] sm:$0xf]
  %v35 = vld [vmem:[%s1 + $0x10] sm:$0xf]
  %v36 = vld [vmem:[%s1 + $0x14] sm:$0xf]
  %v37 = vld [vmem:[%s1 + $0x18] sm:$0xf]
  %v38 = vld [vmem:[%s1 + $0x1c] sm:$0xf]
  %v39 = vld [vmem:[%s1 + $0x20] sm:$0xf]
  %v40 = vld [vmem:[%s1 + $0x24] sm:$0xf]
  %v41 = vld [vmem:[%s1 + $0x28] sm:$0xf]
  %v42 = vld [vmem:[%s1 + $0x2c] sm:$0xf]
  %v43 = vld [vmem:[%s1 + $0x30] sm:$0xf]
  %v44 = vld [vmem:[%s1 + $0x34] sm:$0xf]
  %v45 = vld [vmem:[%s1 + $0x38] sm:$0xf]
  %v46 = vld [vmem:[%s1 + $0x3c] sm:$0xf]
  %v47 = vld [vmem:[%s1 + $0x40] sm:$0xf]
  %v48 = vld [vmem:[%s1 + $0x44] sm:$0xf]
  %v49 = vld [vmem:[%s1 + $0x48] sm:$0xf]
  %v50 = vld [vmem:[%s1 + $0x4c] sm:$0xf]
  %v51 = vld [vmem:[%s1 + $0x50] sm:$0xf]
  %v52 = vld [vmem:[%s1 + $0x54] sm:$0xf]
  %v53 = vld [vmem:[%s1 + $0x58] sm:$0xf]
  %v54 = vld [vmem:[%s1 + $0x5c] sm:$0xf]
  %v55 = vld [vmem:[%s1 + $0x60] sm:$0xf]
  %v56 = vld [vmem:[%s1 + $0x64] sm:$0xf]
  %v57 = vld [vmem:[%s1 + $0x68] sm:$0xf]
  %v58 = vld [vmem:[%s1 + $0x6c] sm:$0xf]
  %v59 = vld [vmem:[%s1 + $0x70] sm:$0xf]
  %v60 = vld [vmem:[%s1 + $0x74] sm:$0xf]
  %v61 = vld [vmem:[%s1 + $0x78] sm:$0xf]
  %v62 = vld [vmem:[%s1 + $0x7c] sm:$0xf]
  %v63 = vld [vmem:[%s1 + $0x80] sm:$0xf]
  %v64 = vld [vmem:[%s1 + $0x84] sm:$0xf]
  %v65 = vld [vmem:[%s1 + $0x88] sm:$0xf]
  %v66 = vld [vmem:[%s1 + $0x8c] sm:$0xf]
  %v67 = vld [vmem:[%s1 + $0x90] sm:$0xf]
  %v68 = vld [vmem:[%s1 + $0x94] sm:$0xf]
  %v69 = vld [vmem:[%s1 + $0x98] sm:$0xf]
  %v70 = vld [vmem:[%s1 + $0x9c] sm:$0xf]
  %v71 = vld [vmem:[%s1 + $0xa0] sm:$0xf]
  %v72 = vld [vmem:[%s1 + $0xa4] sm:$0xf]
  %v73 = vld [vmem:[%s1 + $0xa8] sm:$0xf]
  %v74 = vld [vmem:[%s1 + $0xac] sm:$0xf]
  %v75 = vld [vmem:[%s1 + $0xb0] sm:$0xf]
  %v76 = vld [vmem:[%s1 + $0xb4] sm:$0xf]
  %v77 = vld [vmem:[%s1 + $0xb8] sm:$0xf]
  %v78 = vld [vmem:[%s1 + $0xbc] sm:$0xf]
  %v79 = vld [vmem:[%s1 + $0xc0] sm:$0xf]
  %v80 = vld [vmem:[%s1 + $0xc4] sm:$0xf]
  %v81 = vld [vmem:[%s1 + $0xc8] sm:$0xf]
  %v82 = vld [vmem:[%s1 + $0xcc] sm:$0xf]
  %v83 = vld [vmem:[%s1 + $0xd0] sm:$0xf]
  %v84 = vld [vmem:[%s1 + $0xd4] sm:$0xf]
  %v85 = vld [vmem:[%s1 + $0xd8] sm:$0xf]
  %v86 = vld [vmem:[%s1 + $0xdc] sm:$0xf]
  %v87 = vld [vmem:[%s1 + $0xe0] sm:$0xf]
  %v88 = vld [vmem:[%s1 + $0xe4] sm:$0xf]
  %v89 = vld [vmem:[%s1 + $0xe8] sm:$0xf]
  %v90 = vld [vmem:[%s1 + $0xec] sm:$0xf]
  %v91 = vld [vmem:[%s1 + $0xf0] sm:$0xf]
  %v92 = vld [vmem:[%s1 + $0xf4] sm:$0xf]
  %v93 = vld [vmem:[%s1 + $0xf8] sm:$0xf]
  %v94 = vld [vmem:[%s1 + $0xfc] sm:$0xf]
  %v95 = vld [vmem:[%s1 + $0x100] sm:$0xf]
  %v96 = vld [vmem:[%s1 + $0x104] sm:$0xf]
  %v97 = vld [vmem:[%s1 + $0x108] sm:$0xf]
  %v98 = vld [vmem:[%s1 + $0x10c] sm:$0xf]
  %v99 = vld [vmem:[%s1 + $0x110] sm:$0xf]
  %v100 = vld [vmem:[%s1 + $0x114] sm:$0xf]
  %v101 = vld [vmem:[%s1 + $0x118] sm:$0xf]
  %v102 = vld [vmem:[%s1 + $0x11c] sm:$0xf]
  %v103 = vld [vmem:[%s1 + $0x120] sm:$0xf]
  %v104 = vld [vmem:[%s1 + $0x124] sm:$0xf]
  %v105 = vld [vmem:[%s1 + $0x128] sm:$0xf]
  %v106 = vld [vmem:[%s1 + $0x12c] sm:$0xf]
  %v107 = vld [vmem:[%s1 + $0x130] sm:$0xf]
  %v108 = vld [vmem:[%s1 + $0x134] sm:$0xf]
  %v109 = vld [vmem:[%s1 + $0x138] sm:$0xf]
  %v110 = vld [vmem:[%s1 + $0x13c] sm:$0xf]
  %v111 = vld [vmem:[%s1 + $0x140] sm:$0xf]
  %v112 = vld [vmem:[%s1 + $0x144] sm:$0xf]
  %v113 = vld [vmem:[%s1 + $0x148] sm:$0xf]
  %v114 = vld [vmem:[%s1 + $0x14c] sm:$0xf]
  %v115 = vld [vmem:[%s1 + $0x150] sm:$0xf]
  %v116 = vld [vmem:[%s1 + $0x154] sm:$0xf]
  %v117 = vld [vmem:[%s1 + $0x158] sm:$0xf]
  %v118 = vld [vmem:[%s1 + $0x15c] sm:$0xf]
  %v119 = vld [vmem:[%s1 + $0x160] sm:$0xf]
  %v120 = vld [vmem:[%s1 + $0x164] sm:$0xf]
  %v121 = vld [vmem:[%s1 + $0x168] sm:$0xf]
  %v122 = vld [vmem:[%s1 + $0x16c] sm:$0xf]
  %v123 = vld [vmem:[%s1 + $0x170] sm:$0xf]
  %v124 = vld [vmem:[%s1 + $0x174] sm:$0xf]
  %v125 = vld [vmem:[%s1 + $0x178] sm:$0xf]
  %v126 = vld [vmem:[%s1 + $0x17c] sm:$0xf]
  %v127 = vld [vmem:[%s1 + $0x180] sm:$0xf]
  %v128 = vld [vmem:[%s1 + $0x184] sm:$0xf]
  %v129 = vld [vmem:[%s1 + $0x188] sm:$0xf]
  %v130 = vld [vmem:[%s1 + $0x18c] sm:$0xf]
  %v131 = vld [vmem:[%s1 + $0x190] sm:$0xf]
  %v132 = vld [vmem:[%s1 + $0x194] sm:$0xf]
  %v133 = vld [vmem:[%s1 + $0x198] sm:$0xf]
  %v134 = vld [vmem:[%s1 + $0x19c] sm:$0xf]
  %v135 = vld [vmem:[%s1 + $0x1a0] sm:$0xf]
  %v136 = vld [vmem:[%s1 + $0x1a4] sm:$0xf]
  %v137 = vld [vmem:[%s1 + $0x1a8] sm:$0xf]
  %v138 = vld [vmem:[%s1 + $0x1ac] sm:$0xf]
  %v139 = vld [vmem:[%s1 + $0x1b0] sm:$0xf]
  %v140 = vld [vmem:[%s1 + $0x1b4] sm:$0xf]
  %v141 = vld [vmem:[%s1 + $0x1b8] sm:$0xf]
  %v142 = vld [vmem:[%s1 + $0x1bc] sm:$0xf]
  %v143 = vld [vmem:[%s1 + $0x1c0] sm:$0xf]
  %v144 = vld [vmem:[%s1 + $0x1c4] sm:$0xf]
  %v145 = vld [vmem:[%s1 + $0x1c8] sm:$0xf]
  %v146 = vld [vmem:[%s1 + $0x1cc] sm:$0xf]
  %v147 = vld [vmem:[%s1 + $0x1d0] sm:$0xf]
  %v148 = vld [vmem:[%s1 + $0x1d4] sm:$0xf]
  %v149 = vld [vmem:[%s1 + $0x1d8] sm:$0xf]
  %v150 = vld [vmem:[%s1 + $0x1dc] sm:$0xf]
  %v151 = vld [vmem:[%s1 + $0x1e0] sm:$0xf]
  %v152 = vld [vmem:[%s1 + $0x1e4] sm:$0xf]
  %v153 = vld [vmem:[%s1 + $0x1e8] sm:$0xf]
  %v154 = vld [vmem:[%s1 + $0x1ec] sm:$0xf]
  %v155 = vld [vmem:[%s1 + $0x1f0] sm:$0xf]
  %v156 = vld [vmem:[%s1 + $0x1f4] sm:$0xf]
  %v157 = vld [vmem:[%s1 + $0x1f8] sm:$0xf]
  %v158 = vld [vmem:[%s1 + $0x1fc] sm:$0xf]
  %v159 = vld [vmem:[%s1 + $0x200] sm:$0xf]
  %v160 = vld [vmem:[%s1 + $0x204] sm:$0xf]
  %v161 = vld [vmem:[%s1 + $0x208] sm:$0xf]
  %v162 = vld [vmem:[%s1 + $0x20c] sm:$0xf]
  %v163 = vld [vmem:[%s1 + $0x210] sm:$0xf]
  %v164 = vld [vmem:[%s1 + $0x214] sm:$0xf]
  %v165 = vld [vmem:[%s1 + $0x218] sm:$0xf]
  %v166 = vld [vmem:[%s1 + $0x21c] sm:$0xf]
  %v167 = vld [vmem:[%s1 + $0x220] sm:$0xf]
  %v168 = vld [vmem:[%s1 + $0x224] sm:$0xf]
  %v169 = vld [vmem:[%s1 + $0x228] sm:$0xf]
  %v170 = vld [vmem:[%s1 + $0x22c] sm:$0xf]
  %v171 = vld [vmem:[%s1 + $0x230] sm:$0xf]
  %v172 = vld [vmem:[%s1 + $0x234] sm:$0xf]
  %v173 = vld [vmem:[%s1 + $0x238] sm:$0xf]
  %v174 = vld [vmem:[%s1 + $0x23c] sm:$0xf]
  %v175 = vld [vmem:[%s1 + $0x240] sm:$0xf]
  %v176 = vld [vmem:[%s1 + $0x244] sm:$0xf]
  %v177 = vld [vmem:[%s1 + $0x248] sm:$0xf]
  %v178 = vld [vmem:[%s1 + $0x24c] sm:$0xf]
  %v179 = vld [vmem:[%s1 + $0x250] sm:$0xf]
  %v180 = vld [vmem:[%s1 + $0x254] sm:$0xf]
  %v181 = vld [vmem:[%s1 + $0x258] sm:$0xf]
  %v182 = vld [vmem:[%s1 + $0x25c] sm:$0xf]
  %v183 = vld [vmem:[%s1 + $0x260] sm:$0xf]
  %v184 = vld [vmem:[%s1 + $0x264] sm:$0xf]
  %v185 = vld [vmem:[%s1 + $0x268] sm:$0xf]
  %v186 = vld [vmem:[%s1 + $0x26c] sm:$0xf]
  %v187 = vld [vmem:[%s1 + $0x270] sm:$0xf]
  %v188 = vld [vmem:[%s1 + $0x274] sm:$0xf]
  %v189 = vld [vmem:[%s1 + $0x278] sm:$0xf]
  %v190 = vld [vmem:[%s1 + $0x27c] sm:$0xf]
  %v191 = vld [vmem:[%s1 + $0x280] sm:$0xf]
  %v192 = vld [vmem:[%s1 + $0x284] sm:$0xf]
  %v193 = vld [vmem:[%s1 + $0x288] sm:$0xf]
  %v194 = vld [vmem:[%s1 + $0x28c] sm:$0xf]
  %v195 = vld [vmem:[%s1 + $0x290] sm:$0xf]
  %v196 = vld [vmem:[%s1 + $0x294] sm:$0xf]
  %v197 = vld [vmem:[%s1 + $0x298] sm:$0xf]
  %v198 = vld [vmem:[%s1 + $0x29c] sm:$0xf]
  %v199 = vld [vmem:[%s1 + $0x2a0] sm:$0xf]
  %v200 = vld [vmem:[%s1 + $0x2a4] sm:$0xf]
  %v201 = vld [vmem:[%s1 + $0x2a8] sm:$0xf]
  %v202 = vld [vmem:[%s1 + $0x2ac] sm:$0xf]
  %v203 = vld [vmem:[%s1 + $0x2b0] sm:$0xf]
  %v204 = vld [vmem:[%s1 + $0x2b4] sm:$0xf]
  %v205 = vld [vmem:[%s1 + $0x2b8] sm:$0xf]
  %v206 = vld [vmem:[%s1 + $0x2bc] sm:$0xf]
  %v207 = vld [vmem:[%s1 + $0x2c0] sm:$0xf]
  %v208 = vld [vmem:[%s1 + $0x2c4] sm:$0xf]
  %v209 = vld [vmem:[%s1 + $0x2c8] sm:$0xf]
  %v210 = vld [vmem:[%s1 + $0x2cc] sm:$0xf]
  %v211 = vld [vmem:[%s1 + $0x2d0] sm:$0xf]
  %v212 = vld [vmem:[%s1 + $0x2d4] sm:$0xf]
  %v213 = vld [vmem:[%s1 + $0x2d8] sm:$0xf]
  %v214 = vld [vmem:[%s1 + $0x2dc] sm:$0xf]
  %v215 = vld [vmem:[%s1 + $0x2e0] sm:$0xf]
  %v216 = vld [vmem:[%s1 + $0x2e4] sm:$0xf]
  %v217 = vld [vmem:[%s1 + $0x2e8] sm:$0xf]
  %v218 = vld [vmem:[%s1 + $0x2ec] sm:$0xf]
  %v219 = vld [vmem:[%s1 + $0x2f0] sm:$0xf]
  %v220 = vld [vmem:[%s1 + $0x2f4] sm:$0xf]
  %v221 = vld [vmem:[%s1 + $0x2f8] sm:$0xf]
  %v222 = vld [vmem:[%s1 + $0x2fc] sm:$0xf]
  %v223 = vld [vmem:[%s1 + $0x300] sm:$0xf]
  %v224 = vld [vmem:[%s1 + $0x304] sm:$0xf]
  %v225 = vld [vmem:[%s1 + $0x308] sm:$0xf]
  %v226 = vld [vmem:[%s1 + $0x30c] sm:$0xf]
  %v227 = vld [vmem:[%s1 + $0x310] sm:$0xf]
  %v228 = vld [vmem:[%s1 + $0x314] sm:$0xf]
  %v229 = vld [vmem:[%s1 + $0x318] sm:$0xf]
  %v230 = vld [vmem:[%s1 + $0x31c] sm:$0xf]
  %v231 = vld [vmem:[%s1 + $0x320] sm:$0xf]
  %v232 = vld [vmem:[%s1 + $0x324] sm:$0xf]
  %v233 = vld [vmem:[%s1 + $0x328] sm:$0xf]
  %v234 = vld [vmem:[%s1 + $0x32c] sm:$0xf]
  %v235 = vld [vmem:[%s1 + $0x330] sm:$0xf]
  %v236 = vld [vmem:[%s1 + $0x334] sm:$0xf]
  %v237 = vld [vmem:[%s1 + $0x338] sm:$0xf]
  %v238 = vld [vmem:[%s1 + $0x33c] sm:$0xf]
  %v239 = vld [vmem:[%s1 + $0x340] sm:$0xf]
  %v240 = vld [vmem:[%s1 + $0x344] sm:$0xf]
  %v241 = vld [vmem:[%s1 + $0x348] sm:$0xf]
  %v242 = vld [vmem:[%s1 + $0x34c] sm:$0xf]
  %v243 = vld [vmem:[%s1 + $0x350] sm:$0xf]
  %v244 = vld [vmem:[%s1 + $0x354] sm:$0xf]
  %v245 = vld [vmem:[%s1 + $0x358] sm:$0xf]
  %v246 = vld [vmem:[%s1 + $0x35c] sm:$0xf]
  %v247 = vld [vmem:[%s1 + $0x360] sm:$0xf]
  %v248 = vld [vmem:[%s1 + $0x364] sm:$0xf]
  %v249 = vld [vmem:[%s1 + $0x368] sm:$0xf]
  %v250 = vld [vmem:[%s1 + $0x36c] sm:$0xf]
  %v251 = vld [vmem:[%s1 + $0x370] sm:$0xf]
  %v252 = vld [vmem:[%s1 + $0x374] sm:$0xf]
  %v253 = vld [vmem:[%s1 + $0x378] sm:$0xf]
  %v254 = vld [vmem:[%s1 + $0x37c] sm:$0xf]
  %v255 = vld [vmem:[%s1 + $0x380] sm:$0xf]
  %v256 = vld [vmem:[%s1 + $0x384] sm:$0xf]
  %v257 = vld [vmem:[%s1 + $0x388] sm:$0xf]
  %v258 = vld [vmem:[%s1 + $0x38c] sm:$0xf]
  %v259 = vld [vmem:[%s1 + $0x390] sm:$0xf]
  %v260 = vld [vmem:[%s1 + $0x394] sm:$0xf]
  %v261 = vld [vmem:[%s1 + $0x398] sm:$0xf]
  %v262 = vld [vmem:[%s1 + $0x39c] sm:$0xf]
  %v263 = vld [vmem:[%s1 + $0x3a0] sm:$0xf]
  %v264 = vld [vmem:[%s1 + $0x3a4] sm:$0xf]
  %v265 = vld [vmem:[%s1 + $0x3a8] sm:$0xf]
  %v266 = vld [vmem:[%s1 + $0x3ac] sm:$0xf]
  %v267 = vld [vmem:[%s1 + $0x3b0] sm:$0xf]
  %v268 = vld [vmem:[%s1 + $0x3b4] sm:$0xf]
  %v269 = vld [vmem:[%s1 + $0x3b8] sm:$0xf]
  %v270 = vld [vmem:[%s1 + $0x3bc] sm:$0xf]
  %v271 = vld [vmem:[%s1 + $0x3c0] sm:$0xf]
  %v272 = vld [vmem:[%s1 + $0x3c4] sm:$0xf]
  %v273 = vld [vmem:[%s1 + $0x3c8] sm:$0xf]
  %v274 = vld [vmem:[%s1 + $0x3cc] sm:$0xf]
  %v275 = vld [vmem:[%s1 + $0x3d0] sm:$0xf]
  %v276 = vld [vmem:[%s1 + $0x3d4] sm:$0xf]
  %v277 = vld [vmem:[%s1 + $0x3d8] sm:$0xf]
  %v278 = vld [vmem:[%s1 + $0x3dc] sm:$0xf]
  %v279 = vld [vmem:[%s1 + $0x3e0] sm:$0xf]
  %v280 = vld [vmem:[%s1 + $0x3e4] sm:$0xf]
  %v281 = vld [vmem:[%s1 + $0x3e8] sm:$0xf]
  %v282 = vld [vmem:[%s1 + $0x3ec] sm:$0xf]
  %v283 = vld [vmem:[%s1 + $0x3f0] sm:$0xf]
  %v284 = vld [vmem:[%s1 + $0x3f4] sm:$0xf]
  %v285 = vld [vmem:[%s1 + $0x3f8] sm:$0xf]
  %v286 = vld [vmem:[%s1 + $0x3fc] sm:$0xf]
  %v287 = vld [vmem:[%s2] sm:$0x1]
  %v289 = vlaneseq
  %v290 = vshrl.u32 %v289, 7
  %v291 = vsub.s32 0, %v290
  %v292 = vrot.slane %v287, %v291
  %v296 = vcombine.high %v29, %v29
  %v298 = vunpack.c.l.s4 1966171168
  %v299 = vunpack.c.0.s8 %v298
  %v300 = vlaneseq
  %v301 = vshrl.u32 %v300, 7
  %v302 = vsub.s32 %v299, %v301
  %v303 = vrot.slane %v29, %v302
  %v305 = vunpack.c.l.s4 1966171168
  %v306 = vunpack.c.0.s8 %v305
  %v307 = vlaneseq
  %v308 = vshrl.u32 %v307, 7
  %v309 = vsub.s32 %v306, %v308
  %v310 = vrot.slane %v296, %v309
  %v311 = vcombine.high %v303, %v303
  %v312 = vcombine.high %v310, %v310
  %v314 = vunpack.c.l.s4 1966171168
  %v315 = vunpack.c.0.s8 %v314
  %v316 = vlaneseq
  %v317 = vshrl.u32 %v316, 7
  %v318 = vsub.s32 %v315, %v317
  %v319 = vrot.slane %v303, %v318
  %v321 = vunpack.c.l.s4 1966171168
  %v322 = vunpack.c.0.s8 %v321
  %v323 = vlaneseq
  %v324 = vshrl.u32 %v323, 7
  %v325 = vsub.s32 %v322, %v324
  %v326 = vrot.slane %v310, %v325
  %v328 = vunpack.c.l.s4 1966171168
  %v329 = vunpack.c.0.s8 %v328
  %v330 = vlaneseq
  %v331 = vshrl.u32 %v330, 7
  %v332 = vsub.s32 %v329, %v331
  %v333 = vrot.slane %v311, %v332
  %v335 = vunpack.c.l.s4 1966171168
  %v336 = vunpack.c.0.s8 %v335
  %v337 = vlaneseq
  %v338 = vshrl.u32 %v337, 7
  %v339 = vsub.s32 %v336, %v338
  %v340 = vrot.slane %v312, %v339
  %v341 = vcombine.high %v319, %v319
  %v342 = vcombine.high %v326, %v326
  %v343 = vcombine.high %v333, %v333
  %v344 = vcombine.high %v340, %v340
  %v345 = vcombine.high %v30, %v30
  %v347 = vunpack.c.l.s4 1966171168
  %v348 = vunpack.c.0.s8 %v347
  %v349 = vlaneseq
  %v350 = vshrl.u32 %v349, 7
  %v351 = vsub.s32 %v348, %v350
  %v352 = vrot.slane %v30, %v351
  %v354 = vunpack.c.l.s4 1966171168
  %v355 = vunpack.c.0.s8 %v354
  %v356 = vlaneseq
  %v357 = vshrl.u32 %v356, 7
  %v358 = vsub.s32 %v355, %v357
  %v359 = vrot.slane %v345, %v358
  %v360 = vcombine.high %v352, %v352
  %v361 = vcombine.high %v359, %v359
  %v363 = vunpack.c.l.s4 1966171168
  %v364 = vunpack.c.0.s8 %v363
  %v365 = vlaneseq
  %v366 = vshrl.u32 %v365, 7
  %v367 = vsub.s32 %v364, %v366
  %v368 = vrot.slane %v352, %v367
  %v370 = vunpack.c.l.s4 1966171168
  %v371 = vunpack.c.0.s8 %v370
  %v372 = vlaneseq
  %v373 = vshrl.u32 %v372, 7
  %v374 = vsub.s32 %v371, %v373
  %v375 = vrot.slane %v359, %v374
  %v377 = vunpack.c.l.s4 1966171168
  %v378 = vunpack.c.0.s8 %v377
  %v379 = vlaneseq
  %v380 = vshrl.u32 %v379, 7
  %v381 = vsub.s32 %v378, %v380
  %v382 = vrot.slane %v360, %v381
  %v384 = vunpack.c.l.s4 1966171168
  %v385 = vunpack.c.0.s8 %v384
  %v386 = vlaneseq
  %v387 = vshrl.u32 %v386, 7
  %v388 = vsub.s32 %v385, %v387
  %v389 = vrot.slane %v361, %v388
  %v390 = vcombine.high %v368, %v368
  %v391 = vcombine.high %v375, %v375
  %v392 = vcombine.high %v382, %v382
  %v393 = vcombine.high %v389, %v389
  %v666 = vunpack.c.l.b16 %v31
  %v667 = vunpack.c.l.b16 %v32
  %v668 = vunpack.c.l.b16 %v33
  %v669 = vunpack.c.l.b16 %v34
  %v670 = vunpack.c.l.b16 %v35
  %v671 = vunpack.c.l.b16 %v36
  %v672 = vunpack.c.l.b16 %v37
  %v673 = vunpack.c.l.b16 %v38
  %v674 = vunpack.c.l.b16 %v39
  %v675 = vunpack.c.l.b16 %v40
  %v676 = vunpack.c.l.b16 %v41
  %v677 = vunpack.c.l.b16 %v42
  %v678 = vunpack.c.l.b16 %v43
  %v679 = vunpack.c.l.b16 %v44
  %v680 = vunpack.c.l.b16 %v45
  %v681 = vunpack.c.l.b16 %v46
  %v682 = vunpack.c.l.b16 %v47
  %v683 = vunpack.c.l.b16 %v48
  %v684 = vunpack.c.l.b16 %v49
  %v685 = vunpack.c.l.b16 %v50
  %v686 = vunpack.c.l.b16 %v51
  %v687 = vunpack.c.l.b16 %v52
  %v688 = vunpack.c.l.b16 %v53
  %v689 = vunpack.c.l.b16 %v54
  %v690 = vunpack.c.l.b16 %v55
  %v691 = vunpack.c.l.b16 %v56
  %v692 = vunpack.c.l.b16 %v57
  %v693 = vunpack.c.l.b16 %v58
  %v694 = vunpack.c.l.b16 %v59
  %v695 = vunpack.c.l.b16 %v60
  %v696 = vunpack.c.l.b16 %v61
  %v697 = vunpack.c.l.b16 %v62
  %v698 = vunpack.c.l.b16 %v63
  %v699 = vunpack.c.l.b16 %v64
  %v700 = vunpack.c.l.b16 %v65
  %v701 = vunpack.c.l.b16 %v66
  %v702 = vunpack.c.l.b16 %v67
  %v703 = vunpack.c.l.b16 %v68
  %v704 = vunpack.c.l.b16 %v69
  %v705 = vunpack.c.l.b16 %v70
  %v706 = vunpack.c.l.b16 %v71
  %v707 = vunpack.c.l.b16 %v72
  %v708 = vunpack.c.l.b16 %v73
  %v709 = vunpack.c.l.b16 %v74
  %v710 = vunpack.c.l.b16 %v75
  %v711 = vunpack.c.l.b16 %v76
  %v712 = vunpack.c.l.b16 %v77
  %v713 = vunpack.c.l.b16 %v78
  %v714 = vunpack.c.l.b16 %v79
  %v715 = vunpack.c.l.b16 %v80
  %v716 = vunpack.c.l.b16 %v81
  %v717 = vunpack.c.l.b16 %v82
  %v718 = vunpack.c.l.b16 %v83
  %v719 = vunpack.c.l.b16 %v84
  %v720 = vunpack.c.l.b16 %v85
  %v721 = vunpack.c.l.b16 %v86
  %v722 = vunpack.c.l.b16 %v87
  %v723 = vunpack.c.l.b16 %v88
  %v724 = vunpack.c.l.b16 %v89
  %v725 = vunpack.c.l.b16 %v90
  %v726 = vunpack.c.l.b16 %v91
  %v727 = vunpack.c.l.b16 %v92
  %v728 = vunpack.c.l.b16 %v93
  %v729 = vunpack.c.l.b16 %v94
  %v730 = vunpack.c.l.b16 %v95
  %v731 = vunpack.c.l.b16 %v96
  %v732 = vunpack.c.l.b16 %v97
  %v733 = vunpack.c.l.b16 %v98
  %v734 = vunpack.c.l.b16 %v99
  %v735 = vunpack.c.l.b16 %v100
  %v736 = vunpack.c.l.b16 %v101
  %v737 = vunpack.c.l.b16 %v102
  %v738 = vunpack.c.l.b16 %v103
  %v739 = vunpack.c.l.b16 %v104
  %v740 = vunpack.c.l.b16 %v105
  %v741 = vunpack.c.l.b16 %v106
  %v742 = vunpack.c.l.b16 %v107
  %v743 = vunpack.c.l.b16 %v108
  %v744 = vunpack.c.l.b16 %v109
  %v745 = vunpack.c.l.b16 %v110
  %v746 = vunpack.c.l.b16 %v111
  %v747 = vunpack.c.l.b16 %v112
  %v748 = vunpack.c.l.b16 %v113
  %v749 = vunpack.c.l.b16 %v114
  %v750 = vunpack.c.l.b16 %v115
  %v751 = vunpack.c.l.b16 %v116
  %v752 = vunpack.c.l.b16 %v117
  %v753 = vunpack.c.l.b16 %v118
  %v754 = vunpack.c.l.b16 %v119
  %v755 = vunpack.c.l.b16 %v120
  %v756 = vunpack.c.l.b16 %v121
  %v757 = vunpack.c.l.b16 %v122
  %v758 = vunpack.c.l.b16 %v123
  %v759 = vunpack.c.l.b16 %v124
  %v760 = vunpack.c.l.b16 %v125
  %v761 = vunpack.c.l.b16 %v126
  %v762 = vunpack.c.l.b16 %v127
  %v763 = vunpack.c.l.b16 %v128
  %v764 = vunpack.c.l.b16 %v129
  %v765 = vunpack.c.l.b16 %v130
  %v766 = vunpack.c.l.b16 %v131
  %v767 = vunpack.c.l.b16 %v132
  %v768 = vunpack.c.l.b16 %v133
  %v769 = vunpack.c.l.b16 %v134
  %v770 = vunpack.c.l.b16 %v135
  %v771 = vunpack.c.l.b16 %v136
  %v772 = vunpack.c.l.b16 %v137
  %v773 = vunpack.c.l.b16 %v138
  %v774 = vunpack.c.l.b16 %v139
  %v775 = vunpack.c.l.b16 %v140
  %v776 = vunpack.c.l.b16 %v141
  %v777 = vunpack.c.l.b16 %v142
  %v778 = vunpack.c.l.b16 %v143
  %v779 = vunpack.c.l.b16 %v144
  %v780 = vunpack.c.l.b16 %v145
  %v781 = vunpack.c.l.b16 %v146
  %v782 = vunpack.c.l.b16 %v147
  %v783 = vunpack.c.l.b16 %v148
  %v784 = vunpack.c.l.b16 %v149
  %v785 = vunpack.c.l.b16 %v150
  %v786 = vunpack.c.l.b16 %v151
  %v787 = vunpack.c.l.b16 %v152
  %v788 = vunpack.c.l.b16 %v153
  %v789 = vunpack.c.l.b16 %v154
  %v790 = vunpack.c.l.b16 %v155
  %v791 = vunpack.c.l.b16 %v156
  %v792 = vunpack.c.l.b16 %v157
  %v793 = vunpack.c.l.b16 %v158
  %v794 = vunpack.c.l.b16 %v159
  %v795 = vunpack.c.l.b16 %v160
  %v796 = vunpack.c.l.b16 %v161
  %v797 = vunpack.c.l.b16 %v162
  %v798 = vunpack.c.l.b16 %v163
  %v799 = vunpack.c.l.b16 %v164
  %v800 = vunpack.c.l.b16 %v165
  %v801 = vunpack.c.l.b16 %v166
  %v802 = vunpack.c.l.b16 %v167
  %v803 = vunpack.c.l.b16 %v168
  %v804 = vunpack.c.l.b16 %v169
  %v805 = vunpack.c.l.b16 %v170
  %v806 = vunpack.c.l.b16 %v171
  %v807 = vunpack.c.l.b16 %v172
  %v808 = vunpack.c.l.b16 %v173
  %v809 = vunpack.c.l.b16 %v174
  %v810 = vunpack.c.l.b16 %v175
  %v811 = vunpack.c.l.b16 %v176
  %v812 = vunpack.c.l.b16 %v177
  %v813 = vunpack.c.l.b16 %v178
  %v814 = vunpack.c.l.b16 %v179
  %v815 = vunpack.c.l.b16 %v180
  %v816 = vunpack.c.l.b16 %v181
  %v817 = vunpack.c.l.b16 %v182
  %v818 = vunpack.c.l.b16 %v183
  %v819 = vunpack.c.l.b16 %v184
  %v820 = vunpack.c.l.b16 %v185
  %v821 = vunpack.c.l.b16 %v186
  %v822 = vunpack.c.l.b16 %v187
  %v823 = vunpack.c.l.b16 %v188
  %v824 = vunpack.c.l.b16 %v189
  %v825 = vunpack.c.l.b16 %v190
  %v826 = vunpack.c.l.b16 %v191
  %v827 = vunpack.c.l.b16 %v192
  %v828 = vunpack.c.l.b16 %v193
  %v829 = vunpack.c.l.b16 %v194
  %v830 = vunpack.c.l.b16 %v195
  %v831 = vunpack.c.l.b16 %v196
  %v832 = vunpack.c.l.b16 %v197
  %v833 = vunpack.c.l.b16 %v198
  %v834 = vunpack.c.l.b16 %v199
  %v835 = vunpack.c.l.b16 %v200
  %v836 = vunpack.c.l.b16 %v201
  %v837 = vunpack.c.l.b16 %v202
  %v838 = vunpack.c.l.b16 %v203
  %v839 = vunpack.c.l.b16 %v204
  %v840 = vunpack.c.l.b16 %v205
  %v841 = vunpack.c.l.b16 %v206
  %v842 = vunpack.c.l.b16 %v207
  %v843 = vunpack.c.l.b16 %v208
  %v844 = vunpack.c.l.b16 %v209
  %v845 = vunpack.c.l.b16 %v210
  %v846 = vunpack.c.l.b16 %v211
  %v847 = vunpack.c.l.b16 %v212
  %v848 = vunpack.c.l.b16 %v213
  %v849 = vunpack.c.l.b16 %v214
  %v850 = vunpack.c.l.b16 %v215
  %v851 = vunpack.c.l.b16 %v216
  %v852 = vunpack.c.l.b16 %v217
  %v853 = vunpack.c.l.b16 %v218
  %v854 = vunpack.c.l.b16 %v219
  %v855 = vunpack.c.l.b16 %v220
  %v856 = vunpack.c.l.b16 %v221
  %v857 = vunpack.c.l.b16 %v222
  %v858 = vunpack.c.l.b16 %v223
  %v859 = vunpack.c.l.b16 %v224
  %v860 = vunpack.c.l.b16 %v225
  %v861 = vunpack.c.l.b16 %v226
  %v862 = vunpack.c.l.b16 %v227
  %v863 = vunpack.c.l.b16 %v228
  %v864 = vunpack.c.l.b16 %v229
  %v865 = vunpack.c.l.b16 %v230
  %v866 = vunpack.c.l.b16 %v231
  %v867 = vunpack.c.l.b16 %v232
  %v868 = vunpack.c.l.b16 %v233
  %v869 = vunpack.c.l.b16 %v234
  %v870 = vunpack.c.l.b16 %v235
  %v871 = vunpack.c.l.b16 %v236
  %v872 = vunpack.c.l.b16 %v237
  %v873 = vunpack.c.l.b16 %v238
  %v874 = vunpack.c.l.b16 %v239
  %v875 = vunpack.c.l.b16 %v240
  %v876 = vunpack.c.l.b16 %v241
  %v877 = vunpack.c.l.b16 %v242
  %v878 = vunpack.c.l.b16 %v243
  %v879 = vunpack.c.l.b16 %v244
  %v880 = vunpack.c.l.b16 %v245
  %v881 = vunpack.c.l.b16 %v246
  %v882 = vunpack.c.l.b16 %v247
  %v883 = vunpack.c.l.b16 %v248
  %v884 = vunpack.c.l.b16 %v249
  %v885 = vunpack.c.l.b16 %v250
  %v886 = vunpack.c.l.b16 %v251
  %v887 = vunpack.c.l.b16 %v252
  %v888 = vunpack.c.l.b16 %v253
  %v889 = vunpack.c.l.b16 %v254
  %v890 = vunpack.c.l.b16 %v255
  %v891 = vunpack.c.l.b16 %v256
  %v892 = vunpack.c.l.b16 %v257
  %v893 = vunpack.c.l.b16 %v258
  %v894 = vunpack.c.l.b16 %v259
  %v895 = vunpack.c.l.b16 %v260
  %v896 = vunpack.c.l.b16 %v261
  %v897 = vunpack.c.l.b16 %v262
  %v898 = vunpack.c.l.b16 %v263
  %v899 = vunpack.c.l.b16 %v264
  %v900 = vunpack.c.l.b16 %v265
  %v901 = vunpack.c.l.b16 %v266
  %v902 = vunpack.c.l.b16 %v267
  %v903 = vunpack.c.l.b16 %v268
  %v904 = vunpack.c.l.b16 %v269
  %v905 = vunpack.c.l.b16 %v270
  %v906 = vunpack.c.l.b16 %v271
  %v907 = vunpack.c.l.b16 %v272
  %v908 = vunpack.c.l.b16 %v273
  %v909 = vunpack.c.l.b16 %v274
  %v910 = vunpack.c.l.b16 %v275
  %v911 = vunpack.c.l.b16 %v276
  %v912 = vunpack.c.l.b16 %v277
  %v913 = vunpack.c.l.b16 %v278
  %v914 = vunpack.c.l.b16 %v279
  %v915 = vunpack.c.l.b16 %v280
  %v916 = vunpack.c.l.b16 %v281
  %v917 = vunpack.c.l.b16 %v282
  %v918 = vunpack.c.l.b16 %v283
  %v919 = vunpack.c.l.b16 %v284
  %v920 = vunpack.c.l.b16 %v285
  %v921 = vunpack.c.l.b16 %v286
  %v922 = vpack.c.b16 %v667, %v666
  %v923 = vpack.c.b16 %v669, %v668
  %v924 = vpack.c.b16 %v671, %v670
  %v925 = vpack.c.b16 %v673, %v672
  %v926 = vpack.c.b16 %v675, %v674
  %v927 = vpack.c.b16 %v677, %v676
  %v928 = vpack.c.b16 %v679, %v678
  %v929 = vpack.c.b16 %v681, %v680
  %v930 = vpack.c.b16 %v683, %v682
  %v931 = vpack.c.b16 %v685, %v684
  %v932 = vpack.c.b16 %v687, %v686
  %v933 = vpack.c.b16 %v689, %v688
  %v934 = vpack.c.b16 %v691, %v690
  %v935 = vpack.c.b16 %v693, %v692
  %v936 = vpack.c.b16 %v695, %v694
  %v937 = vpack.c.b16 %v697, %v696
  %v938 = vpack.c.b16 %v699, %v698
  %v939 = vpack.c.b16 %v701, %v700
  %v940 = vpack.c.b16 %v703, %v702
  %v941 = vpack.c.b16 %v705, %v704
  %v942 = vpack.c.b16 %v707, %v706
  %v943 = vpack.c.b16 %v709, %v708
  %v944 = vpack.c.b16 %v711, %v710
  %v945 = vpack.c.b16 %v713, %v712
  %v946 = vpack.c.b16 %v715, %v714
  %v947 = vpack.c.b16 %v717, %v716
  %v948 = vpack.c.b16 %v719, %v718
  %v949 = vpack.c.b16 %v721, %v720
  %v950 = vpack.c.b16 %v723, %v722
  %v951 = vpack.c.b16 %v725, %v724
  %v952 = vpack.c.b16 %v727, %v726
  %v953 = vpack.c.b16 %v729, %v728
  %v954 = vpack.c.b16 %v731, %v730
  %v955 = vpack.c.b16 %v733, %v732
  %v956 = vpack.c.b16 %v735, %v734
  %v957 = vpack.c.b16 %v737, %v736
  %v958 = vpack.c.b16 %v739, %v738
  %v959 = vpack.c.b16 %v741, %v740
  %v960 = vpack.c.b16 %v743, %v742
  %v961 = vpack.c.b16 %v745, %v744
  %v962 = vpack.c.b16 %v747, %v746
  %v963 = vpack.c.b16 %v749, %v748
  %v964 = vpack.c.b16 %v751, %v750
  %v965 = vpack.c.b16 %v753, %v752
  %v966 = vpack.c.b16 %v755, %v754
  %v967 = vpack.c.b16 %v757, %v756
  %v968 = vpack.c.b16 %v759, %v758
  %v969 = vpack.c.b16 %v761, %v760
  %v970 = vpack.c.b16 %v763, %v762
  %v971 = vpack.c.b16 %v765, %v764
  %v972 = vpack.c.b16 %v767, %v766
  %v973 = vpack.c.b16 %v769, %v768
  %v974 = vpack.c.b16 %v771, %v770
  %v975 = vpack.c.b16 %v773, %v772
  %v976 = vpack.c.b16 %v775, %v774
  %v977 = vpack.c.b16 %v777, %v776
  %v978 = vpack.c.b16 %v779, %v778
  %v979 = vpack.c.b16 %v781, %v780
  %v980 = vpack.c.b16 %v783, %v782
  %v981 = vpack.c.b16 %v785, %v784
  %v982 = vpack.c.b16 %v787, %v786
  %v983 = vpack.c.b16 %v789, %v788
  %v984 = vpack.c.b16 %v791, %v790
  %v985 = vpack.c.b16 %v793, %v792
  %v986 = vpack.c.b16 %v795, %v794
  %v987 = vpack.c.b16 %v797, %v796
  %v988 = vpack.c.b16 %v799, %v798
  %v989 = vpack.c.b16 %v801, %v800
  %v990 = vpack.c.b16 %v803, %v802
  %v991 = vpack.c.b16 %v805, %v804
  %v992 = vpack.c.b16 %v807, %v806
  %v993 = vpack.c.b16 %v809, %v808
  %v994 = vpack.c.b16 %v811, %v810
  %v995 = vpack.c.b16 %v813, %v812
  %v996 = vpack.c.b16 %v815, %v814
  %v997 = vpack.c.b16 %v817, %v816
  %v998 = vpack.c.b16 %v819, %v818
  %v999 = vpack.c.b16 %v821, %v820
  %v1000 = vpack.c.b16 %v823, %v822
  %v1001 = vpack.c.b16 %v825, %v824
  %v1002 = vpack.c.b16 %v827, %v826
  %v1003 = vpack.c.b16 %v829, %v828
  %v1004 = vpack.c.b16 %v831, %v830
  %v1005 = vpack.c.b16 %v833, %v832
  %v1006 = vpack.c.b16 %v835, %v834
  %v1007 = vpack.c.b16 %v837, %v836
  %v1008 = vpack.c.b16 %v839, %v838
  %v1009 = vpack.c.b16 %v841, %v840
  %v1010 = vpack.c.b16 %v843, %v842
  %v1011 = vpack.c.b16 %v845, %v844
  %v1012 = vpack.c.b16 %v847, %v846
  %v1013 = vpack.c.b16 %v849, %v848
  %v1014 = vpack.c.b16 %v851, %v850
  %v1015 = vpack.c.b16 %v853, %v852
  %v1016 = vpack.c.b16 %v855, %v854
  %v1017 = vpack.c.b16 %v857, %v856
  %v1018 = vpack.c.b16 %v859, %v858
  %v1019 = vpack.c.b16 %v861, %v860
  %v1020 = vpack.c.b16 %v863, %v862
  %v1021 = vpack.c.b16 %v865, %v864
  %v1022 = vpack.c.b16 %v867, %v866
  %v1023 = vpack.c.b16 %v869, %v868
  %v1024 = vpack.c.b16 %v871, %v870
  %v1025 = vpack.c.b16 %v873, %v872
  %v1026 = vpack.c.b16 %v875, %v874
  %v1027 = vpack.c.b16 %v877, %v876
  %v1028 = vpack.c.b16 %v879, %v878
  %v1029 = vpack.c.b16 %v881, %v880
  %v1030 = vpack.c.b16 %v883, %v882
  %v1031 = vpack.c.b16 %v885, %v884
  %v1032 = vpack.c.b16 %v887, %v886
  %v1033 = vpack.c.b16 %v889, %v888
  %v1034 = vpack.c.b16 %v891, %v890
  %v1035 = vpack.c.b16 %v893, %v892
  %v1036 = vpack.c.b16 %v895, %v894
  %v1037 = vpack.c.b16 %v897, %v896
  %v1038 = vpack.c.b16 %v899, %v898
  %v1039 = vpack.c.b16 %v901, %v900
  %v1040 = vpack.c.b16 %v903, %v902
  %v1041 = vpack.c.b16 %v905, %v904
  %v1042 = vpack.c.b16 %v907, %v906
  %v1043 = vpack.c.b16 %v909, %v908
  %v1044 = vpack.c.b16 %v911, %v910
  %v1045 = vpack.c.b16 %v913, %v912
  %v1046 = vpack.c.b16 %v915, %v914
  %v1047 = vpack.c.b16 %v917, %v916
  %v1048 = vpack.c.b16 %v919, %v918
  %v1049 = vpack.c.b16 %v921, %v920
  %1178 = vmatprep.subr.bf16.mxu0 0
  %1179 = vmatpush1.bf16.msra.mxu0 %v929
  %1180 = vmatprep.subr.bf16.mxu0 0
  %1181 = vmatpush1.bf16.msra.mxu0 %v928
  %1182 = vmatprep.subr.bf16.mxu0 0
  %1183 = vmatpush1.bf16.msra.mxu0 %v927
  %1184 = vmatprep.subr.bf16.mxu0 0
  %1185 = vmatpush1.bf16.msra.mxu0 %v926
  %1186 = vmatprep.subr.bf16.mxu0 0
  %1187 = vmatpush1.bf16.msra.mxu0 %v925
  %1188 = vmatprep.subr.bf16.mxu0 0
  %1189 = vmatpush1.bf16.msra.mxu0 %v924
  %1190 = vmatprep.subr.bf16.mxu0 0
  %1191 = vmatpush1.bf16.msra.mxu0 %v923
  %1192 = vmatprep.subr.bf16.mxu0 0
  %1193 = vmatpush1.bf16.msra.mxu0 %v922
  %1194 = vmatprep.subr.bf16.mxu0 0
  %1195 = vmatpush2.bf16.msra.mxu0 %v937
  %1196 = vmatprep.subr.bf16.mxu0 0
  %1197 = vmatpush2.bf16.msra.mxu0 %v936
  %1198 = vmatprep.subr.bf16.mxu0 0
  %1199 = vmatpush2.bf16.msra.mxu0 %v935
  %1200 = vmatprep.subr.bf16.mxu0 0
  %1201 = vmatpush2.bf16.msra.mxu0 %v934
  %1202 = vmatprep.subr.bf16.mxu0 0
  %1203 = vmatpush2.bf16.msra.mxu0 %v933
  %1204 = vmatprep.subr.bf16.mxu0 0
  %1205 = vmatpush2.bf16.msra.mxu0 %v932
  %1206 = vmatprep.subr.bf16.mxu0 0
  %1207 = vmatpush2.bf16.msra.mxu0 %v931
  %1208 = vmatprep.subr.bf16.mxu0 0
  %1209 = vmatpush2.bf16.msra.mxu0 %v930
  %1210 = vmatprep.mubr.bf16.mxu0 %v333
  %1211 = vmatmul.mubr.bf16.gmra.mxu0 %v319
  %v1212 = vpop.f32.mrf.mxu0
  %v1213 = vadd.f32 %v292, %v1212
  %v1214 = vpop.f32.mrf.mxu0
  %v1215 = vpop.f32.mrf.mxu0
  %v1216 = vpop.f32.mrf.mxu0
  %1217 = vdwg.mxu0
  %1218 = vmatprep.subr.bf16.mxu0 0
  %1219 = vmatpush1.bf16.msra.mxu0 %v945
  %1220 = vmatprep.subr.bf16.mxu0 0
  %1221 = vmatpush1.bf16.msra.mxu0 %v944
  %1222 = vmatprep.subr.bf16.mxu0 0
  %1223 = vmatpush1.bf16.msra.mxu0 %v943
  %1224 = vmatprep.subr.bf16.mxu0 0
  %1225 = vmatpush1.bf16.msra.mxu0 %v942
  %1226 = vmatprep.subr.bf16.mxu0 0
  %1227 = vmatpush1.bf16.msra.mxu0 %v941
  %1228 = vmatprep.subr.bf16.mxu0 0
  %1229 = vmatpush1.bf16.msra.mxu0 %v940
  %1230 = vmatprep.subr.bf16.mxu0 0
  %1231 = vmatpush1.bf16.msra.mxu0 %v939
  %1232 = vmatprep.subr.bf16.mxu0 0
  %1233 = vmatpush1.bf16.msra.mxu0 %v938
  %1234 = vmatprep.subr.bf16.mxu0 0
  %1235 = vmatpush2.bf16.msra.mxu0 %v953
  %1236 = vmatprep.subr.bf16.mxu0 0
  %1237 = vmatpush2.bf16.msra.mxu0 %v952
  %1238 = vmatprep.subr.bf16.mxu0 0
  %1239 = vmatpush2.bf16.msra.mxu0 %v951
  %1240 = vmatprep.subr.bf16.mxu0 0
  %1241 = vmatpush2.bf16.msra.mxu0 %v950
  %1242 = vmatprep.subr.bf16.mxu0 0
  %1243 = vmatpush2.bf16.msra.mxu0 %v949
  %1244 = vmatprep.subr.bf16.mxu0 0
  %1245 = vmatpush2.bf16.msra.mxu0 %v948
  %1246 = vmatprep.subr.bf16.mxu0 0
  %1247 = vmatpush2.bf16.msra.mxu0 %v947
  %1248 = vmatprep.subr.bf16.mxu0 0
  %1249 = vmatpush2.bf16.msra.mxu0 %v946
  %1250 = vmatprep.mubr.bf16.mxu0 %v343
  %1251 = vmatmul.mubr.bf16.gmra.mxu0 %v341
  %v1252 = vpop.f32.mrf.mxu0
  %v1253 = vadd.f32 %v1213, %v1252
  %v1254 = vpop.f32.mrf.mxu0
  %v1255 = vpop.f32.mrf.mxu0
  %v1256 = vpop.f32.mrf.mxu0
  %1257 = vdwg.mxu0
  %1258 = vmatprep.subr.bf16.mxu0 0
  %1259 = vmatpush1.bf16.msra.mxu0 %v961
  %1260 = vmatprep.subr.bf16.mxu0 0
  %1261 = vmatpush1.bf16.msra.mxu0 %v960
  %1262 = vmatprep.subr.bf16.mxu0 0
  %1263 = vmatpush1.bf16.msra.mxu0 %v959
  %1264 = vmatprep.subr.bf16.mxu0 0
  %1265 = vmatpush1.bf16.msra.mxu0 %v958
  %1266 = vmatprep.subr.bf16.mxu0 0
  %1267 = vmatpush1.bf16.msra.mxu0 %v957
  %1268 = vmatprep.subr.bf16.mxu0 0
  %1269 = vmatpush1.bf16.msra.mxu0 %v956
  %1270 = vmatprep.subr.bf16.mxu0 0
  %1271 = vmatpush1.bf16.msra.mxu0 %v955
  %1272 = vmatprep.subr.bf16.mxu0 0
  %1273 = vmatpush1.bf16.msra.mxu0 %v954
  %1274 = vmatprep.subr.bf16.mxu0 0
  %1275 = vmatpush2.bf16.msra.mxu0 %v969
  %1276 = vmatprep.subr.bf16.mxu0 0
  %1277 = vmatpush2.bf16.msra.mxu0 %v968
  %1278 = vmatprep.subr.bf16.mxu0 0
  %1279 = vmatpush2.bf16.msra.mxu0 %v967
  %1280 = vmatprep.subr.bf16.mxu0 0
  %1281 = vmatpush2.bf16.msra.mxu0 %v966
  %1282 = vmatprep.subr.bf16.mxu0 0
  %1283 = vmatpush2.bf16.msra.mxu0 %v965
  %1284 = vmatprep.subr.bf16.mxu0 0
  %1285 = vmatpush2.bf16.msra.mxu0 %v964
  %1286 = vmatprep.subr.bf16.mxu0 0
  %1287 = vmatpush2.bf16.msra.mxu0 %v963
  %1288 = vmatprep.subr.bf16.mxu0 0
  %1289 = vmatpush2.bf16.msra.mxu0 %v962
  %1290 = vmatprep.mubr.bf16.mxu0 %v340
  %1291 = vmatmul.mubr.bf16.gmra.mxu0 %v326
  %v1292 = vpop.f32.mrf.mxu0
  %v1293 = vadd.f32 %v1253, %v1292
  %v1294 = vpop.f32.mrf.mxu0
  %v1295 = vpop.f32.mrf.mxu0
  %v1296 = vpop.f32.mrf.mxu0
  %1297 = vdwg.mxu0
  %1298 = vmatprep.subr.bf16.mxu0 0
  %1299 = vmatpush1.bf16.msra.mxu0 %v977
  %1300 = vmatprep.subr.bf16.mxu0 0
  %1301 = vmatpush1.bf16.msra.mxu0 %v976
  %1302 = vmatprep.subr.bf16.mxu0 0
  %1303 = vmatpush1.bf16.msra.mxu0 %v975
  %1304 = vmatprep.subr.bf16.mxu0 0
  %1305 = vmatpush1.bf16.msra.mxu0 %v974
  %1306 = vmatprep.subr.bf16.mxu0 0
  %1307 = vmatpush1.bf16.msra.mxu0 %v973
  %1308 = vmatprep.subr.bf16.mxu0 0
  %1309 = vmatpush1.bf16.msra.mxu0 %v972
  %1310 = vmatprep.subr.bf16.mxu0 0
  %1311 = vmatpush1.bf16.msra.mxu0 %v971
  %1312 = vmatprep.subr.bf16.mxu0 0
  %1313 = vmatpush1.bf16.msra.mxu0 %v970
  %1314 = vmatprep.subr.bf16.mxu0 0
  %1315 = vmatpush2.bf16.msra.mxu0 %v985
  %1316 = vmatprep.subr.bf16.mxu0 0
  %1317 = vmatpush2.bf16.msra.mxu0 %v984
  %1318 = vmatprep.subr.bf16.mxu0 0
  %1319 = vmatpush2.bf16.msra.mxu0 %v983
  %1320 = vmatprep.subr.bf16.mxu0 0
  %1321 = vmatpush2.bf16.msra.mxu0 %v982
  %1322 = vmatprep.subr.bf16.mxu0 0
  %1323 = vmatpush2.bf16.msra.mxu0 %v981
  %1324 = vmatprep.subr.bf16.mxu0 0
  %1325 = vmatpush2.bf16.msra.mxu0 %v980
  %1326 = vmatprep.subr.bf16.mxu0 0
  %1327 = vmatpush2.bf16.msra.mxu0 %v979
  %1328 = vmatprep.subr.bf16.mxu0 0
  %1329 = vmatpush2.bf16.msra.mxu0 %v978
  %1330 = vmatprep.mubr.bf16.mxu0 %v344
  %1331 = vmatmul.mubr.bf16.gmra.mxu0 %v342
  %v1332 = vpop.f32.mrf.mxu0
  %v1333 = vadd.f32 %v1293, %v1332
  %v1334 = vpop.f32.mrf.mxu0
  %v1335 = vpop.f32.mrf.mxu0
  %v1336 = vpop.f32.mrf.mxu0
  %1337 = vdwg.mxu0
  %1338 = vmatprep.subr.bf16.mxu0 0
  %1339 = vmatpush1.bf16.msra.mxu0 %v993
  %1340 = vmatprep.subr.bf16.mxu0 0
  %1341 = vmatpush1.bf16.msra.mxu0 %v992
  %1342 = vmatprep.subr.bf16.mxu0 0
  %1343 = vmatpush1.bf16.msra.mxu0 %v991
  %1344 = vmatprep.subr.bf16.mxu0 0
  %1345 = vmatpush1.bf16.msra.mxu0 %v990
  %1346 = vmatprep.subr.bf16.mxu0 0
  %1347 = vmatpush1.bf16.msra.mxu0 %v989
  %1348 = vmatprep.subr.bf16.mxu0 0
  %1349 = vmatpush1.bf16.msra.mxu0 %v988
  %1350 = vmatprep.subr.bf16.mxu0 0
  %1351 = vmatpush1.bf16.msra.mxu0 %v987
  %1352 = vmatprep.subr.bf16.mxu0 0
  %1353 = vmatpush1.bf16.msra.mxu0 %v986
  %1354 = vmatprep.subr.bf16.mxu0 0
  %1355 = vmatpush2.bf16.msra.mxu0 %v1001
  %1356 = vmatprep.subr.bf16.mxu0 0
  %1357 = vmatpush2.bf16.msra.mxu0 %v1000
  %1358 = vmatprep.subr.bf16.mxu0 0
  %1359 = vmatpush2.bf16.msra.mxu0 %v999
  %1360 = vmatprep.subr.bf16.mxu0 0
  %1361 = vmatpush2.bf16.msra.mxu0 %v998
  %1362 = vmatprep.subr.bf16.mxu0 0
  %1363 = vmatpush2.bf16.msra.mxu0 %v997
  %1364 = vmatprep.subr.bf16.mxu0 0
  %1365 = vmatpush2.bf16.msra.mxu0 %v996
  %1366 = vmatprep.subr.bf16.mxu0 0
  %1367 = vmatpush2.bf16.msra.mxu0 %v995
  %1368 = vmatprep.subr.bf16.mxu0 0
  %1369 = vmatpush2.bf16.msra.mxu0 %v994
  %1370 = vmatprep.mubr.bf16.mxu0 %v382
  %1371 = vmatmul.mubr.bf16.gmra.mxu0 %v368
  %v1372 = vpop.f32.mrf.mxu0
  %v1373 = vadd.f32 %v1333, %v1372
  %v1374 = vpop.f32.mrf.mxu0
  %v1375 = vpop.f32.mrf.mxu0
  %v1376 = vpop.f32.mrf.mxu0
  %1377 = vdwg.mxu0
  %1378 = vmatprep.subr.bf16.mxu0 0
  %1379 = vmatpush1.bf16.msra.mxu0 %v1009
  %1380 = vmatprep.subr.bf16.mxu0 0
  %1381 = vmatpush1.bf16.msra.mxu0 %v1008
  %1382 = vmatprep.subr.bf16.mxu0 0
  %1383 = vmatpush1.bf16.msra.mxu0 %v1007
  %1384 = vmatprep.subr.bf16.mxu0 0
  %1385 = vmatpush1.bf16.msra.mxu0 %v1006
  %1386 = vmatprep.subr.bf16.mxu0 0
  %1387 = vmatpush1.bf16.msra.mxu0 %v1005
  %1388 = vmatprep.subr.bf16.mxu0 0
  %1389 = vmatpush1.bf16.msra.mxu0 %v1004
  %1390 = vmatprep.subr.bf16.mxu0 0
  %1391 = vmatpush1.bf16.msra.mxu0 %v1003
  %1392 = vmatprep.subr.bf16.mxu0 0
  %1393 = vmatpush1.bf16.msra.mxu0 %v1002
  %1394 = vmatprep.subr.bf16.mxu0 0
  %1395 = vmatpush2.bf16.msra.mxu0 %v1017
  %1396 = vmatprep.subr.bf16.mxu0 0
  %1397 = vmatpush2.bf16.msra.mxu0 %v1016
  %1398 = vmatprep.subr.bf16.mxu0 0
  %1399 = vmatpush2.bf16.msra.mxu0 %v1015
  %1400 = vmatprep.subr.bf16.mxu0 0
  %1401 = vmatpush2.bf16.msra.mxu0 %v1014
  %1402 = vmatprep.subr.bf16.mxu0 0
  %1403 = vmatpush2.bf16.msra.mxu0 %v1013
  %1404 = vmatprep.subr.bf16.mxu0 0
  %1405 = vmatpush2.bf16.msra.mxu0 %v1012
  %1406 = vmatprep.subr.bf16.mxu0 0
  %1407 = vmatpush2.bf16.msra.mxu0 %v1011
  %1408 = vmatprep.subr.bf16.mxu0 0
  %1409 = vmatpush2.bf16.msra.mxu0 %v1010
  %1410 = vmatprep.mubr.bf16.mxu0 %v392
  %1411 = vmatmul.mubr.bf16.gmra.mxu0 %v390
  %v1412 = vpop.f32.mrf.mxu0
  %v1413 = vadd.f32 %v1373, %v1412
  %v1414 = vpop.f32.mrf.mxu0
  %v1415 = vpop.f32.mrf.mxu0
  %v1416 = vpop.f32.mrf.mxu0
  %1417 = vdwg.mxu0
  %1418 = vmatprep.subr.bf16.mxu0 0
  %1419 = vmatpush1.bf16.msra.mxu0 %v1025
  %1420 = vmatprep.subr.bf16.mxu0 0
  %1421 = vmatpush1.bf16.msra.mxu0 %v1024
  %1422 = vmatprep.subr.bf16.mxu0 0
  %1423 = vmatpush1.bf16.msra.mxu0 %v1023
  %1424 = vmatprep.subr.bf16.mxu0 0
  %1425 = vmatpush1.bf16.msra.mxu0 %v1022
  %1426 = vmatprep.subr.bf16.mxu0 0
  %1427 = vmatpush1.bf16.msra.mxu0 %v1021
  %1428 = vmatprep.subr.bf16.mxu0 0
  %1429 = vmatpush1.bf16.msra.mxu0 %v1020
  %1430 = vmatprep.subr.bf16.mxu0 0
  %1431 = vmatpush1.bf16.msra.mxu0 %v1019
  %1432 = vmatprep.subr.bf16.mxu0 0
  %1433 = vmatpush1.bf16.msra.mxu0 %v1018
  %1434 = vmatprep.subr.bf16.mxu0 0
  %1435 = vmatpush2.bf16.msra.mxu0 %v1033
  %1436 = vmatprep.subr.bf16.mxu0 0
  %1437 = vmatpush2.bf16.msra.mxu0 %v1032
  %1438 = vmatprep.subr.bf16.mxu0 0
  %1439 = vmatpush2.bf16.msra.mxu0 %v1031
  %1440 = vmatprep.subr.bf16.mxu0 0
  %1441 = vmatpush2.bf16.msra.mxu0 %v1030
  %1442 = vmatprep.subr.bf16.mxu0 0
  %1443 = vmatpush2.bf16.msra.mxu0 %v1029
  %1444 = vmatprep.subr.bf16.mxu0 0
  %1445 = vmatpush2.bf16.msra.mxu0 %v1028
  %1446 = vmatprep.subr.bf16.mxu0 0
  %1447 = vmatpush2.bf16.msra.mxu0 %v1027
  %1448 = vmatprep.subr.bf16.mxu0 0
  %1449 = vmatpush2.bf16.msra.mxu0 %v1026
  %1450 = vmatprep.mubr.bf16.mxu0 %v389
  %1451 = vmatmul.mubr.bf16.gmra.mxu0 %v375
  %v1452 = vpop.f32.mrf.mxu0
  %v1453 = vadd.f32 %v1413, %v1452
  %v1454 = vpop.f32.mrf.mxu0
  %v1455 = vpop.f32.mrf.mxu0
  %v1456 = vpop.f32.mrf.mxu0
  %1457 = vdwg.mxu0
  %1458 = vmatprep.subr.bf16.mxu0 0
  %1459 = vmatpush1.bf16.msra.mxu0 %v1041
  %1460 = vmatprep.subr.bf16.mxu0 0
  %1461 = vmatpush1.bf16.msra.mxu0 %v1040
  %1462 = vmatprep.subr.bf16.mxu0 0
  %1463 = vmatpush1.bf16.msra.mxu0 %v1039
  %1464 = vmatprep.subr.bf16.mxu0 0
  %1465 = vmatpush1.bf16.msra.mxu0 %v1038
  %1466 = vmatprep.subr.bf16.mxu0 0
  %1467 = vmatpush1.bf16.msra.mxu0 %v1037
  %1468 = vmatprep.subr.bf16.mxu0 0
  %1469 = vmatpush1.bf16.msra.mxu0 %v1036
  %1470 = vmatprep.subr.bf16.mxu0 0
  %1471 = vmatpush1.bf16.msra.mxu0 %v1035
  %1472 = vmatprep.subr.bf16.mxu0 0
  %1473 = vmatpush1.bf16.msra.mxu0 %v1034
  %1474 = vmatprep.subr.bf16.mxu0 0
  %1475 = vmatpush2.bf16.msra.mxu0 %v1049
  %1476 = vmatprep.subr.bf16.mxu0 0
  %1477 = vmatpush2.bf16.msra.mxu0 %v1048
  %1478 = vmatprep.subr.bf16.mxu0 0
  %1479 = vmatpush2.bf16.msra.mxu0 %v1047
  %1480 = vmatprep.subr.bf16.mxu0 0
  %1481 = vmatpush2.bf16.msra.mxu0 %v1046
  %1482 = vmatprep.subr.bf16.mxu0 0
  %1483 = vmatpush2.bf16.msra.mxu0 %v1045
  %1484 = vmatprep.subr.bf16.mxu0 0
  %1485 = vmatpush2.bf16.msra.mxu0 %v1044
  %1486 = vmatprep.subr.bf16.mxu0 0
  %1487 = vmatpush2.bf16.msra.mxu0 %v1043
  %1488 = vmatprep.subr.bf16.mxu0 0
  %1489 = vmatpush2.bf16.msra.mxu0 %v1042
  %1490 = vmatprep.mubr.bf16.mxu0 %v393
  %1491 = vmatmul.mubr.bf16.gmra.mxu0 %v391
  %v1492 = vpop.f32.mrf.mxu0
  %v1493 = vadd.f32 %v1453, %v1492
  %v1494 = vpop.f32.mrf.mxu0
  %v1495 = vpop.f32.mrf.mxu0
  %v1496 = vpop.f32.mrf.mxu0
  %1497 = vdwg.mxu0
  %vm1498 = vcmask 517120
  %v1499 = vsel %vm1498, %v1493, 0.0
  %v1500 = vrot.slane %v1499, 4
  %v1501 = vadd.f32 %v1499, %v1500
  %v1502 = vrot.slane %v1501, 2
  %v1503 = vadd.f32 %v1501, %v1502
  %v1504 = vrot.slane %v1503, 1
  %v1505 = vadd.f32 %v1503, %v1504
  %v1506 = vrcp.pop 2.0
  %v1507 = vmul.f32 %v1505, %v1506
  %v1508 = vsub.f32 %v1493, %v1507
  %v1509 = vmul.f32 %v1508, %v1508
  %v1510 = vsel %vm1498, %v1509, 0.0
  %v1511 = vrot.slane %v1510, 4
  %v1512 = vadd.f32 %v1510, %v1511
  %v1513 = vrot.slane %v1512, 2
  %v1514 = vadd.f32 %v1512, %v1513
  %v1515 = vrot.slane %v1514, 1
  %v1516 = vadd.f32 %v1514, %v1515
  %v1517 = vmul.f32 %v1516, %v1506
  %v1518 = vadd.f32 %v1517, 1e-05
  %v1519 = vrsqrt.pop %v1518
  %v1520 = vmul.f32 %v1508, %v1519
  %v1521 = vld [vmem:[%s3] sm:$0x1]
  %v1523 = vlaneseq
  %v1524 = vshrl.u32 %v1523, 7
  %v1525 = vsub.s32 0, %v1524
  %v1526 = vrot.slane %v1521, %v1525
  %v1528 = vmul.f32 %v1520, %v1526
  %v1529 = vld [vmem:[%s4] sm:$0x1]
  %v1531 = vlaneseq
  %v1532 = vshrl.u32 %v1531, 7
  %v1533 = vsub.s32 0, %v1532
  %v1534 = vrot.slane %v1529, %v1533
  %v1536 = vadd.f32 %v1528, %v1534
  %vm1537 = vcmp.gt.f32.partialorder %v1536, 0.0
  %v1538 = vmul.f32 %v1536, 0.2
  %v1539 = vsel %vm1537, %v1536, %v1538
  %v1540 = vld [vmem:[%s5] sm:$0xff]
  %v1541 = vld [vmem:[%s5 + $0x8] sm:$0xff]
  %v1542 = vld [vmem:[%s5 + $0x10] sm:$0xff]
  %v1543 = vld [vmem:[%s5 + $0x18] sm:$0xff]
  %v1544 = vld [vmem:[%s5 + $0x20] sm:$0xff]
  %v1545 = vld [vmem:[%s5 + $0x28] sm:$0xff]
  %v1546 = vld [vmem:[%s5 + $0x30] sm:$0xff]
  %v1547 = vld [vmem:[%s5 + $0x38] sm:$0xff]
  %v1548 = vld [vmem:[#allocation2] sm:$0x1]
  %v1550 = vlaneseq
  %v1551 = vshrl.u32 %v1550, 7
  %v1552 = vsub.s32 0, %v1551
  %v1553 = vrot.slane %v1548, %v1552
  %vm1555 = vcmask 523264
  %v1557 = vsel %vm1555, %v1539, 0
  %1559 = vmatprep.subr.mxu0 0.0
  %1560 = vmatpush1.msra.mxu0 0.0
  %1561 = vmatprep.subr.mxu0 0.0
  %1562 = vmatpush1.msra.mxu0 0.0
  %1563 = vmatprep.subr.mxu0 0.0
  %1564 = vmatpush1.msra.mxu0 0.0
  %1565 = vmatprep.subr.mxu0 0.0
  %1566 = vmatpush1.msra.mxu0 0.0
  %1567 = vmatprep.subr.mxu0 0.0
  %1568 = vmatpush1.msra.mxu0 0.0
  %1569 = vmatprep.subr.mxu0 0.0
  %1570 = vmatpush1.msra.mxu0 0.0
  %1571 = vmatprep.subr.mxu0 0.0
  %1572 = vmatpush1.msra.mxu0 0.0
  %1573 = vmatprep.subr.mxu0 0.0
  %1574 = vmatpush1.msra.mxu0 0.0
  %1575 = vmatprep.subr.mxu0 0.0
  %1576 = vmatpush1.msra.mxu0 %v1547
  %1577 = vmatprep.subr.mxu0 0.0
  %1578 = vmatpush1.msra.mxu0 %v1546
  %1579 = vmatprep.subr.mxu0 0.0
  %1580 = vmatpush1.msra.mxu0 %v1545
  %1581 = vmatprep.subr.mxu0 0.0
  %1582 = vmatpush1.msra.mxu0 %v1544
  %1583 = vmatprep.subr.mxu0 0.0
  %1584 = vmatpush1.msra.mxu0 %v1543
  %1585 = vmatprep.subr.mxu0 0.0
  %1586 = vmatpush1.msra.mxu0 %v1542
  %1587 = vmatprep.subr.mxu0 0.0
  %1588 = vmatpush1.msra.mxu0 %v1541
  %1589 = vmatprep.subr.mxu0 0.0
  %1590 = vmatpush1.msra.mxu0 %v1540
  %1591 = vmatprep.subr.mxu0 0.0
  %1592 = vmatpush2.msra.mxu0 0.0
  %1593 = vmatprep.subr.mxu0 0.0
  %1594 = vmatpush2.msra.mxu0 0.0
  %1595 = vmatprep.subr.mxu0 0.0
  %1596 = vmatpush2.msra.mxu0 0.0
  %1597 = vmatprep.subr.mxu0 0.0
  %1598 = vmatpush2.msra.mxu0 0.0
  %1599 = vmatprep.subr.mxu0 0.0
  %1600 = vmatpush2.msra.mxu0 0.0
  %1601 = vmatprep.subr.mxu0 0.0
  %1602 = vmatpush2.msra.mxu0 0.0
  %1603 = vmatprep.subr.mxu0 0.0
  %1604 = vmatpush2.msra.mxu0 0.0
  %1605 = vmatprep.subr.mxu0 0.0
  %1606 = vmatpush2.msra.mxu0 0.0
  %1607 = vmatprep.subr.mxu0 0.0
  %1608 = vmatpush2.msra.mxu0 0.0
  %1609 = vmatprep.subr.mxu0 0.0
  %1610 = vmatpush2.msra.mxu0 0.0
  %1611 = vmatprep.subr.mxu0 0.0
  %1612 = vmatpush2.msra.mxu0 0.0
  %1613 = vmatprep.subr.mxu0 0.0
  %1614 = vmatpush2.msra.mxu0 0.0
  %1615 = vmatprep.subr.mxu0 0.0
  %1616 = vmatpush2.msra.mxu0 0.0
  %1617 = vmatprep.subr.mxu0 0.0
  %1618 = vmatpush2.msra.mxu0 0.0
  %1619 = vmatprep.subr.mxu0 0.0
  %1620 = vmatpush2.msra.mxu0 0.0
  %1621 = vmatprep.subr.mxu0 0.0
  %1622 = vmatpush2.msra.mxu0 0.0
  %1623 = vmatprep.mubr.f32.mxu0 0.0
  %1624 = vmatmul.mubr.f32.gmra.mxu0 %v1557
  %v1625 = vpop.f32.mrf.mxu0
  %v1626 = vadd.f32 %v1553, %v1625
  %v1627 = vpop.f32.mrf.mxu0
  %1628 = vdwg.mxu0
  %v1629 = vsub.f32 0.0, %v1626
  %v1630 = vmul.f32 %v1629, 1.442695
  %v1631 = vpow.pop %v1630
  %v1632 = vadd.f32 %v1631, 1.0
  %v1633 = vrcp.pop %v1632
  %vm1634 = vcmask 1024
  %1635 = vst.msk [vmem:[%s7] sm:$0x3] %vm1634, %v1633
  // Predicated region
  $region30: #{_lambda_.5} parent=0 // pred_check
    _
  $region31: #{_lambda_.5} parent=0 // pred_check_branch
    %1637 = sbr.rel (0) target = $region33
  $region32: #{_lambda_.5} parent=0 // pred_region
    _
  $region33: #{_lambda_.5} parent=0 // pred_fallthru
    _
  // Predicated region
  $region34: #{_lambda_.5} parent=0 // pred_check
    _
  $region35: #{_lambda_.5} parent=0 // pred_check_branch
    %1639 = sbr.rel (0) target = $region37
  $region36: #{_lambda_.5} parent=0 // pred_region
    _
  $region37: #{_lambda_.5} parent=0 // pred_fallthru
    _

</llo_original>
